<compile_context>
chip_gen: v7x
topology: tpu7x:2x2x1
jax: 0.10.0
libtpu: 0.0.40
codegen_flags: <defaults>
</compile_context>

<pallas_src>
import jax
import jax.numpy as jnp
from jax import lax
from jax.experimental import pallas as pl
from jax.experimental.pallas import tpu as pltpu


# ------------------------------ fused Pallas kernel -------------------------------

def _make_fused_kernel(has_shortcut, use_im2col, lane_dense_out, compute_dtype):
    def kernel(x2_ref, s1_ref, b1_ref, w1_ref, s2_ref, b2_ref, w2_ref,
               s3_ref, b3_ref, w3_ref, *rest):
        rest = list(rest)
        ws_ref = rest.pop(0) if has_shortcut else None
        o_ref = rest.pop(0)
        pad_ref = rest.pop(0)
        col_ref = rest.pop(0) if use_im2col else None

        bt, hp, wp, cx = x2_ref.shape          # cx = cin * s * s   (space-to-depth input)
        c2 = w1_ref.shape[1]                   # c2 = cb  * s * s   (space-to-depth of h1)
        cb = w3_ref.shape[0]
        cout = w3_ref.shape[1]
        rows = bt * hp * wp                    # batch folded into the matmul M dimension

        # ---- stage 1: bn_1 -> relu -> conv_1 (1x1), on the space-to-depth view ----
        x2 = x2_ref[...].reshape(rows, cx)                                   # f32 (rows, cx)
        a1 = jnp.maximum(x2 * s1_ref[...] + b1_ref[...], 0.0)
        z = jnp.dot(a1.astype(compute_dtype), w1_ref[...],
                    preferred_element_type=jnp.float32)                      # (rows, c2)

        # ---- stage 2: bn_2 -> relu -> 3x3 conv ----
        a2 = jnp.maximum(z * s2_ref[...] + b2_ref[...], 0.0)

        # Zero only the 1-pixel halo of the padded scratch (interior is fully overwritten
        # below).  Re-done every grid step so the "parallel" batch axis can be sharded
        # across TensorCores without caring which core ran step 0.
        zrow = jnp.zeros((bt, 1, wp + 2, c2), compute_dtype)
        zcol = jnp.zeros((bt, hp, 1, c2), compute_dtype)
        pad_ref[:, pl.ds(0, 1), :, :] = zrow
        pad_ref[:, pl.ds(hp + 1, 1), :, :] = zrow
        pad_ref[:, pl.ds(1, hp), pl.ds(0, 1), :] = zcol
        pad_ref[:, pl.ds(1, hp), pl.ds(wp + 1, 1), :] = zcol
        pad_ref[:, pl.ds(1, hp), pl.ds(1, wp), :] = (
            a2.reshape(bt, hp, wp, c2).astype(compute_dtype))

        if use_im2col:
            # Tiny c2: build the (rows, 9*c2) slab so one MXU matmul sees K = 9*c2 >= 128.
            for k in range(9):
                dy, dx = k // 3, k % 3
                win = pad_ref[:, pl.ds(dy, hp), pl.ds(dx, wp), :].reshape(rows, c2)
                col_ref[:, pl.ds(k * c2, c2)] = win
            h2 = jnp.dot(col_ref[...], w2_ref[...],
                         preferred_element_type=jnp.float32)                 # (rows, cb)
        else:
            # Production c2 (>=128): no copy phase / no slab — 9 accumulating matmuls that
            # read the shifted windows directly (K = c2 per tap still feeds the MXU).
            h2 = jnp.zeros((rows, cb), jnp.float32)
            for k in range(9):
                dy, dx = k // 3, k % 3
                win = pad_ref[:, pl.ds(dy, hp), pl.ds(dx, wp), :].reshape(rows, c2)
                h2 = h2 + jnp.dot(win, w2_ref[pl.ds(k * c2, c2), :],
                                  preferred_element_type=jnp.float32)

        # ---- stage 3: bn_3 -> relu -> conv_3 (1x1) + shortcut + residual add ----
        a3 = jnp.maximum(h2 * s3_ref[...] + b3_ref[...], 0.0)
        out = jnp.dot(a3.astype(compute_dtype), w3_ref[...],
                      preferred_element_type=jnp.float32)                    # (rows, cout)
        if has_shortcut:
            out = out + jnp.dot(x2.astype(compute_dtype), ws_ref[...],
                                preferred_element_type=jnp.float32)
        else:
            out = out + x2                      # identity shortcut: plain VPU add (cx == cout)

        out4 = out.reshape(bt, hp, wp, cout)    # leading-dim split only (wp multiple of 8)
        if lane_dense_out:
            # cout < 128: pack (wp, cout) into one dense lane dim via wp static column
            # stores (VMEM-local); the HBM writeback then moves unmasked 128-lane rows.
            for j in range(wp):
                o_ref[:, :, pl.ds(j * cout, cout)] = out4[:, :, j, :].astype(o_ref.dtype)
        else:
            o_ref[...] = out4.astype(o_ref.dtype)

    return kernel


# ------------------------------ host-side wrapper ----------------------------------

def _pick_batch_tile(n, rows, max_rows=2048):
    """Smallest divisor of n whose row count reaches 256 (capped at max_rows rows)."""
    best = 1
    for cand in range(1, n + 1):
        if n % cand:
            continue
        if cand * rows <= max_rows:
            best = cand
        if best * rows >= 256:
            break
    return best


def bottleneck_forward(x_nchw, prep, stride, compute_dtype=jnp.bfloat16):
    n, cin, h, w = x_nchw.shape
    s = stride
    hp, wp = h // s, w // s
    cx = cin * s * s
    c2 = prep["w1bd"].shape[1]
    cb = prep["w3"].shape[0]
    cout = prep["w3"].shape[1]
    rows = hp * wp

    # Single combined layout op: NCHW -> space-to-depth -> channels-last with block-channel
    # order (dy, dx, c), matching InvertibleDownsample's permute(0, 3, 5, 1, 2, 4).
    x2 = x_nchw.reshape(n, cin, hp, s, wp, s)
    x2 = jnp.transpose(x2, (0, 2, 4, 3, 5, 1)).reshape(n, hp, wp, cx)

    has_shortcut = prep["ws"] is not None
    use_im2col = c2 < 128            # only tiny bottleneck widths keep the im2col slab
    lane_dense_out = cout < 128      # lane-dense writeback when channels under-fill lanes
    bt = _pick_batch_tile(n, rows)   # fold batch into the matmul M dimension
    grid_n = n // bt
    dtb = jnp.dtype(compute_dtype).itemsize

    kernel = _make_fused_kernel(has_shortcut, use_im2col, lane_dense_out, compute_dtype)

    to_c = lambda a: a.astype(compute_dtype)
    in_arrays = [x2, prep["s1"], prep["b1"], to_c(prep["w1bd"]),
                 prep["s2"], prep["b2"], to_c(prep["w2"]),
                 prep["s3"], prep["b3"], to_c(prep["w3"])]
    in_specs = [
        pl.BlockSpec((bt, hp, wp, cx), lambda b: (b, 0, 0, 0)),
        pl.BlockSpec((1, cx), lambda b: (0, 0)),
        pl.BlockSpec((1, cx), lambda b: (0, 0)),
        pl.BlockSpec((cx, c2), lambda b: (0, 0)),
        pl.BlockSpec((1, c2), lambda b: (0, 0)),
        pl.BlockSpec((1, c2), lambda b: (0, 0)),
        pl.BlockSpec((9 * c2, cb), lambda b: (0, 0)),
        pl.BlockSpec((1, cb), lambda b: (0, 0)),
        pl.BlockSpec((1, cb), lambda b: (0, 0)),
        pl.BlockSpec((cb, cout), lambda b: (0, 0)),
    ]
    if has_shortcut:
        in_arrays.append(to_c(prep["ws"]))
        in_specs.append(pl.BlockSpec((cx, cout), lambda b: (0, 0)))

    if lane_dense_out:
        out_shape = jax.ShapeDtypeStruct((n, hp, wp * cout), jnp.float32)
        out_spec = pl.BlockSpec((bt, hp, wp * cout), lambda b: (b, 0, 0))
    else:
        out_shape = jax.ShapeDtypeStruct((n, hp, wp, cout), jnp.float32)
        out_spec = pl.BlockSpec((bt, hp, wp, cout), lambda b: (b, 0, 0, 0))

    scratch_shapes = [pltpu.VMEM((bt, hp + 2, wp + 2, c2), compute_dtype)]  # padded act2
    if use_im2col:
        scratch_shapes.append(pltpu.VMEM((bt * rows, 9 * c2), compute_dtype))  # im2col slab

    # --- advisory cost estimate + explicit scoped-VMEM budget ---------------------------
    weight_elems = (cx * c2 + 9 * c2 * cb + cb * cout
                    + (cx * cout if has_shortcut else 0))
    cost = pl.CostEstimate(
        flops=2 * n * rows * weight_elems,
        transcendentals=0,
        bytes_accessed=(x2.size + n * rows * cout) * 4 + weight_elems * dtb
                       + 2 * (cx + c2 + cb) * 4)

    blk_rows = bt * rows
    vmem_needed = (
        2 * blk_rows * cx * 4                                   # double-buffered input block
        + 2 * blk_rows * cout * 4                               # double-buffered output block
        + 2 * (weight_elems * dtb + 2 * (cx + c2 + cb) * 4)     # (double-buffered) params
        + bt * (hp + 2) * (wp + 2) * c2 * dtb                   # padded-activation scratch
        + (blk_rows * 9 * c2 * dtb if use_im2col else 0)        # im2col slab (tiny c2 only)
        + blk_rows * (cx + 3 * c2 + 2 * cb + 2 * cout) * 4)     # live f32 value temporaries
    vmem_limit = int(min(max(2 * vmem_needed, 32 * 2 ** 20), 64 * 2 ** 20))

    out = pl.pallas_call(
        kernel,
        out_shape=out_shape,
        grid_spec=pltpu.PrefetchScalarGridSpec(
            num_scalar_prefetch=0,
            grid=(grid_n,),                      # one batch tile per grid step
            in_specs=in_specs,
            out_specs=out_spec,
            scratch_shapes=scratch_shapes,
        ),
        compiler_params=pltpu.CompilerParams(
            dimension_semantics=("parallel",),   # batch tiles are independent (megacore)
            vmem_limit_bytes=vmem_limit),
        cost_estimate=cost,
    )(*in_arrays)

    if lane_dense_out:
        out = out.reshape(n, hp, wp, cout)
    return jnp.transpose(out, (0, 3, 1, 2))      # NHWC -> NCHW


# ------------------------------ parameter handling ---------------------------------

def fold_bn(gamma, beta, mean, var, eps=1e-5):
    scale = gamma / jnp.sqrt(var + eps)
    return scale, beta - mean * scale


def init_raw_params(key, cin, cout, stride):
    """Random parameters in PyTorch layouts (inference-mode BatchNorm statistics)."""
    cb = cout // 4
    s = stride
    keys = jax.random.split(key, 7)

    def bn_params(k, c):
        k1, k2, k3, k4 = jax.random.split(k, 4)
        gamma = jax.random.uniform(k1, (c,), jnp.float32, 0.5, 1.5)
        beta = 0.1 * jax.random.normal(k2, (c,), jnp.float32)
        mean = 0.1 * jax.random.normal(k3, (c,), jnp.float32)
        var = jax.random.uniform(k4, (c,), jnp.float32, 0.5, 1.5)
        return (gamma, beta, mean, var)

    return dict(
        bn1=bn_params(keys[0], cin),
        bn2=bn_params(keys[1], cb),
        bn3=bn_params(keys[2], cb),
        w1=0.1 * jax.random.normal(keys[3], (cb, cin, 1, 1), jnp.float32),
        w2=0.1 * jax.random.normal(keys[4], (cb, cb * s * s, 3, 3), jnp.float32),
        w3=0.1 * jax.random.normal(keys[5], (cout, cb, 1, 1), jnp.float32),
        ws=(0.1 * jax.random.normal(keys[6], (cout, cin * s * s, 1, 1), jnp.float32)
            if (stride != 1 or cin != cout) else None),
    )


def prepare_params(raw, stride):
    """Fold BN and convert PyTorch weight layouts into the fused-kernel layouts."""
    s = stride
    cb, cin = raw["w1"].shape[0], raw["w1"].shape[1]
    cout = raw["w3"].shape[0]
    c2 = cb * s * s
    cx = cin * s * s

    s1, b1 = fold_bn(*raw["bn1"])
    s2, b2 = fold_bn(*raw["bn2"])
    s3, b3 = fold_bn(*raw["bn3"])

    # conv_1: (cb, cin, 1, 1) -> (cin, cb), block-diagonally expanded over the s*s
    # space-to-depth groups (a 1x1 conv commutes with the spatial permutation).
    w1 = raw["w1"][:, :, 0, 0].T
    w1bd = jnp.zeros((cx, c2), jnp.float32)
    for g in range(s * s):
        w1bd = w1bd.at[g * cin:(g + 1) * cin, g * cb:(g + 1) * cb].set(w1)

    # conv_2 (3x3 on the downsampled tensor): (cb, c2, 3, 3) -> im2col layout (9*c2, cb),
    # K ordered (tap k = kh*3 + kw, channel).
    w2 = jnp.transpose(raw["w2"], (2, 3, 1, 0)).reshape(9 * c2, cb)

    # conv_3: (cout, cb, 1, 1) -> (cb, cout);  shortcut 1x1: (cout, cx, 1, 1) -> (cx, cout)
    w3 = raw["w3"][:, :, 0, 0].T
    ws = None if raw["ws"] is None else raw["ws"][:, :, 0, 0].T

    # Per-channel BN params commute with space-to-depth -> tile over the s*s groups.
    return dict(
        s1=jnp.tile(s1, s * s).reshape(1, cx), b1=jnp.tile(b1, s * s).reshape(1, cx),
        s2=jnp.tile(s2, s * s).reshape(1, c2), b2=jnp.tile(b2, s * s).reshape(1, c2),
        s3=s3.reshape(1, cb), b3=b3.reshape(1, cb),
        w1bd=w1bd, w2=w2, w3=w3, ws=ws,
    )


# ------------------------------ pure-JAX reference ----------------------------------

def reference_forward(x, raw, stride, eps=1e-5, compute_dtype=jnp.float32):
    """Direct port of the PyTorch module (inference-mode BN), NCHW + lax.conv.  With
    compute_dtype=bfloat16 the conv operands are cast exactly where the kernel casts."""
    precision = lax.Precision.HIGHEST if compute_dtype == jnp.float32 else None

    def bn(v, p):
        g, b, m, var = p
        return ((v - m[None, :, None, None]) / jnp.sqrt(var + eps)[None, :, None, None]
                * g[None, :, None, None] + b[None, :, None, None])

    def s2d(v, s):  # InvertibleDownsample
        n, c, h, w = v.shape
        v = v.reshape(n, c, h // s, s, w // s, s)
        v = jnp.transpose(v, (0, 3, 5, 1, 2, 4))
        return v.reshape(n, s * s * c, h // s, w // s)

    def conv(v, wgt, pad):
        return lax.conv_general_dilated(
            v.astype(compute_dtype), wgt.astype(compute_dtype), (1, 1), pad,
            dimension_numbers=("NCHW", "OIHW", "NCHW"),
            preferred_element_type=jnp.float32, precision=precision)

    a1 = jnp.maximum(bn(x, raw["bn1"]), 0.0)
    h1 = conv(a1, raw["w1"], "VALID")
    a2 = jnp.maximum(bn(h1, raw["bn2"]), 0.0)
    h2 = conv(s2d(a2, stride), raw["w2"], "SAME")
    a3 = jnp.maximum(bn(h2, raw["bn3"]), 0.0)
    h3 = conv(a3, raw["w3"], "VALID")
    r = x if raw["ws"] is None else conv(s2d(x, stride), raw["ws"], "VALID")
    return h3 + r


def _check(name, out, ref, tol):
    err = float(jnp.max(jnp.abs(out - ref)))
    if err > tol:
        raise AssertionError(f"{name}: max abs err = {err} > {tol}")


# ----------------------------------- main -------------------------------------------

if __name__ == "__main__":
    root = jax.random.PRNGKey(0)
    kx1, kp1, kx2, kp2, kx3, kp3 = jax.random.split(root, 6)

    # case 1: stride-2 bottleneck with DownsampleConv2d shortcut; tiny c2 -> im2col path,
    #         cout=32 < 128 -> lane-dense output path; batch 4 -> M = 256 per grid step.
    N, CIN, H, W, COUT, STRIDE = 4, 16, 16, 16, 32, 2
    x = jax.random.normal(kx1, (N, CIN, H, W), jnp.float32)
    raw = init_raw_params(kp1, CIN, COUT, STRIDE)
    prep = prepare_params(raw, STRIDE)

    out = jax.block_until_ready(bottleneck_forward(x, prep, STRIDE))         # bf16 matmuls
    assert out.shape == (N, COUT, H // STRIDE, W // STRIDE), out.shape
    _check("case1 bf16", out,
           reference_forward(x, raw, STRIDE, compute_dtype=jnp.bfloat16), 1e-2)

    # exact-f32 semantics path (loose tolerance only because backend dot precision for
    # f32 operands is implementation defined; structural bugs would be O(1) errors).
    out_f32 = jax.block_until_ready(
        bottleneck_forward(x, prep, STRIDE, compute_dtype=jnp.float32))
    _check("case1 f32", out_f32, reference_forward(x, raw, STRIDE), 5e-2)

    # case 2: identity-shortcut bottleneck (stride=1, cin == cout == 128) -> plain VPU add,
    #         native (already lane-dense) output.
    N2, CIO, H2, W2 = 2, 128, 8, 8
    x_id = jax.random.normal(kx2, (N2, CIO, H2, W2), jnp.float32)
    raw_id = init_raw_params(kp2, CIO, CIO, 1)
    prep_id = prepare_params(raw_id, 1)
    out_id = jax.block_until_ready(bottleneck_forward(x_id, prep_id, 1))
    assert out_id.shape == (N2, CIO, H2, W2), out_id.shape
    _check("case2 bf16", out_id,
           reference_forward(x_id, raw_id, 1, compute_dtype=jnp.bfloat16), 1e-2)

    # case 3: stride-2 bottleneck with production-like channels (c2 = 256 >= 128) ->
    #         slab-free tap-accumulation path for the 3x3 conv, shortcut matmul.
    N3, CIN3, H3, W3, COUT3, STRIDE3 = 2, 64, 16, 16, 256, 2
    x3 = jax.random.normal(kx3, (N3, CIN3, H3, W3), jnp.float32)
    raw3 = init_raw_params(kp3, CIN3, COUT3, STRIDE3)
    prep3 = prepare_params(raw3, STRIDE3)
    out3 = jax.block_until_ready(bottleneck_forward(x3, prep3, STRIDE3))
    assert out3.shape == (N3, COUT3, H3 // STRIDE3, W3 // STRIDE3), out3.shape
    _check("case3 bf16", out3,
           reference_forward(x3, raw3, STRIDE3, compute_dtype=jnp.bfloat16), 1e-2)

    print("KERNEL_OK")
</pallas_src>

<mosaic_0001>
module attributes {stable_mosaic.version = 11 : i64} {
  func.func @kernel(%arg0: i32, %arg1: memref<4x8x8x64xf32, #tpu.memory_space<vmem>>, %arg2: memref<1x64xf32, #tpu.memory_space<vmem>>, %arg3: memref<1x64xf32, #tpu.memory_space<vmem>>, %arg4: memref<64x32xbf16, #tpu.memory_space<vmem>>, %arg5: memref<1x32xf32, #tpu.memory_space<vmem>>, %arg6: memref<1x32xf32, #tpu.memory_space<vmem>>, %arg7: memref<288x8xbf16, #tpu.memory_space<vmem>>, %arg8: memref<1x8xf32, #tpu.memory_space<vmem>>, %arg9: memref<1x8xf32, #tpu.memory_space<vmem>>, %arg10: memref<8x32xbf16, #tpu.memory_space<vmem>>, %arg11: memref<64x32xbf16, #tpu.memory_space<vmem>>, %arg12: memref<4x8x256xf32, #tpu.memory_space<vmem>>, %arg13: memref<4x10x10x32xbf16, #tpu.memory_space<vmem>>, %arg14: memref<256x288xbf16, #tpu.memory_space<vmem>>) attributes {dimension_semantics = [#tpu.dimension_semantics<parallel>], iteration_bounds = array<i64: 1>, scalar_prefetch = 0 : i64, scratch_operands = 2 : i64, tpu.core_type = #tpu.core_type<tc>, window_params = [{transform_indices = @transform_0, window_bounds = array<i64: 4, 8, 8, 64>}, {pipeline_mode = #tpu.pipeline_mode<synchronous>, transform_indices = @transform_1, window_bounds = array<i64: 1, 64>}, {pipeline_mode = #tpu.pipeline_mode<synchronous>, transform_indices = @transform_2, window_bounds = array<i64: 1, 64>}, {pipeline_mode = #tpu.pipeline_mode<synchronous>, transform_indices = @transform_3, window_bounds = array<i64: 64, 32>}, {pipeline_mode = #tpu.pipeline_mode<synchronous>, transform_indices = @transform_4, window_bounds = array<i64: 1, 32>}, {pipeline_mode = #tpu.pipeline_mode<synchronous>, transform_indices = @transform_5, window_bounds = array<i64: 1, 32>}, {pipeline_mode = #tpu.pipeline_mode<synchronous>, transform_indices = @transform_6, window_bounds = array<i64: 288, 8>}, {pipeline_mode = #tpu.pipeline_mode<synchronous>, transform_indices = @transform_7, window_bounds = array<i64: 1, 8>}, {pipeline_mode = #tpu.pipeline_mode<synchronous>, transform_indices = @transform_8, window_bounds = array<i64: 1, 8>}, {pipeline_mode = #tpu.pipeline_mode<synchronous>, transform_indices = @transform_9, window_bounds = array<i64: 8, 32>}, {pipeline_mode = #tpu.pipeline_mode<synchronous>, transform_indices = @transform_10, window_bounds = array<i64: 64, 32>}, {transform_indices = @transform_11, window_bounds = array<i64: 4, 8, 256>}]} {
    %c0 = arith.constant 0 : index
    %c0_0 = arith.constant 0 : index
    %c0_1 = arith.constant 0 : index
    %c0_2 = arith.constant 0 : index
    %0 = vector.load %arg1[%c0, %c0_0, %c0_1, %c0_2] : memref<4x8x8x64xf32, #tpu.memory_space<vmem>>, vector<4x8x8x64xf32>
    %1 = vector.shape_cast %0 : vector<4x8x8x64xf32> to vector<256x64xf32>
    %c0_3 = arith.constant 0 : index
    %c0_4 = arith.constant 0 : index
    %2 = vector.load %arg2[%c0_3, %c0_4] : memref<1x64xf32, #tpu.memory_space<vmem>>, vector<1x64xf32>
    %3 = vector.broadcast %2 : vector<1x64xf32> to vector<256x64xf32>
    %4 = arith.mulf %1, %3 : vector<256x64xf32>
    %c0_5 = arith.constant 0 : index
    %c0_6 = arith.constant 0 : index
    %5 = vector.load %arg3[%c0_5, %c0_6] : memref<1x64xf32, #tpu.memory_space<vmem>>, vector<1x64xf32>
    %6 = vector.broadcast %5 : vector<1x64xf32> to vector<256x64xf32>
    %7 = arith.addf %4, %6 : vector<256x64xf32>
    %cst = arith.constant 0.000000e+00 : f32
    %8 = vector.broadcast %cst : f32 to vector<256x64xf32>
    %9 = arith.maximumf %7, %8 : vector<256x64xf32>
    %10 = arith.truncf %9 : vector<256x64xf32> to vector<256x64xbf16>
    %c0_7 = arith.constant 0 : index
    %c0_8 = arith.constant 0 : index
    %11 = vector.load %arg4[%c0_7, %c0_8] : memref<64x32xbf16, #tpu.memory_space<vmem>>, vector<64x32xbf16>
    %cst_9 = arith.constant dense<0.000000e+00> : vector<256x32xf32>
    %12 = tpu.matmul %10, %11, %cst_9 {dimension_numbers = #tpu.dot_dimension_numbers<[1], [0], [0], [1], [0, 0, 1, 1], [], []>} : vector<256x64xbf16>, vector<64x32xbf16>, vector<256x32xf32> -> vector<256x32xf32>
    %c0_10 = arith.constant 0 : index
    %c0_11 = arith.constant 0 : index
    %13 = vector.load %arg5[%c0_10, %c0_11] : memref<1x32xf32, #tpu.memory_space<vmem>>, vector<1x32xf32>
    %14 = vector.broadcast %13 : vector<1x32xf32> to vector<256x32xf32>
    %15 = arith.mulf %12, %14 : vector<256x32xf32>
    %c0_12 = arith.constant 0 : index
    %c0_13 = arith.constant 0 : index
    %16 = vector.load %arg6[%c0_12, %c0_13] : memref<1x32xf32, #tpu.memory_space<vmem>>, vector<1x32xf32>
    %17 = vector.broadcast %16 : vector<1x32xf32> to vector<256x32xf32>
    %18 = arith.addf %15, %17 : vector<256x32xf32>
    %cst_14 = arith.constant 0.000000e+00 : f32
    %19 = vector.broadcast %cst_14 : f32 to vector<256x32xf32>
    %20 = arith.maximumf %18, %19 : vector<256x32xf32>
    %cst_15 = arith.constant 0.000000e+00 : bf16
    %21 = vector.broadcast %cst_15 : bf16 to vector<4x1x10x32xbf16>
    %cst_16 = arith.constant 0.000000e+00 : bf16
    %22 = vector.broadcast %cst_16 : bf16 to vector<4x8x1x32xbf16>
    %c0_17 = arith.constant 0 : index
    %c0_18 = arith.constant 0 : index
    %c0_19 = arith.constant 0 : index
    %c0_20 = arith.constant 0 : index
    %23 = vector.load %arg13[%c0_17, %c0_18, %c0_19, %c0_20] : memref<4x10x10x32xbf16, #tpu.memory_space<vmem>>, vector<4x1x10x32xbf16>
    tpu.vector_store %arg13[%c0_17, %c0_18, %c0_19, %c0_20], %21 {strides = array<i32>} : memref<4x10x10x32xbf16, #tpu.memory_space<vmem>>, vector<4x1x10x32xbf16>,
    %c0_21 = arith.constant 0 : index
    %c9 = arith.constant 9 : index
    %c0_22 = arith.constant 0 : index
    %c0_23 = arith.constant 0 : index
    %24 = vector.load %arg13[%c0_21, %c9, %c0_22, %c0_23] : memref<4x10x10x32xbf16, #tpu.memory_space<vmem>>, vector<4x1x10x32xbf16>
    tpu.vector_store %arg13[%c0_21, %c9, %c0_22, %c0_23], %21 {strides = array<i32>} : memref<4x10x10x32xbf16, #tpu.memory_space<vmem>>, vector<4x1x10x32xbf16>,
    %c0_24 = arith.constant 0 : index
    %c1 = arith.constant 1 : index
    %c0_25 = arith.constant 0 : index
    %c0_26 = arith.constant 0 : index
    %25 = vector.load %arg13[%c0_24, %c1, %c0_25, %c0_26] : memref<4x10x10x32xbf16, #tpu.memory_space<vmem>>, vector<4x8x1x32xbf16>
    tpu.vector_store %arg13[%c0_24, %c1, %c0_25, %c0_26], %22 {strides = array<i32>} : memref<4x10x10x32xbf16, #tpu.memory_space<vmem>>, vector<4x8x1x32xbf16>,
    %c0_27 = arith.constant 0 : index
    %c1_28 = arith.constant 1 : index
    %c9_29 = arith.constant 9 : index
    %c0_30 = arith.constant 0 : index
    %26 = vector.load %arg13[%c0_27, %c1_28, %c9_29, %c0_30] : memref<4x10x10x32xbf16, #tpu.memory_space<vmem>>, vector<4x8x1x32xbf16>
    tpu.vector_store %arg13[%c0_27, %c1_28, %c9_29, %c0_30], %22 {strides = array<i32>} : memref<4x10x10x32xbf16, #tpu.memory_space<vmem>>, vector<4x8x1x32xbf16>,
    %27 = vector.shape_cast %20 : vector<256x32xf32> to vector<4x8x8x32xf32>
    %28 = arith.truncf %27 : vector<4x8x8x32xf32> to vector<4x8x8x32xbf16>
    %c0_31 = arith.constant 0 : index
    %c1_32 = arith.constant 1 : index
    %c1_33 = arith.constant 1 : index
    %c0_34 = arith.constant 0 : index
    %29 = vector.load %arg13[%c0_31, %c1_32, %c1_33, %c0_34] : memref<4x10x10x32xbf16, #tpu.memory_space<vmem>>, vector<4x8x8x32xbf16>
    tpu.vector_store %arg13[%c0_31, %c1_32, %c1_33, %c0_34], %28 {strides = array<i32>} : memref<4x10x10x32xbf16, #tpu.memory_space<vmem>>, vector<4x8x8x32xbf16>,
    %c0_35 = arith.constant 0 : index
    %c0_36 = arith.constant 0 : index
    %c0_37 = arith.constant 0 : index
    %c0_38 = arith.constant 0 : index
    %30 = vector.load %arg13[%c0_35, %c0_36, %c0_37, %c0_38] : memref<4x10x10x32xbf16, #tpu.memory_space<vmem>>, vector<4x8x8x32xbf16>
    %31 = vector.shape_cast %30 : vector<4x8x8x32xbf16> to vector<256x32xbf16>
    %c0_39 = arith.constant 0 : index
    %c0_40 = arith.constant 0 : index
    %32 = vector.load %arg14[%c0_39, %c0_40] : memref<256x288xbf16, #tpu.memory_space<vmem>>, vector<256x32xbf16>
    tpu.vector_store %arg14[%c0_39, %c0_40], %31 {strides = array<i32>} : memref<256x288xbf16, #tpu.memory_space<vmem>>, vector<256x32xbf16>,
    %c0_41 = arith.constant 0 : index
    %c0_42 = arith.constant 0 : index
    %c1_43 = arith.constant 1 : index
    %c0_44 = arith.constant 0 : index
    %33 = vector.load %arg13[%c0_41, %c0_42, %c1_43, %c0_44] : memref<4x10x10x32xbf16, #tpu.memory_space<vmem>>, vector<4x8x8x32xbf16>
    %34 = vector.shape_cast %33 : vector<4x8x8x32xbf16> to vector<256x32xbf16>
    %c0_45 = arith.constant 0 : index
    %c32 = arith.constant 32 : index
    %35 = vector.load %arg14[%c0_45, %c32] : memref<256x288xbf16, #tpu.memory_space<vmem>>, vector<256x32xbf16>
    tpu.vector_store %arg14[%c0_45, %c32], %34 {strides = array<i32>} : memref<256x288xbf16, #tpu.memory_space<vmem>>, vector<256x32xbf16>,
    %c0_46 = arith.constant 0 : index
    %c0_47 = arith.constant 0 : index
    %c2 = arith.constant 2 : index
    %c0_48 = arith.constant 0 : index
    %36 = vector.load %arg13[%c0_46, %c0_47, %c2, %c0_48] : memref<4x10x10x32xbf16, #tpu.memory_space<vmem>>, vector<4x8x8x32xbf16>
    %37 = vector.shape_cast %36 : vector<4x8x8x32xbf16> to vector<256x32xbf16>
    %c0_49 = arith.constant 0 : index
    %c64 = arith.constant 64 : index
    %38 = vector.load %arg14[%c0_49, %c64] : memref<256x288xbf16, #tpu.memory_space<vmem>>, vector<256x32xbf16>
    tpu.vector_store %arg14[%c0_49, %c64], %37 {strides = array<i32>} : memref<256x288xbf16, #tpu.memory_space<vmem>>, vector<256x32xbf16>,
    %c0_50 = arith.constant 0 : index
    %c1_51 = arith.constant 1 : index
    %c0_52 = arith.constant 0 : index
    %c0_53 = arith.constant 0 : index
    %39 = vector.load %arg13[%c0_50, %c1_51, %c0_52, %c0_53] : memref<4x10x10x32xbf16, #tpu.memory_space<vmem>>, vector<4x8x8x32xbf16>
    %40 = vector.shape_cast %39 : vector<4x8x8x32xbf16> to vector<256x32xbf16>
    %c0_54 = arith.constant 0 : index
    %c96 = arith.constant 96 : index
    %41 = vector.load %arg14[%c0_54, %c96] : memref<256x288xbf16, #tpu.memory_space<vmem>>, vector<256x32xbf16>
    tpu.vector_store %arg14[%c0_54, %c96], %40 {strides = array<i32>} : memref<256x288xbf16, #tpu.memory_space<vmem>>, vector<256x32xbf16>,
    %c0_55 = arith.constant 0 : index
    %c1_56 = arith.constant 1 : index
    %c1_57 = arith.constant 1 : index
    %c0_58 = arith.constant 0 : index
    %42 = vector.load %arg13[%c0_55, %c1_56, %c1_57, %c0_58] : memref<4x10x10x32xbf16, #tpu.memory_space<vmem>>, vector<4x8x8x32xbf16>
    %43 = vector.shape_cast %42 : vector<4x8x8x32xbf16> to vector<256x32xbf16>
    %c0_59 = arith.constant 0 : index
    %c128 = arith.constant 128 : index
    %44 = vector.load %arg14[%c0_59, %c128] : memref<256x288xbf16, #tpu.memory_space<vmem>>, vector<256x32xbf16>
    tpu.vector_store %arg14[%c0_59, %c128], %43 {strides = array<i32>} : memref<256x288xbf16, #tpu.memory_space<vmem>>, vector<256x32xbf16>,
    %c0_60 = arith.constant 0 : index
    %c1_61 = arith.constant 1 : index
    %c2_62 = arith.constant 2 : index
    %c0_63 = arith.constant 0 : index
    %45 = vector.load %arg13[%c0_60, %c1_61, %c2_62, %c0_63] : memref<4x10x10x32xbf16, #tpu.memory_space<vmem>>, vector<4x8x8x32xbf16>
    %46 = vector.shape_cast %45 : vector<4x8x8x32xbf16> to vector<256x32xbf16>
    %c0_64 = arith.constant 0 : index
    %c160 = arith.constant 160 : index
    %47 = vector.load %arg14[%c0_64, %c160] : memref<256x288xbf16, #tpu.memory_space<vmem>>, vector<256x32xbf16>
    tpu.vector_store %arg14[%c0_64, %c160], %46 {strides = array<i32>} : memref<256x288xbf16, #tpu.memory_space<vmem>>, vector<256x32xbf16>,
    %c0_65 = arith.constant 0 : index
    %c2_66 = arith.constant 2 : index
    %c0_67 = arith.constant 0 : index
    %c0_68 = arith.constant 0 : index
    %48 = vector.load %arg13[%c0_65, %c2_66, %c0_67, %c0_68] : memref<4x10x10x32xbf16, #tpu.memory_space<vmem>>, vector<4x8x8x32xbf16>
    %49 = vector.shape_cast %48 : vector<4x8x8x32xbf16> to vector<256x32xbf16>
    %c0_69 = arith.constant 0 : index
    %c192 = arith.constant 192 : index
    %50 = vector.load %arg14[%c0_69, %c192] : memref<256x288xbf16, #tpu.memory_space<vmem>>, vector<256x32xbf16>
    tpu.vector_store %arg14[%c0_69, %c192], %49 {strides = array<i32>} : memref<256x288xbf16, #tpu.memory_space<vmem>>, vector<256x32xbf16>,
    %c0_70 = arith.constant 0 : index
    %c2_71 = arith.constant 2 : index
    %c1_72 = arith.constant 1 : index
    %c0_73 = arith.constant 0 : index
    %51 = vector.load %arg13[%c0_70, %c2_71, %c1_72, %c0_73] : memref<4x10x10x32xbf16, #tpu.memory_space<vmem>>, vector<4x8x8x32xbf16>
    %52 = vector.shape_cast %51 : vector<4x8x8x32xbf16> to vector<256x32xbf16>
    %c0_74 = arith.constant 0 : index
    %c224 = arith.constant 224 : index
    %53 = vector.load %arg14[%c0_74, %c224] : memref<256x288xbf16, #tpu.memory_space<vmem>>, vector<256x32xbf16>
    tpu.vector_store %arg14[%c0_74, %c224], %52 {strides = array<i32>} : memref<256x288xbf16, #tpu.memory_space<vmem>>, vector<256x32xbf16>,
    %c0_75 = arith.constant 0 : index
    %c2_76 = arith.constant 2 : index
    %c2_77 = arith.constant 2 : index
    %c0_78 = arith.constant 0 : index
    %54 = vector.load %arg13[%c0_75, %c2_76, %c2_77, %c0_78] : memref<4x10x10x32xbf16, #tpu.memory_space<vmem>>, vector<4x8x8x32xbf16>
    %55 = vector.shape_cast %54 : vector<4x8x8x32xbf16> to vector<256x32xbf16>
    %c0_79 = arith.constant 0 : index
    %c256 = arith.constant 256 : index
    %56 = vector.load %arg14[%c0_79, %c256] : memref<256x288xbf16, #tpu.memory_space<vmem>>, vector<256x32xbf16>
    tpu.vector_store %arg14[%c0_79, %c256], %55 {strides = array<i32>} : memref<256x288xbf16, #tpu.memory_space<vmem>>, vector<256x32xbf16>,
    %c0_80 = arith.constant 0 : index
    %c0_81 = arith.constant 0 : index
    %57 = vector.load %arg14[%c0_80, %c0_81] : memref<256x288xbf16, #tpu.memory_space<vmem>>, vector<256x288xbf16>
    %c0_82 = arith.constant 0 : index
    %c0_83 = arith.constant 0 : index
    %58 = vector.load %arg7[%c0_82, %c0_83] : memref<288x8xbf16, #tpu.memory_space<vmem>>, vector<288x8xbf16>
    %cst_84 = arith.constant dense<0.000000e+00> : vector<256x8xf32>
    %59 = tpu.matmul %57, %58, %cst_84 {dimension_numbers = #tpu.dot_dimension_numbers<[1], [0], [0], [1], [0, 0, 1, 1], [], []>} : vector<256x288xbf16>, vector<288x8xbf16>, vector<256x8xf32> -> vector<256x8xf32>
    %c0_85 = arith.constant 0 : index
    %c0_86 = arith.constant 0 : index
    %60 = vector.load %arg8[%c0_85, %c0_86] : memref<1x8xf32, #tpu.memory_space<vmem>>, vector<1x8xf32>
    %61 = vector.broadcast %60 : vector<1x8xf32> to vector<256x8xf32>
    %62 = arith.mulf %59, %61 : vector<256x8xf32>
    %c0_87 = arith.constant 0 : index
    %c0_88 = arith.constant 0 : index
    %63 = vector.load %arg9[%c0_87, %c0_88] : memref<1x8xf32, #tpu.memory_space<vmem>>, vector<1x8xf32>
    %64 = vector.broadcast %63 : vector<1x8xf32> to vector<256x8xf32>
    %65 = arith.addf %62, %64 : vector<256x8xf32>
    %cst_89 = arith.constant 0.000000e+00 : f32
    %66 = vector.broadcast %cst_89 : f32 to vector<256x8xf32>
    %67 = arith.maximumf %65, %66 : vector<256x8xf32>
    %68 = arith.truncf %67 : vector<256x8xf32> to vector<256x8xbf16>
    %c0_90 = arith.constant 0 : index
    %c0_91 = arith.constant 0 : index
    %69 = vector.load %arg10[%c0_90, %c0_91] : memref<8x32xbf16, #tpu.memory_space<vmem>>, vector<8x32xbf16>
    %cst_92 = arith.constant dense<0.000000e+00> : vector<256x32xf32>
    %70 = tpu.matmul %68, %69, %cst_92 {dimension_numbers = #tpu.dot_dimension_numbers<[1], [0], [0], [1], [0, 0, 1, 1], [], []>} : vector<256x8xbf16>, vector<8x32xbf16>, vector<256x32xf32> -> vector<256x32xf32>
    %71 = arith.truncf %1 : vector<256x64xf32> to vector<256x64xbf16>
    %c0_93 = arith.constant 0 : index
    %c0_94 = arith.constant 0 : index
    %72 = vector.load %arg11[%c0_93, %c0_94] : memref<64x32xbf16, #tpu.memory_space<vmem>>, vector<64x32xbf16>
    %cst_95 = arith.constant dense<0.000000e+00> : vector<256x32xf32>
    %73 = tpu.matmul %71, %72, %cst_95 {dimension_numbers = #tpu.dot_dimension_numbers<[1], [0], [0], [1], [0, 0, 1, 1], [], []>} : vector<256x64xbf16>, vector<64x32xbf16>, vector<256x32xf32> -> vector<256x32xf32>
    %74 = arith.addf %70, %73 : vector<256x32xf32>
    %75 = vector.shape_cast %74 : vector<256x32xf32> to vector<4x8x8x32xf32>
    %76 = vector.extract_strided_slice %75 {offsets = [0, 0, 0, 0], sizes = [4, 8, 1, 32], strides = [1, 1, 1, 1]} : vector<4x8x8x32xf32> to vector<4x8x1x32xf32>
    %77 = vector.shape_cast %76 : vector<4x8x1x32xf32> to vector<4x8x32xf32>
    %c0_96 = arith.constant 0 : index
    %c0_97 = arith.constant 0 : index
    %c0_98 = arith.constant 0 : index
    %78 = vector.load %arg12[%c0_96, %c0_97, %c0_98] : memref<4x8x256xf32, #tpu.memory_space<vmem>>, vector<4x8x32xf32>
    tpu.vector_store %arg12[%c0_96, %c0_97, %c0_98], %77 {strides = array<i32>} : memref<4x8x256xf32, #tpu.memory_space<vmem>>, vector<4x8x32xf32>,
    %79 = vector.extract_strided_slice %75 {offsets = [0, 0, 1, 0], sizes = [4, 8, 1, 32], strides = [1, 1, 1, 1]} : vector<4x8x8x32xf32> to vector<4x8x1x32xf32>
    %80 = vector.shape_cast %79 : vector<4x8x1x32xf32> to vector<4x8x32xf32>
    %c0_99 = arith.constant 0 : index
    %c0_100 = arith.constant 0 : index
    %c32_101 = arith.constant 32 : index
    %81 = vector.load %arg12[%c0_99, %c0_100, %c32_101] : memref<4x8x256xf32, #tpu.memory_space<vmem>>, vector<4x8x32xf32>
    tpu.vector_store %arg12[%c0_99, %c0_100, %c32_101], %80 {strides = array<i32>} : memref<4x8x256xf32, #tpu.memory_space<vmem>>, vector<4x8x32xf32>,
    %82 = vector.extract_strided_slice %75 {offsets = [0, 0, 2, 0], sizes = [4, 8, 1, 32], strides = [1, 1, 1, 1]} : vector<4x8x8x32xf32> to vector<4x8x1x32xf32>
    %83 = vector.shape_cast %82 : vector<4x8x1x32xf32> to vector<4x8x32xf32>
    %c0_102 = arith.constant 0 : index
    %c0_103 = arith.constant 0 : index
    %c64_104 = arith.constant 64 : index
    %84 = vector.load %arg12[%c0_102, %c0_103, %c64_104] : memref<4x8x256xf32, #tpu.memory_space<vmem>>, vector<4x8x32xf32>
    tpu.vector_store %arg12[%c0_102, %c0_103, %c64_104], %83 {strides = array<i32>} : memref<4x8x256xf32, #tpu.memory_space<vmem>>, vector<4x8x32xf32>,
    %85 = vector.extract_strided_slice %75 {offsets = [0, 0, 3, 0], sizes = [4, 8, 1, 32], strides = [1, 1, 1, 1]} : vector<4x8x8x32xf32> to vector<4x8x1x32xf32>
    %86 = vector.shape_cast %85 : vector<4x8x1x32xf32> to vector<4x8x32xf32>
    %c0_105 = arith.constant 0 : index
    %c0_106 = arith.constant 0 : index
    %c96_107 = arith.constant 96 : index
    %87 = vector.load %arg12[%c0_105, %c0_106, %c96_107] : memref<4x8x256xf32, #tpu.memory_space<vmem>>, vector<4x8x32xf32>
    tpu.vector_store %arg12[%c0_105, %c0_106, %c96_107], %86 {strides = array<i32>} : memref<4x8x256xf32, #tpu.memory_space<vmem>>, vector<4x8x32xf32>,
    %88 = vector.extract_strided_slice %75 {offsets = [0, 0, 4, 0], sizes = [4, 8, 1, 32], strides = [1, 1, 1, 1]} : vector<4x8x8x32xf32> to vector<4x8x1x32xf32>
    %89 = vector.shape_cast %88 : vector<4x8x1x32xf32> to vector<4x8x32xf32>
    %c0_108 = arith.constant 0 : index
    %c0_109 = arith.constant 0 : index
    %c128_110 = arith.constant 128 : index
    %90 = vector.load %arg12[%c0_108, %c0_109, %c128_110] : memref<4x8x256xf32, #tpu.memory_space<vmem>>, vector<4x8x32xf32>
    tpu.vector_store %arg12[%c0_108, %c0_109, %c128_110], %89 {strides = array<i32>} : memref<4x8x256xf32, #tpu.memory_space<vmem>>, vector<4x8x32xf32>,
    %91 = vector.extract_strided_slice %75 {offsets = [0, 0, 5, 0], sizes = [4, 8, 1, 32], strides = [1, 1, 1, 1]} : vector<4x8x8x32xf32> to vector<4x8x1x32xf32>
    %92 = vector.shape_cast %91 : vector<4x8x1x32xf32> to vector<4x8x32xf32>
    %c0_111 = arith.constant 0 : index
    %c0_112 = arith.constant 0 : index
    %c160_113 = arith.constant 160 : index
    %93 = vector.load %arg12[%c0_111, %c0_112, %c160_113] : memref<4x8x256xf32, #tpu.memory_space<vmem>>, vector<4x8x32xf32>
    tpu.vector_store %arg12[%c0_111, %c0_112, %c160_113], %92 {strides = array<i32>} : memref<4x8x256xf32, #tpu.memory_space<vmem>>, vector<4x8x32xf32>,
    %94 = vector.extract_strided_slice %75 {offsets = [0, 0, 6, 0], sizes = [4, 8, 1, 32], strides = [1, 1, 1, 1]} : vector<4x8x8x32xf32> to vector<4x8x1x32xf32>
    %95 = vector.shape_cast %94 : vector<4x8x1x32xf32> to vector<4x8x32xf32>
    %c0_114 = arith.constant 0 : index
    %c0_115 = arith.constant 0 : index
    %c192_116 = arith.constant 192 : index
    %96 = vector.load %arg12[%c0_114, %c0_115, %c192_116] : memref<4x8x256xf32, #tpu.memory_space<vmem>>, vector<4x8x32xf32>
    tpu.vector_store %arg12[%c0_114, %c0_115, %c192_116], %95 {strides = array<i32>} : memref<4x8x256xf32, #tpu.memory_space<vmem>>, vector<4x8x32xf32>,
    %97 = vector.extract_strided_slice %75 {offsets = [0, 0, 7, 0], sizes = [4, 8, 1, 32], strides = [1, 1, 1, 1]} : vector<4x8x8x32xf32> to vector<4x8x1x32xf32>
    %98 = vector.shape_cast %97 : vector<4x8x1x32xf32> to vector<4x8x32xf32>
    %c0_117 = arith.constant 0 : index
    %c0_118 = arith.constant 0 : index
    %c224_119 = arith.constant 224 : index
    %99 = vector.load %arg12[%c0_117, %c0_118, %c224_119] : memref<4x8x256xf32, #tpu.memory_space<vmem>>, vector<4x8x32xf32>
    tpu.vector_store %arg12[%c0_117, %c0_118, %c224_119], %98 {strides = array<i32>} : memref<4x8x256xf32, #tpu.memory_space<vmem>>, vector<4x8x32xf32>,
    return
  }
  func.func @transform_0(%arg0: i32) -> (i32, i32, i32, i32) {
    %c0_i32 = arith.constant 0 : i32
    %c0_i32_0 = arith.constant 0 : i32
    %c0_i32_1 = arith.constant 0 : i32
    %c0_i32_2 = arith.constant 0 : i32
    return %arg0, %c0_i32, %c0_i32_0, %c0_i32_1 : i32, i32, i32, i32
  }
  func.func @transform_1(%arg0: i32) -> (i32, i32) {
    %c0_i32 = arith.constant 0 : i32
    %c0_i32_0 = arith.constant 0 : i32
    %c0_i32_1 = arith.constant 0 : i32
    return %c0_i32, %c0_i32_0 : i32, i32
  }
  func.func @transform_2(%arg0: i32) -> (i32, i32) {
    %c0_i32 = arith.constant 0 : i32
    %c0_i32_0 = arith.constant 0 : i32
    %c0_i32_1 = arith.constant 0 : i32
    return %c0_i32, %c0_i32_0 : i32, i32
  }
  func.func @transform_3(%arg0: i32) -> (i32, i32) {
    %c0_i32 = arith.constant 0 : i32
    %c0_i32_0 = arith.constant 0 : i32
    %c0_i32_1 = arith.constant 0 : i32
    return %c0_i32, %c0_i32_0 : i32, i32
  }
  func.func @transform_4(%arg0: i32) -> (i32, i32) {
    %c0_i32 = arith.constant 0 : i32
    %c0_i32_0 = arith.constant 0 : i32
    %c0_i32_1 = arith.constant 0 : i32
    return %c0_i32, %c0_i32_0 : i32, i32
  }
  func.func @transform_5(%arg0: i32) -> (i32, i32) {
    %c0_i32 = arith.constant 0 : i32
    %c0_i32_0 = arith.constant 0 : i32
    %c0_i32_1 = arith.constant 0 : i32
    return %c0_i32, %c0_i32_0 : i32, i32
  }
  func.func @transform_6(%arg0: i32) -> (i32, i32) {
    %c0_i32 = arith.constant 0 : i32
    %c0_i32_0 = arith.constant 0 : i32
    %c0_i32_1 = arith.constant 0 : i32
    return %c0_i32, %c0_i32_0 : i32, i32
  }
  func.func @transform_7(%arg0: i32) -> (i32, i32) {
    %c0_i32 = arith.constant 0 : i32
    %c0_i32_0 = arith.constant 0 : i32
    %c0_i32_1 = arith.constant 0 : i32
    return %c0_i32, %c0_i32_0 : i32, i32
  }
  func.func @transform_8(%arg0: i32) -> (i32, i32) {
    %c0_i32 = arith.constant 0 : i32
    %c0_i32_0 = arith.constant 0 : i32
    %c0_i32_1 = arith.constant 0 : i32
    return %c0_i32, %c0_i32_0 : i32, i32
  }
  func.func @transform_9(%arg0: i32) -> (i32, i32) {
    %c0_i32 = arith.constant 0 : i32
    %c0_i32_0 = arith.constant 0 : i32
    %c0_i32_1 = arith.constant 0 : i32
    return %c0_i32, %c0_i32_0 : i32, i32
  }
  func.func @transform_10(%arg0: i32) -> (i32, i32) {
    %c0_i32 = arith.constant 0 : i32
    %c0_i32_0 = arith.constant 0 : i32
    %c0_i32_1 = arith.constant 0 : i32
    return %c0_i32, %c0_i32_0 : i32, i32
  }
  func.func @transform_11(%arg0: i32) -> (i32, i32, i32) {
    %c0_i32 = arith.constant 0 : i32
    %c0_i32_0 = arith.constant 0 : i32
    %c0_i32_1 = arith.constant 0 : i32
    return %arg0, %c0_i32, %c0_i32_0 : i32, i32, i32
  }
}

</mosaic_0001>

<llo_original>
// kernel: tpu_custom_call.1
$region0: #{tpu_custom_call.1}
  #allocation0 [shape = 'u32[]', space=smem, size = 0x4, offset = 0x4, fixed_abs, tag = 'smem constant byte address 0x4 - core index']
  #allocation1 [shape = 'u32[144,128]{1,0:T(1,128)}', space=vmem, size = 0x12000, scoped, tag = 'internal scratch']
  #allocation2 [shape = 'bf16[4,10,10,32]{3,2,1,0:T(8,128)(2,1)}', space=vmem, size = 0x28000, scoped, tag = 'scratch operand']
  #allocation3 [shape = 'bf16[256,288]{1,0:T(16,128)(2,1)}', space=vmem, size = 0x30000, scoped, tag = 'scratch operand']
  %s0 = inlined_call_operand.hbm [shape: f32[4,8,8,64], index: 0, kind: input, shape index: {}]
  %s1 = inlined_call_operand.vmem [shape: f32[1,64], index: 1, kind: input, shape index: {}]
  %s2 = inlined_call_operand.vmem [shape: f32[1,64], index: 2, kind: input, shape index: {}]
  %s3 = inlined_call_operand.vmem [shape: bf16[64,32], index: 3, kind: input, shape index: {}]
  %s4 = inlined_call_operand.vmem [shape: f32[1,32], index: 4, kind: input, shape index: {}]
  %s5 = inlined_call_operand.vmem [shape: f32[1,32], index: 5, kind: input, shape index: {}]
  %s6 = inlined_call_operand.vmem [shape: bf16[288,8], index: 6, kind: input, shape index: {}]
  %s7 = inlined_call_operand.vmem [shape: f32[1,8], index: 7, kind: input, shape index: {}]
  %s8 = inlined_call_operand.vmem [shape: f32[1,8], index: 8, kind: input, shape index: {}]
  %s9 = inlined_call_operand.vmem [shape: bf16[8,32], index: 9, kind: input, shape index: {}]
  %s10 = inlined_call_operand.vmem [shape: bf16[64,32], index: 10, kind: input, shape index: {}]
  %s11 = inlined_call_operand.hbm [shape: f32[4,8,256], index: 11, kind: output, shape index: {}]
  %s12 = sld [smem:[#allocation0]]
  $region58: #{tpu_custom_call.1} parent=0
    _
  %s14 = ssub.s32 1, %s12
  %s15 = scalar_select 0, %s14, %s12
  $region1: #{tpu_custom_call.1} parent=0
    #allocation4 [shape = 'u8[131072]{0}', space=vmem, size = 0x20000, scoped, tag = 'input window, operand 0, single buffered']
    #allocation5 [shape = 's32[1]{0}', space=sflag, size = 0x4, scoped, tag = 'scoped memory for tpu_custom_call.1']
    #allocation6 [shape = 's32[1]{0}', space=sflag, size = 0x4, scoped, tag = 'scoped memory for tpu_custom_call.1']
    #allocation7 [shape = 'u8[32768]{0}', space=vmem, size = 0x8000, scoped, tag = 'output window, operand 0, single buffered']
    %16 = vsyncpa [#allocation5], 0
    %17 = vsyncpa [#allocation6], 0
    // Predicated region
    $region2: #{tpu_custom_call.1} parent=1 // pred_check
      _
    $region3: #{tpu_custom_call.1} parent=1 // pred_check_branch
      %19 = sbr.rel (0) target = $region5
    $region4: #{tpu_custom_call.1} parent=1 // pred_region
      %s21 = ssub.s32 4096, 4096
      %22 = vsyncadd [#allocation5], %s21
      %s23 = sshll.u32 [#allocation4], 4
      %s24 = int_to_ptr.vmem [resolvable:$true] %s23
      %29 = dma.hbm_to_vmem [thread:$0]  %s0, 4096, %s24, [#allocation5], 128, 128, 8
    $region5: #{tpu_custom_call.1} parent=1 // pred_fallthru
      _
    // Predicated region
    $region6: #{tpu_custom_call.1} parent=1 // pred_check
      _
    $region7: #{tpu_custom_call.1} parent=1 // pred_check_branch
      %31 = sbr.rel (0) target = $region9
    $region8: #{tpu_custom_call.1} parent=1 // pred_region
      _
    $region9: #{tpu_custom_call.1} parent=1 // pred_fallthru
      _
    // Predicated region
    $region10: #{tpu_custom_call.1} parent=1 // pred_check
      _
    $region11: #{tpu_custom_call.1} parent=1 // pred_check_branch
      %33 = sbr.rel (0) target = $region13
    $region12: #{tpu_custom_call.1} parent=1 // pred_region
      _
    $region13: #{tpu_custom_call.1} parent=1 // pred_fallthru
      _
    // Predicated region
    $region14: #{tpu_custom_call.1} parent=1 // pred_check
      _
    $region15: #{tpu_custom_call.1} parent=1 // pred_check_branch
      %35 = sbr.rel (0) target = $region17
    $region16: #{tpu_custom_call.1} parent=1 // pred_region
      _
    $region17: #{tpu_custom_call.1} parent=1 // pred_fallthru
      _
    // Predicated region
    $region18: #{tpu_custom_call.1} parent=1 // pred_check
      _
    $region19: #{tpu_custom_call.1} parent=1 // pred_check_branch
      %37 = sbr.rel (0) target = $region21
    $region20: #{tpu_custom_call.1} parent=1 // pred_region
      _
    $region21: #{tpu_custom_call.1} parent=1 // pred_fallthru
      _
    // Predicated region
    $region22: #{tpu_custom_call.1} parent=1 // pred_check
      _
    $region23: #{tpu_custom_call.1} parent=1 // pred_check_branch
      %39 = sbr.rel (0) target = $region25
    $region24: #{tpu_custom_call.1} parent=1 // pred_region
      _
    $region25: #{tpu_custom_call.1} parent=1 // pred_fallthru
      _
    // Predicated region
    $region26: #{tpu_custom_call.1} parent=1 // pred_check
      _
    $region27: #{tpu_custom_call.1} parent=1 // pred_check_branch
      %41 = sbr.rel (0) target = $region29
    $region28: #{tpu_custom_call.1} parent=1 // pred_region
      _
    $region29: #{tpu_custom_call.1} parent=1 // pred_fallthru
      _
    // Predicated region
    $region30: #{tpu_custom_call.1} parent=1 // pred_check
      _
    $region31: #{tpu_custom_call.1} parent=1 // pred_check_branch
      %43 = sbr.rel (0) target = $region33
    $region32: #{tpu_custom_call.1} parent=1 // pred_region
      _
    $region33: #{tpu_custom_call.1} parent=1 // pred_fallthru
      _
    // Predicated region
    $region34: #{tpu_custom_call.1} parent=1 // pred_check
      _
    $region35: #{tpu_custom_call.1} parent=1 // pred_check_branch
      %45 = sbr.rel (0) target = $region37
    $region36: #{tpu_custom_call.1} parent=1 // pred_region
      _
    $region37: #{tpu_custom_call.1} parent=1 // pred_fallthru
      _
    // Predicated region
    $region38: #{tpu_custom_call.1} parent=1 // pred_check
      _
    $region39: #{tpu_custom_call.1} parent=1 // pred_check_branch
      %47 = sbr.rel (0) target = $region41
    $region40: #{tpu_custom_call.1} parent=1 // pred_region
      _
    $region41: #{tpu_custom_call.1} parent=1 // pred_fallthru
      _
    // Predicated region
    $region42: #{tpu_custom_call.1} parent=1 // pred_check
      _
    $region43: #{tpu_custom_call.1} parent=1 // pred_check_branch
      %49 = sbr.rel (0) target = $region45
    $region44: #{tpu_custom_call.1} parent=1 // pred_region
      _
    $region45: #{tpu_custom_call.1} parent=1 // pred_fallthru
      _
    // Predicated region
    $region46: #{tpu_custom_call.1} parent=1 // pred_check
      _
    $region47: #{tpu_custom_call.1} parent=1 // pred_check_branch
      %51 = sbr.rel (0) target = $region49
    $region48: #{tpu_custom_call.1} parent=1 // pred_region
      %52 = dma.done [#allocation5], 4096
    $region49: #{tpu_custom_call.1} parent=1 // pred_fallthru
      _
    %v54 = vld [vmem:[#allocation4] sm:$0xff]
    %v55 = vld [vmem:[#allocation4 + $0x8] sm:$0xff]
    %v56 = vld [vmem:[#allocation4 + $0x10] sm:$0xff]
    %v57 = vld [vmem:[#allocation4 + $0x18] sm:$0xff]
    %v58 = vld [vmem:[#allocation4 + $0x20] sm:$0xff]
    %v59 = vld [vmem:[#allocation4 + $0x28] sm:$0xff]
    %v60 = vld [vmem:[#allocation4 + $0x30] sm:$0xff]
    %v61 = vld [vmem:[#allocation4 + $0x38] sm:$0xff]
    %v62 = vld [vmem:[#allocation4 + $0x40] sm:$0xff]
    %v63 = vld [vmem:[#allocation4 + $0x48] sm:$0xff]
    %v64 = vld [vmem:[#allocation4 + $0x50] sm:$0xff]
    %v65 = vld [vmem:[#allocation4 + $0x58] sm:$0xff]
    %v66 = vld [vmem:[#allocation4 + $0x60] sm:$0xff]
    %v67 = vld [vmem:[#allocation4 + $0x68] sm:$0xff]
    %v68 = vld [vmem:[#allocation4 + $0x70] sm:$0xff]
    %v69 = vld [vmem:[#allocation4 + $0x78] sm:$0xff]
    %v70 = vld [vmem:[#allocation4 + $0x80] sm:$0xff]
    %v71 = vld [vmem:[#allocation4 + $0x88] sm:$0xff]
    %v72 = vld [vmem:[#allocation4 + $0x90] sm:$0xff]
    %v73 = vld [vmem:[#allocation4 + $0x98] sm:$0xff]
    %v74 = vld [vmem:[#allocation4 + $0xa0] sm:$0xff]
    %v75 = vld [vmem:[#allocation4 + $0xa8] sm:$0xff]
    %v76 = vld [vmem:[#allocation4 + $0xb0] sm:$0xff]
    %v77 = vld [vmem:[#allocation4 + $0xb8] sm:$0xff]
    %v78 = vld [vmem:[#allocation4 + $0xc0] sm:$0xff]
    %v79 = vld [vmem:[#allocation4 + $0xc8] sm:$0xff]
    %v80 = vld [vmem:[#allocation4 + $0xd0] sm:$0xff]
    %v81 = vld [vmem:[#allocation4 + $0xd8] sm:$0xff]
    %v82 = vld [vmem:[#allocation4 + $0xe0] sm:$0xff]
    %v83 = vld [vmem:[#allocation4 + $0xe8] sm:$0xff]
    %v84 = vld [vmem:[#allocation4 + $0xf0] sm:$0xff]
    %v85 = vld [vmem:[#allocation4 + $0xf8] sm:$0xff]
    %v86 = vld [vmem:[%s1] sm:$0x1]
    %v88 = vlaneseq
    %v89 = vshrl.u32 %v88, 7
    %v90 = vsub.s32 0, %v89
    %v91 = vrot.slane %v86, %v90
    %v93 = vmul.f32 %v54, %v91
    %v94 = vmul.f32 %v55, %v91
    %v95 = vmul.f32 %v56, %v91
    %v96 = vmul.f32 %v57, %v91
    %v97 = vmul.f32 %v58, %v91
    %v98 = vmul.f32 %v59, %v91
    %v99 = vmul.f32 %v60, %v91
    %v100 = vmul.f32 %v61, %v91
    %v101 = vmul.f32 %v62, %v91
    %v102 = vmul.f32 %v63, %v91
    %v103 = vmul.f32 %v64, %v91
    %v104 = vmul.f32 %v65, %v91
    %v105 = vmul.f32 %v66, %v91
    %v106 = vmul.f32 %v67, %v91
    %v107 = vmul.f32 %v68, %v91
    %v108 = vmul.f32 %v69, %v91
    %v109 = vmul.f32 %v70, %v91
    %v110 = vmul.f32 %v71, %v91
    %v111 = vmul.f32 %v72, %v91
    %v112 = vmul.f32 %v73, %v91
    %v113 = vmul.f32 %v74, %v91
    %v114 = vmul.f32 %v75, %v91
    %v115 = vmul.f32 %v76, %v91
    %v116 = vmul.f32 %v77, %v91
    %v117 = vmul.f32 %v78, %v91
    %v118 = vmul.f32 %v79, %v91
    %v119 = vmul.f32 %v80, %v91
    %v120 = vmul.f32 %v81, %v91
    %v121 = vmul.f32 %v82, %v91
    %v122 = vmul.f32 %v83, %v91
    %v123 = vmul.f32 %v84, %v91
    %v124 = vmul.f32 %v85, %v91
    %v125 = vld [vmem:[%s2] sm:$0x1]
    %v127 = vlaneseq
    %v128 = vshrl.u32 %v127, 7
    %v129 = vsub.s32 0, %v128
    %v130 = vrot.slane %v125, %v129
    %v132 = vadd.f32 %v93, %v130
    %v133 = vadd.f32 %v94, %v130
    %v134 = vadd.f32 %v95, %v130
    %v135 = vadd.f32 %v96, %v130
    %v136 = vadd.f32 %v97, %v130
    %v137 = vadd.f32 %v98, %v130
    %v138 = vadd.f32 %v99, %v130
    %v139 = vadd.f32 %v100, %v130
    %v140 = vadd.f32 %v101, %v130
    %v141 = vadd.f32 %v102, %v130
    %v142 = vadd.f32 %v103, %v130
    %v143 = vadd.f32 %v104, %v130
    %v144 = vadd.f32 %v105, %v130
    %v145 = vadd.f32 %v106, %v130
    %v146 = vadd.f32 %v107, %v130
    %v147 = vadd.f32 %v108, %v130
    %v148 = vadd.f32 %v109, %v130
    %v149 = vadd.f32 %v110, %v130
    %v150 = vadd.f32 %v111, %v130
    %v151 = vadd.f32 %v112, %v130
    %v152 = vadd.f32 %v113, %v130
    %v153 = vadd.f32 %v114, %v130
    %v154 = vadd.f32 %v115, %v130
    %v155 = vadd.f32 %v116, %v130
    %v156 = vadd.f32 %v117, %v130
    %v157 = vadd.f32 %v118, %v130
    %v158 = vadd.f32 %v119, %v130
    %v159 = vadd.f32 %v120, %v130
    %v160 = vadd.f32 %v121, %v130
    %v161 = vadd.f32 %v122, %v130
    %v162 = vadd.f32 %v123, %v130
    %v163 = vadd.f32 %v124, %v130
    %v164 = vmax.f32 %v132, 0.0
    %v165 = vmax.f32 %v133, 0.0
    %v166 = vmax.f32 %v134, 0.0
    %v167 = vmax.f32 %v135, 0.0
    %v168 = vmax.f32 %v136, 0.0
    %v169 = vmax.f32 %v137, 0.0
    %v170 = vmax.f32 %v138, 0.0
    %v171 = vmax.f32 %v139, 0.0
    %v172 = vmax.f32 %v140, 0.0
    %v173 = vmax.f32 %v141, 0.0
    %v174 = vmax.f32 %v142, 0.0
    %v175 = vmax.f32 %v143, 0.0
    %v176 = vmax.f32 %v144, 0.0
    %v177 = vmax.f32 %v145, 0.0
    %v178 = vmax.f32 %v146, 0.0
    %v179 = vmax.f32 %v147, 0.0
    %v180 = vmax.f32 %v148, 0.0
    %v181 = vmax.f32 %v149, 0.0
    %v182 = vmax.f32 %v150, 0.0
    %v183 = vmax.f32 %v151, 0.0
    %v184 = vmax.f32 %v152, 0.0
    %v185 = vmax.f32 %v153, 0.0
    %v186 = vmax.f32 %v154, 0.0
    %v187 = vmax.f32 %v155, 0.0
    %v188 = vmax.f32 %v156, 0.0
    %v189 = vmax.f32 %v157, 0.0
    %v190 = vmax.f32 %v158, 0.0
    %v191 = vmax.f32 %v159, 0.0
    %v192 = vmax.f32 %v160, 0.0
    %v193 = vmax.f32 %v161, 0.0
    %v194 = vmax.f32 %v162, 0.0
    %v195 = vmax.f32 %v163, 0.0
    %v196 = vpack.c.bf16 %v165, %v164
    %v197 = vpack.c.bf16 %v167, %v166
    %v198 = vpack.c.bf16 %v169, %v168
    %v199 = vpack.c.bf16 %v171, %v170
    %v200 = vpack.c.bf16 %v173, %v172
    %v201 = vpack.c.bf16 %v175, %v174
    %v202 = vpack.c.bf16 %v177, %v176
    %v203 = vpack.c.bf16 %v179, %v178
    %v204 = vpack.c.bf16 %v181, %v180
    %v205 = vpack.c.bf16 %v183, %v182
    %v206 = vpack.c.bf16 %v185, %v184
    %v207 = vpack.c.bf16 %v187, %v186
    %v208 = vpack.c.bf16 %v189, %v188
    %v209 = vpack.c.bf16 %v191, %v190
    %v210 = vpack.c.bf16 %v193, %v192
    %v211 = vpack.c.bf16 %v195, %v194
    %v212 = vld [vmem:[%s3] sm:$0xf]
    %v213 = vld [vmem:[%s3 + $0x4] sm:$0xf]
    %v214 = vld [vmem:[%s3 + $0x8] sm:$0xf]
    %v215 = vld [vmem:[%s3 + $0xc] sm:$0xf]
    %v216 = vld [vmem:[%s3 + $0x10] sm:$0xf]
    %v217 = vld [vmem:[%s3 + $0x14] sm:$0xf]
    %v218 = vld [vmem:[%s3 + $0x18] sm:$0xf]
    %v219 = vld [vmem:[%s3 + $0x1c] sm:$0xf]
    %v228 = vunpack.c.l.b16 %v212
    %v229 = vunpack.c.l.b16 %v213
    %v230 = vunpack.c.l.b16 %v214
    %v231 = vunpack.c.l.b16 %v215
    %v232 = vunpack.c.l.b16 %v216
    %v233 = vunpack.c.l.b16 %v217
    %v234 = vunpack.c.l.b16 %v218
    %v235 = vunpack.c.l.b16 %v219
    %v236 = vpack.c.b16 %v229, %v228
    %v237 = vpack.c.b16 %v231, %v230
    %v238 = vpack.c.b16 %v233, %v232
    %v239 = vpack.c.b16 %v235, %v234
    %vm244 = vcmask 523264
    %v246 = vsel %vm244, %v196, 0
    %v249 = vsel %vm244, %v197, 0
    %v252 = vsel %vm244, %v198, 0
    %v255 = vsel %vm244, %v199, 0
    %v258 = vsel %vm244, %v200, 0
    %v261 = vsel %vm244, %v201, 0
    %v264 = vsel %vm244, %v202, 0
    %v267 = vsel %vm244, %v203, 0
    %v270 = vsel %vm244, %v204, 0
    %v273 = vsel %vm244, %v205, 0
    %v276 = vsel %vm244, %v206, 0
    %v279 = vsel %vm244, %v207, 0
    %v282 = vsel %vm244, %v208, 0
    %v285 = vsel %vm244, %v209, 0
    %v288 = vsel %vm244, %v210, 0
    %v291 = vsel %vm244, %v211, 0
    %293 = vmatprep.subr.bf16.mxu0 0
    %294 = vmatpush1.bf16.msra.mxu0 %v236
    %295 = vmatprep.subr.bf16.mxu0 0
    %296 = vmatpush1.bf16.msra.mxu0 %v237
    %297 = vmatprep.subr.bf16.mxu0 0
    %298 = vmatpush1.bf16.msra.mxu0 %v238
    %299 = vmatprep.subr.bf16.mxu0 0
    %300 = vmatpush1.bf16.msra.mxu0 %v239
    %301 = vmatprep.subr.bf16.mxu0 0
    %302 = vmatpush1.bf16.msra.mxu0 0
    %303 = vmatprep.subr.bf16.mxu0 0
    %304 = vmatpush1.bf16.msra.mxu0 0
    %305 = vmatprep.subr.bf16.mxu0 0
    %306 = vmatpush1.bf16.msra.mxu0 0
    %307 = vmatprep.subr.bf16.mxu0 0
    %308 = vmatpush1.bf16.msra.mxu0 0
    %309 = vmatprep.subr.bf16.mxu0 0
    %310 = vmatpush1.bf16.msra.mxu0 0
    %311 = vmatprep.subr.bf16.mxu0 0
    %312 = vmatpush1.bf16.msra.mxu0 0
    %313 = vmatprep.subr.bf16.mxu0 0
    %314 = vmatpush1.bf16.msra.mxu0 0
    %315 = vmatprep.subr.bf16.mxu0 0
    %316 = vmatpush1.bf16.msra.mxu0 0
    %317 = vmatprep.subr.bf16.mxu0 0
    %318 = vmatpush1.bf16.msra.mxu0 0
    %319 = vmatprep.subr.bf16.mxu0 0
    %320 = vmatpush1.bf16.msra.mxu0 0
    %321 = vmatprep.subr.bf16.mxu0 0
    %322 = vmatpush1.bf16.msra.mxu0 0
    %323 = vmatprep.subr.bf16.mxu0 0
    %324 = vmatpush1.bf16.msra.mxu0 0
    %325 = vmatprep.mubr.bf16.mxu0 0
    %326 = vmatmul.mubr.bf16.gmra.mrb[0].mxu0 %v246
    %v327 = vpop.f32.mrb[0].mxu0
    %v328 = vadd.f32 0.0, %v327
    %v329 = vpop.f32.mrb[0].mxu0
    %v330 = vpop.f32.mrb[0].mxu0
    %v331 = vadd.f32 0.0, %v330
    %v332 = vpop.f32.mrb[0].mxu0
    %333 = vmatprep.mubr.bf16.mxu0 0
    %334 = vmatmul.mubr.bf16.gmra.mrb[0].mxu0 %v249
    %v335 = vpop.f32.mrb[0].mxu0
    %v336 = vadd.f32 0.0, %v335
    %v337 = vpop.f32.mrb[0].mxu0
    %v338 = vpop.f32.mrb[0].mxu0
    %v339 = vadd.f32 0.0, %v338
    %v340 = vpop.f32.mrb[0].mxu0
    %341 = vmatprep.mubr.bf16.mxu0 0
    %342 = vmatmul.mubr.bf16.gmra.mrb[0].mxu0 %v252
    %v343 = vpop.f32.mrb[0].mxu0
    %v344 = vadd.f32 0.0, %v343
    %v345 = vpop.f32.mrb[0].mxu0
    %v346 = vpop.f32.mrb[0].mxu0
    %v347 = vadd.f32 0.0, %v346
    %v348 = vpop.f32.mrb[0].mxu0
    %349 = vmatprep.mubr.bf16.mxu0 0
    %350 = vmatmul.mubr.bf16.gmra.mrb[0].mxu0 %v255
    %v351 = vpop.f32.mrb[0].mxu0
    %v352 = vadd.f32 0.0, %v351
    %v353 = vpop.f32.mrb[0].mxu0
    %v354 = vpop.f32.mrb[0].mxu0
    %v355 = vadd.f32 0.0, %v354
    %v356 = vpop.f32.mrb[0].mxu0
    %357 = vmatprep.mubr.bf16.mxu0 0
    %358 = vmatmul.mubr.bf16.gmra.mrb[0].mxu0 %v258
    %v359 = vpop.f32.mrb[0].mxu0
    %v360 = vadd.f32 0.0, %v359
    %v361 = vpop.f32.mrb[0].mxu0
    %v362 = vpop.f32.mrb[0].mxu0
    %v363 = vadd.f32 0.0, %v362
    %v364 = vpop.f32.mrb[0].mxu0
    %365 = vmatprep.mubr.bf16.mxu0 0
    %366 = vmatmul.mubr.bf16.gmra.mrb[0].mxu0 %v261
    %v367 = vpop.f32.mrb[0].mxu0
    %v368 = vadd.f32 0.0, %v367
    %v369 = vpop.f32.mrb[0].mxu0
    %v370 = vpop.f32.mrb[0].mxu0
    %v371 = vadd.f32 0.0, %v370
    %v372 = vpop.f32.mrb[0].mxu0
    %373 = vmatprep.mubr.bf16.mxu0 0
    %374 = vmatmul.mubr.bf16.gmra.mrb[0].mxu0 %v264
    %v375 = vpop.f32.mrb[0].mxu0
    %v376 = vadd.f32 0.0, %v375
    %v377 = vpop.f32.mrb[0].mxu0
    %v378 = vpop.f32.mrb[0].mxu0
    %v379 = vadd.f32 0.0, %v378
    %v380 = vpop.f32.mrb[0].mxu0
    %381 = vmatprep.mubr.bf16.mxu0 0
    %382 = vmatmul.mubr.bf16.gmra.mrb[0].mxu0 %v267
    %v383 = vpop.f32.mrb[0].mxu0
    %v384 = vadd.f32 0.0, %v383
    %v385 = vpop.f32.mrb[0].mxu0
    %v386 = vpop.f32.mrb[0].mxu0
    %v387 = vadd.f32 0.0, %v386
    %v388 = vpop.f32.mrb[0].mxu0
    %389 = vmatprep.mubr.bf16.mxu0 0
    %390 = vmatmul.mubr.bf16.gmra.mrb[0].mxu0 %v270
    %v391 = vpop.f32.mrb[0].mxu0
    %v392 = vadd.f32 0.0, %v391
    %v393 = vpop.f32.mrb[0].mxu0
    %v394 = vpop.f32.mrb[0].mxu0
    %v395 = vadd.f32 0.0, %v394
    %v396 = vpop.f32.mrb[0].mxu0
    %397 = vmatprep.mubr.bf16.mxu0 0
    %398 = vmatmul.mubr.bf16.gmra.mrb[0].mxu0 %v273
    %v399 = vpop.f32.mrb[0].mxu0
    %v400 = vadd.f32 0.0, %v399
    %v401 = vpop.f32.mrb[0].mxu0
    %v402 = vpop.f32.mrb[0].mxu0
    %v403 = vadd.f32 0.0, %v402
    %v404 = vpop.f32.mrb[0].mxu0
    %405 = vmatprep.mubr.bf16.mxu0 0
    %406 = vmatmul.mubr.bf16.gmra.mrb[0].mxu0 %v276
    %v407 = vpop.f32.mrb[0].mxu0
    %v408 = vadd.f32 0.0, %v407
    %v409 = vpop.f32.mrb[0].mxu0
    %v410 = vpop.f32.mrb[0].mxu0
    %v411 = vadd.f32 0.0, %v410
    %v412 = vpop.f32.mrb[0].mxu0
    %413 = vmatprep.mubr.bf16.mxu0 0
    %414 = vmatmul.mubr.bf16.gmra.mrb[0].mxu0 %v279
    %v415 = vpop.f32.mrb[0].mxu0
    %v416 = vadd.f32 0.0, %v415
    %v417 = vpop.f32.mrb[0].mxu0
    %v418 = vpop.f32.mrb[0].mxu0
    %v419 = vadd.f32 0.0, %v418
    %v420 = vpop.f32.mrb[0].mxu0
    %421 = vmatprep.mubr.bf16.mxu0 0
    %422 = vmatmul.mubr.bf16.gmra.mrb[0].mxu0 %v282
    %v423 = vpop.f32.mrb[0].mxu0
    %v424 = vadd.f32 0.0, %v423
    %v425 = vpop.f32.mrb[0].mxu0
    %v426 = vpop.f32.mrb[0].mxu0
    %v427 = vadd.f32 0.0, %v426
    %v428 = vpop.f32.mrb[0].mxu0
    %429 = vmatprep.mubr.bf16.mxu0 0
    %430 = vmatmul.mubr.bf16.gmra.mrb[0].mxu0 %v285
    %v431 = vpop.f32.mrb[0].mxu0
    %v432 = vadd.f32 0.0, %v431
    %v433 = vpop.f32.mrb[0].mxu0
    %v434 = vpop.f32.mrb[0].mxu0
    %v435 = vadd.f32 0.0, %v434
    %v436 = vpop.f32.mrb[0].mxu0
    %437 = vmatprep.mubr.bf16.mxu0 0
    %438 = vmatmul.mubr.bf16.gmra.mrb[0].mxu0 %v288
    %v439 = vpop.f32.mrb[0].mxu0
    %v440 = vadd.f32 0.0, %v439
    %v441 = vpop.f32.mrb[0].mxu0
    %v442 = vpop.f32.mrb[0].mxu0
    %v443 = vadd.f32 0.0, %v442
    %v444 = vpop.f32.mrb[0].mxu0
    %445 = vmatprep.mubr.bf16.mxu0 0
    %446 = vmatmul.mubr.bf16.gmra.mrb[0].mxu0 %v291
    %v447 = vpop.f32.mrb[0].mxu0
    %v448 = vadd.f32 0.0, %v447
    %v449 = vpop.f32.mrb[0].mxu0
    %v450 = vpop.f32.mrb[0].mxu0
    %v451 = vadd.f32 0.0, %v450
    %v452 = vpop.f32.mrb[0].mxu0
    %453 = vdwg.mxu0
    %v454 = vld [vmem:[%s4] sm:$0x1]
    %v456 = vlaneseq
    %v457 = vshrl.u32 %v456, 7
    %v458 = vsub.s32 0, %v457
    %v459 = vrot.slane %v454, %v458
    %v461 = vmul.f32 %v328, %v459
    %v462 = vmul.f32 %v331, %v459
    %v463 = vmul.f32 %v336, %v459
    %v464 = vmul.f32 %v339, %v459
    %v465 = vmul.f32 %v344, %v459
    %v466 = vmul.f32 %v347, %v459
    %v467 = vmul.f32 %v352, %v459
    %v468 = vmul.f32 %v355, %v459
    %v469 = vmul.f32 %v360, %v459
    %v470 = vmul.f32 %v363, %v459
    %v471 = vmul.f32 %v368, %v459
    %v472 = vmul.f32 %v371, %v459
    %v473 = vmul.f32 %v376, %v459
    %v474 = vmul.f32 %v379, %v459
    %v475 = vmul.f32 %v384, %v459
    %v476 = vmul.f32 %v387, %v459
    %v477 = vmul.f32 %v392, %v459
    %v478 = vmul.f32 %v395, %v459
    %v479 = vmul.f32 %v400, %v459
    %v480 = vmul.f32 %v403, %v459
    %v481 = vmul.f32 %v408, %v459
    %v482 = vmul.f32 %v411, %v459
    %v483 = vmul.f32 %v416, %v459
    %v484 = vmul.f32 %v419, %v459
    %v485 = vmul.f32 %v424, %v459
    %v486 = vmul.f32 %v427, %v459
    %v487 = vmul.f32 %v432, %v459
    %v488 = vmul.f32 %v435, %v459
    %v489 = vmul.f32 %v440, %v459
    %v490 = vmul.f32 %v443, %v459
    %v491 = vmul.f32 %v448, %v459
    %v492 = vmul.f32 %v451, %v459
    %v493 = vld [vmem:[%s5] sm:$0x1]
    %v495 = vlaneseq
    %v496 = vshrl.u32 %v495, 7
    %v497 = vsub.s32 0, %v496
    %v498 = vrot.slane %v493, %v497
    %v500 = vadd.f32 %v461, %v498
    %v501 = vadd.f32 %v462, %v498
    %v502 = vadd.f32 %v463, %v498
    %v503 = vadd.f32 %v464, %v498
    %v504 = vadd.f32 %v465, %v498
    %v505 = vadd.f32 %v466, %v498
    %v506 = vadd.f32 %v467, %v498
    %v507 = vadd.f32 %v468, %v498
    %v508 = vadd.f32 %v469, %v498
    %v509 = vadd.f32 %v470, %v498
    %v510 = vadd.f32 %v471, %v498
    %v511 = vadd.f32 %v472, %v498
    %v512 = vadd.f32 %v473, %v498
    %v513 = vadd.f32 %v474, %v498
    %v514 = vadd.f32 %v475, %v498
    %v515 = vadd.f32 %v476, %v498
    %v516 = vadd.f32 %v477, %v498
    %v517 = vadd.f32 %v478, %v498
    %v518 = vadd.f32 %v479, %v498
    %v519 = vadd.f32 %v480, %v498
    %v520 = vadd.f32 %v481, %v498
    %v521 = vadd.f32 %v482, %v498
    %v522 = vadd.f32 %v483, %v498
    %v523 = vadd.f32 %v484, %v498
    %v524 = vadd.f32 %v485, %v498
    %v525 = vadd.f32 %v486, %v498
    %v526 = vadd.f32 %v487, %v498
    %v527 = vadd.f32 %v488, %v498
    %v528 = vadd.f32 %v489, %v498
    %v529 = vadd.f32 %v490, %v498
    %v530 = vadd.f32 %v491, %v498
    %v531 = vadd.f32 %v492, %v498
    %v532 = vmax.f32 %v500, 0.0
    %v533 = vmax.f32 %v501, 0.0
    %v534 = vmax.f32 %v502, 0.0
    %v535 = vmax.f32 %v503, 0.0
    %v536 = vmax.f32 %v504, 0.0
    %v537 = vmax.f32 %v505, 0.0
    %v538 = vmax.f32 %v506, 0.0
    %v539 = vmax.f32 %v507, 0.0
    %v540 = vmax.f32 %v508, 0.0
    %v541 = vmax.f32 %v509, 0.0
    %v542 = vmax.f32 %v510, 0.0
    %v543 = vmax.f32 %v511, 0.0
    %v544 = vmax.f32 %v512, 0.0
    %v545 = vmax.f32 %v513, 0.0
    %v546 = vmax.f32 %v514, 0.0
    %v547 = vmax.f32 %v515, 0.0
    %v548 = vmax.f32 %v516, 0.0
    %v549 = vmax.f32 %v517, 0.0
    %v550 = vmax.f32 %v518, 0.0
    %v551 = vmax.f32 %v519, 0.0
    %v552 = vmax.f32 %v520, 0.0
    %v553 = vmax.f32 %v521, 0.0
    %v554 = vmax.f32 %v522, 0.0
    %v555 = vmax.f32 %v523, 0.0
    %v556 = vmax.f32 %v524, 0.0
    %v557 = vmax.f32 %v525, 0.0
    %v558 = vmax.f32 %v526, 0.0
    %v559 = vmax.f32 %v527, 0.0
    %v560 = vmax.f32 %v528, 0.0
    %v561 = vmax.f32 %v529, 0.0
    %v562 = vmax.f32 %v530, 0.0
    %v563 = vmax.f32 %v531, 0.0
    %vm564 = vcmask 257024
    %565 = vst.msk [vmem:[#allocation2] sm:$0xf] %vm564, 0
    %vm566 = vcmask 253952
    %567 = vst.msk [vmem:[#allocation2 + $0x4] sm:$0x1] %vm566, 0
    %568 = vst.msk [vmem:[#allocation2 + $0x50] sm:$0xf] %vm564, 0
    %569 = vst.msk [vmem:[#allocation2 + $0x54] sm:$0x1] %vm566, 0
    %570 = vst.msk [vmem:[#allocation2 + $0xa0] sm:$0xf] %vm564, 0
    %571 = vst.msk [vmem:[#allocation2 + $0xa4] sm:$0x1] %vm566, 0
    %572 = vst.msk [vmem:[#allocation2 + $0xf0] sm:$0xf] %vm564, 0
    %573 = vst.msk [vmem:[#allocation2 + $0xf4] sm:$0x1] %vm566, 0
    %s574 = scalar_lea.vmem [#allocation2], 72
    %575 = vst.msk [vmem:[%s574] sm:$0xf] %vm564, 0
    %576 = vst.msk [vmem:[%s574 + $0x4] sm:$0x1] %vm566, 0
    %577 = vst.msk [vmem:[%s574 + $0x50] sm:$0xf] %vm564, 0
    %578 = vst.msk [vmem:[%s574 + $0x54] sm:$0x1] %vm566, 0
    %579 = vst.msk [vmem:[%s574 + $0xa0] sm:$0xf] %vm564, 0
    %580 = vst.msk [vmem:[%s574 + $0xa4] sm:$0x1] %vm566, 0
    %581 = vst.msk [vmem:[%s574 + $0xf0] sm:$0xf] %vm564, 0
    %582 = vst.msk [vmem:[%s574 + $0xf4] sm:$0x1] %vm566, 0
    %s583 = scalar_lea.vmem [#allocation2], 8
    %vm584 = vcmask 253952
    %vm585 = vsmask.f32 256
    %vm586 = vmand %vm584, %vm585
    %v587 = vld [vmem:[%s583] sm:$0x1]
    %v588 = vsel %vm586, 0, %v587
    %589 = vst [vmem:[%s583] sm:$0x1] %v588
    %v590 = vld [vmem:[%s583 + $0x8] sm:$0x1]
    %v591 = vsel %vm586, 0, %v590
    %592 = vst [vmem:[%s583 + $0x8] sm:$0x1] %v591
    %v593 = vld [vmem:[%s583 + $0x10] sm:$0x1]
    %v594 = vsel %vm586, 0, %v593
    %595 = vst [vmem:[%s583 + $0x10] sm:$0x1] %v594
    %v596 = vld [vmem:[%s583 + $0x18] sm:$0x1]
    %v597 = vsel %vm586, 0, %v596
    %598 = vst [vmem:[%s583 + $0x18] sm:$0x1] %v597
    %v599 = vld [vmem:[%s583 + $0x20] sm:$0x1]
    %v600 = vsel %vm586, 0, %v599
    %601 = vst [vmem:[%s583 + $0x20] sm:$0x1] %v600
    %v602 = vld [vmem:[%s583 + $0x28] sm:$0x1]
    %v603 = vsel %vm586, 0, %v602
    %604 = vst [vmem:[%s583 + $0x28] sm:$0x1] %v603
    %v605 = vld [vmem:[%s583 + $0x30] sm:$0x1]
    %v606 = vsel %vm586, 0, %v605
    %607 = vst [vmem:[%s583 + $0x30] sm:$0x1] %v606
    %v608 = vld [vmem:[%s583 + $0x38] sm:$0x1]
    %v609 = vsel %vm586, 0, %v608
    %610 = vst [vmem:[%s583 + $0x38] sm:$0x1] %v609
    %v611 = vld [vmem:[%s583 + $0x50] sm:$0x1]
    %v612 = vsel %vm586, 0, %v611
    %613 = vst [vmem:[%s583 + $0x50] sm:$0x1] %v612
    %v614 = vld [vmem:[%s583 + $0x58] sm:$0x1]
    %v615 = vsel %vm586, 0, %v614
    %616 = vst [vmem:[%s583 + $0x58] sm:$0x1] %v615
    %v617 = vld [vmem:[%s583 + $0x60] sm:$0x1]
    %v618 = vsel %vm586, 0, %v617
    %619 = vst [vmem:[%s583 + $0x60] sm:$0x1] %v618
    %v620 = vld [vmem:[%s583 + $0x68] sm:$0x1]
    %v621 = vsel %vm586, 0, %v620
    %622 = vst [vmem:[%s583 + $0x68] sm:$0x1] %v621
    %v623 = vld [vmem:[%s583 + $0x70] sm:$0x1]
    %v624 = vsel %vm586, 0, %v623
    %625 = vst [vmem:[%s583 + $0x70] sm:$0x1] %v624
    %v626 = vld [vmem:[%s583 + $0x78] sm:$0x1]
    %v627 = vsel %vm586, 0, %v626
    %628 = vst [vmem:[%s583 + $0x78] sm:$0x1] %v627
    %v629 = vld [vmem:[%s583 + $0x80] sm:$0x1]
    %v630 = vsel %vm586, 0, %v629
    %631 = vst [vmem:[%s583 + $0x80] sm:$0x1] %v630
    %v632 = vld [vmem:[%s583 + $0x88] sm:$0x1]
    %v633 = vsel %vm586, 0, %v632
    %634 = vst [vmem:[%s583 + $0x88] sm:$0x1] %v633
    %v635 = vld [vmem:[%s583 + $0xa0] sm:$0x1]
    %v636 = vsel %vm586, 0, %v635
    %637 = vst [vmem:[%s583 + $0xa0] sm:$0x1] %v636
    %v638 = vld [vmem:[%s583 + $0xa8] sm:$0x1]
    %v639 = vsel %vm586, 0, %v638
    %640 = vst [vmem:[%s583 + $0xa8] sm:$0x1] %v639
    %v641 = vld [vmem:[%s583 + $0xb0] sm:$0x1]
    %v642 = vsel %vm586, 0, %v641
    %643 = vst [vmem:[%s583 + $0xb0] sm:$0x1] %v642
    %v644 = vld [vmem:[%s583 + $0xb8] sm:$0x1]
    %v645 = vsel %vm586, 0, %v644
    %646 = vst [vmem:[%s583 + $0xb8] sm:$0x1] %v645
    %v647 = vld [vmem:[%s583 + $0xc0] sm:$0x1]
    %v648 = vsel %vm586, 0, %v647
    %649 = vst [vmem:[%s583 + $0xc0] sm:$0x1] %v648
    %v650 = vld [vmem:[%s583 + $0xc8] sm:$0x1]
    %v651 = vsel %vm586, 0, %v650
    %652 = vst [vmem:[%s583 + $0xc8] sm:$0x1] %v651
    %v653 = vld [vmem:[%s583 + $0xd0] sm:$0x1]
    %v654 = vsel %vm586, 0, %v653
    %655 = vst [vmem:[%s583 + $0xd0] sm:$0x1] %v654
    %v656 = vld [vmem:[%s583 + $0xd8] sm:$0x1]
    %v657 = vsel %vm586, 0, %v656
    %658 = vst [vmem:[%s583 + $0xd8] sm:$0x1] %v657
    %v659 = vld [vmem:[%s583 + $0xf0] sm:$0x1]
    %v660 = vsel %vm586, 0, %v659
    %661 = vst [vmem:[%s583 + $0xf0] sm:$0x1] %v660
    %v662 = vld [vmem:[%s583 + $0xf8] sm:$0x1]
    %v663 = vsel %vm586, 0, %v662
    %664 = vst [vmem:[%s583 + $0xf8] sm:$0x1] %v663
    %v665 = vld [vmem:[%s583 + $0x100] sm:$0x1]
    %v666 = vsel %vm586, 0, %v665
    %667 = vst [vmem:[%s583 + $0x100] sm:$0x1] %v666
    %v668 = vld [vmem:[%s583 + $0x108] sm:$0x1]
    %v669 = vsel %vm586, 0, %v668
    %670 = vst [vmem:[%s583 + $0x108] sm:$0x1] %v669
    %v671 = vld [vmem:[%s583 + $0x110] sm:$0x1]
    %v672 = vsel %vm586, 0, %v671
    %673 = vst [vmem:[%s583 + $0x110] sm:$0x1] %v672
    %v674 = vld [vmem:[%s583 + $0x118] sm:$0x1]
    %v675 = vsel %vm586, 0, %v674
    %676 = vst [vmem:[%s583 + $0x118] sm:$0x1] %v675
    %v677 = vld [vmem:[%s583 + $0x120] sm:$0x1]
    %v678 = vsel %vm586, 0, %v677
    %679 = vst [vmem:[%s583 + $0x120] sm:$0x1] %v678
    %v680 = vld [vmem:[%s583 + $0x128] sm:$0x1]
    %v681 = vsel %vm586, 0, %v680
    %682 = vst [vmem:[%s583 + $0x128] sm:$0x1] %v681
    %vm683 = vsmask.f32 7938
    %vm684 = vmand %vm584, %vm683
    %v685 = vld [vmem:[%s583 + $0x4] sm:$0x1]
    %v686 = vsel %vm684, 0, %v685
    %687 = vst [vmem:[%s583 + $0x4] sm:$0x1] %v686
    %v688 = vld [vmem:[%s583 + $0xc] sm:$0x1]
    %v689 = vsel %vm684, 0, %v688
    %690 = vst [vmem:[%s583 + $0xc] sm:$0x1] %v689
    %v691 = vld [vmem:[%s583 + $0x14] sm:$0x1]
    %v692 = vsel %vm684, 0, %v691
    %693 = vst [vmem:[%s583 + $0x14] sm:$0x1] %v692
    %v694 = vld [vmem:[%s583 + $0x1c] sm:$0x1]
    %v695 = vsel %vm684, 0, %v694
    %696 = vst [vmem:[%s583 + $0x1c] sm:$0x1] %v695
    %v697 = vld [vmem:[%s583 + $0x24] sm:$0x1]
    %v698 = vsel %vm684, 0, %v697
    %699 = vst [vmem:[%s583 + $0x24] sm:$0x1] %v698
    %v700 = vld [vmem:[%s583 + $0x2c] sm:$0x1]
    %v701 = vsel %vm684, 0, %v700
    %702 = vst [vmem:[%s583 + $0x2c] sm:$0x1] %v701
    %v703 = vld [vmem:[%s583 + $0x34] sm:$0x1]
    %v704 = vsel %vm684, 0, %v703
    %705 = vst [vmem:[%s583 + $0x34] sm:$0x1] %v704
    %v706 = vld [vmem:[%s583 + $0x3c] sm:$0x1]
    %v707 = vsel %vm684, 0, %v706
    %708 = vst [vmem:[%s583 + $0x3c] sm:$0x1] %v707
    %v709 = vld [vmem:[%s583 + $0x54] sm:$0x1]
    %v710 = vsel %vm684, 0, %v709
    %711 = vst [vmem:[%s583 + $0x54] sm:$0x1] %v710
    %v712 = vld [vmem:[%s583 + $0x5c] sm:$0x1]
    %v713 = vsel %vm684, 0, %v712
    %714 = vst [vmem:[%s583 + $0x5c] sm:$0x1] %v713
    %v715 = vld [vmem:[%s583 + $0x64] sm:$0x1]
    %v716 = vsel %vm684, 0, %v715
    %717 = vst [vmem:[%s583 + $0x64] sm:$0x1] %v716
    %v718 = vld [vmem:[%s583 + $0x6c] sm:$0x1]
    %v719 = vsel %vm684, 0, %v718
    %720 = vst [vmem:[%s583 + $0x6c] sm:$0x1] %v719
    %v721 = vld [vmem:[%s583 + $0x74] sm:$0x1]
    %v722 = vsel %vm684, 0, %v721
    %723 = vst [vmem:[%s583 + $0x74] sm:$0x1] %v722
    %v724 = vld [vmem:[%s583 + $0x7c] sm:$0x1]
    %v725 = vsel %vm684, 0, %v724
    %726 = vst [vmem:[%s583 + $0x7c] sm:$0x1] %v725
    %v727 = vld [vmem:[%s583 + $0x84] sm:$0x1]
    %v728 = vsel %vm684, 0, %v727
    %729 = vst [vmem:[%s583 + $0x84] sm:$0x1] %v728
    %v730 = vld [vmem:[%s583 + $0x8c] sm:$0x1]
    %v731 = vsel %vm684, 0, %v730
    %732 = vst [vmem:[%s583 + $0x8c] sm:$0x1] %v731
    %v733 = vld [vmem:[%s583 + $0xa4] sm:$0x1]
    %v734 = vsel %vm684, 0, %v733
    %735 = vst [vmem:[%s583 + $0xa4] sm:$0x1] %v734
    %v736 = vld [vmem:[%s583 + $0xac] sm:$0x1]
    %v737 = vsel %vm684, 0, %v736
    %738 = vst [vmem:[%s583 + $0xac] sm:$0x1] %v737
    %v739 = vld [vmem:[%s583 + $0xb4] sm:$0x1]
    %v740 = vsel %vm684, 0, %v739
    %741 = vst [vmem:[%s583 + $0xb4] sm:$0x1] %v740
    %v742 = vld [vmem:[%s583 + $0xbc] sm:$0x1]
    %v743 = vsel %vm684, 0, %v742
    %744 = vst [vmem:[%s583 + $0xbc] sm:$0x1] %v743
    %v745 = vld [vmem:[%s583 + $0xc4] sm:$0x1]
    %v746 = vsel %vm684, 0, %v745
    %747 = vst [vmem:[%s583 + $0xc4] sm:$0x1] %v746
    %v748 = vld [vmem:[%s583 + $0xcc] sm:$0x1]
    %v749 = vsel %vm684, 0, %v748
    %750 = vst [vmem:[%s583 + $0xcc] sm:$0x1] %v749
    %v751 = vld [vmem:[%s583 + $0xd4] sm:$0x1]
    %v752 = vsel %vm684, 0, %v751
    %753 = vst [vmem:[%s583 + $0xd4] sm:$0x1] %v752
    %v754 = vld [vmem:[%s583 + $0xdc] sm:$0x1]
    %v755 = vsel %vm684, 0, %v754
    %756 = vst [vmem:[%s583 + $0xdc] sm:$0x1] %v755
    %v757 = vld [vmem:[%s583 + $0xf4] sm:$0x1]
    %v758 = vsel %vm684, 0, %v757
    %759 = vst [vmem:[%s583 + $0xf4] sm:$0x1] %v758
    %v760 = vld [vmem:[%s583 + $0xfc] sm:$0x1]
    %v761 = vsel %vm684, 0, %v760
    %762 = vst [vmem:[%s583 + $0xfc] sm:$0x1] %v761
    %v763 = vld [vmem:[%s583 + $0x104] sm:$0x1]
    %v764 = vsel %vm684, 0, %v763
    %765 = vst [vmem:[%s583 + $0x104] sm:$0x1] %v764
    %v766 = vld [vmem:[%s583 + $0x10c] sm:$0x1]
    %v767 = vsel %vm684, 0, %v766
    %768 = vst [vmem:[%s583 + $0x10c] sm:$0x1] %v767
    %v769 = vld [vmem:[%s583 + $0x114] sm:$0x1]
    %v770 = vsel %vm684, 0, %v769
    %771 = vst [vmem:[%s583 + $0x114] sm:$0x1] %v770
    %v772 = vld [vmem:[%s583 + $0x11c] sm:$0x1]
    %v773 = vsel %vm684, 0, %v772
    %774 = vst [vmem:[%s583 + $0x11c] sm:$0x1] %v773
    %v775 = vld [vmem:[%s583 + $0x124] sm:$0x1]
    %v776 = vsel %vm684, 0, %v775
    %777 = vst [vmem:[%s583 + $0x124] sm:$0x1] %v776
    %v778 = vld [vmem:[%s583 + $0x12c] sm:$0x1]
    %v779 = vsel %vm684, 0, %v778
    %780 = vst [vmem:[%s583 + $0x12c] sm:$0x1] %v779
    %v781 = vpack.c.bf16 %v532, %v532
    %v782 = vpack.c.bf16 %v533, %v533
    %v783 = vpack.c.bf16 %v534, %v534
    %v784 = vpack.c.bf16 %v535, %v535
    %v785 = vpack.c.bf16 %v536, %v536
    %v786 = vpack.c.bf16 %v537, %v537
    %v787 = vpack.c.bf16 %v538, %v538
    %v788 = vpack.c.bf16 %v539, %v539
    %v789 = vpack.c.bf16 %v540, %v540
    %v790 = vpack.c.bf16 %v541, %v541
    %v791 = vpack.c.bf16 %v542, %v542
    %v792 = vpack.c.bf16 %v543, %v543
    %v793 = vpack.c.bf16 %v544, %v544
    %v794 = vpack.c.bf16 %v545, %v545
    %v795 = vpack.c.bf16 %v546, %v546
    %v796 = vpack.c.bf16 %v547, %v547
    %v797 = vpack.c.bf16 %v548, %v548
    %v798 = vpack.c.bf16 %v549, %v549
    %v799 = vpack.c.bf16 %v550, %v550
    %v800 = vpack.c.bf16 %v551, %v551
    %v801 = vpack.c.bf16 %v552, %v552
    %v802 = vpack.c.bf16 %v553, %v553
    %v803 = vpack.c.bf16 %v554, %v554
    %v804 = vpack.c.bf16 %v555, %v555
    %v805 = vpack.c.bf16 %v556, %v556
    %v806 = vpack.c.bf16 %v557, %v557
    %v807 = vpack.c.bf16 %v558, %v558
    %v808 = vpack.c.bf16 %v559, %v559
    %v809 = vpack.c.bf16 %v560, %v560
    %v810 = vpack.c.bf16 %v561, %v561
    %v811 = vpack.c.bf16 %v562, %v562
    %v812 = vpack.c.bf16 %v563, %v563
    %v845 = vunpack.c.l.b16 %v781
    %v846 = vunpack.c.l.b16 %v782
    %v847 = vunpack.c.l.b16 %v783
    %v848 = vunpack.c.l.b16 %v784
    %v849 = vunpack.c.l.b16 %v785
    %v850 = vunpack.c.l.b16 %v786
    %v851 = vunpack.c.l.b16 %v787
    %v852 = vunpack.c.l.b16 %v788
    %v853 = vunpack.c.l.b16 %v789
    %v854 = vunpack.c.l.b16 %v790
    %v855 = vunpack.c.l.b16 %v791
    %v856 = vunpack.c.l.b16 %v792
    %v857 = vunpack.c.l.b16 %v793
    %v858 = vunpack.c.l.b16 %v794
    %v859 = vunpack.c.l.b16 %v795
    %v860 = vunpack.c.l.b16 %v796
    %v861 = vunpack.c.l.b16 %v797
    %v862 = vunpack.c.l.b16 %v798
    %v863 = vunpack.c.l.b16 %v799
    %v864 = vunpack.c.l.b16 %v800
    %v865 = vunpack.c.l.b16 %v801
    %v866 = vunpack.c.l.b16 %v802
    %v867 = vunpack.c.l.b16 %v803
    %v868 = vunpack.c.l.b16 %v804
    %v869 = vunpack.c.l.b16 %v805
    %v870 = vunpack.c.l.b16 %v806
    %v871 = vunpack.c.l.b16 %v807
    %v872 = vunpack.c.l.b16 %v808
    %v873 = vunpack.c.l.b16 %v809
    %v874 = vunpack.c.l.b16 %v810
    %v875 = vunpack.c.l.b16 %v811
    %v876 = vunpack.c.l.b16 %v812
    %v877 = vpack.c.b16 %v845, %v845
    %v878 = vpack.c.b16 %v846, %v846
    %v879 = vpack.c.b16 %v847, %v847
    %v880 = vpack.c.b16 %v848, %v848
    %v881 = vpack.c.b16 %v849, %v849
    %v882 = vpack.c.b16 %v850, %v850
    %v883 = vpack.c.b16 %v851, %v851
    %v884 = vpack.c.b16 %v852, %v852
    %v885 = vpack.c.b16 %v853, %v853
    %v886 = vpack.c.b16 %v854, %v854
    %v887 = vpack.c.b16 %v855, %v855
    %v888 = vpack.c.b16 %v856, %v856
    %v889 = vpack.c.b16 %v857, %v857
    %v890 = vpack.c.b16 %v858, %v858
    %v891 = vpack.c.b16 %v859, %v859
    %v892 = vpack.c.b16 %v860, %v860
    %v893 = vpack.c.b16 %v861, %v861
    %v894 = vpack.c.b16 %v862, %v862
    %v895 = vpack.c.b16 %v863, %v863
    %v896 = vpack.c.b16 %v864, %v864
    %v897 = vpack.c.b16 %v865, %v865
    %v898 = vpack.c.b16 %v866, %v866
    %v899 = vpack.c.b16 %v867, %v867
    %v900 = vpack.c.b16 %v868, %v868
    %v901 = vpack.c.b16 %v869, %v869
    %v902 = vpack.c.b16 %v870, %v870
    %v903 = vpack.c.b16 %v871, %v871
    %v904 = vpack.c.b16 %v872, %v872
    %v905 = vpack.c.b16 %v873, %v873
    %v906 = vpack.c.b16 %v874, %v874
    %v907 = vpack.c.b16 %v875, %v875
    %v908 = vpack.c.b16 %v876, %v876
    %v910 = vshrl.u32 %v877, 16
    %v912 = vrot.slane %v910, 7
    %v913 = vshll.u32 %v877, 16
    %v915 = vor.u32 %v912, %v913
    %v916 = vrot.slane %v912, 4
    %v918 = vshrl.u32 %v878, 16
    %v920 = vrot.slane %v918, 7
    %v921 = vshll.u32 %v878, 16
    %v923 = vor.u32 %v920, %v921
    %v924 = vrot.slane %v920, 4
    %v926 = vshrl.u32 %v879, 16
    %v928 = vrot.slane %v926, 7
    %v929 = vshll.u32 %v879, 16
    %v931 = vor.u32 %v928, %v929
    %v932 = vrot.slane %v928, 4
    %v934 = vshrl.u32 %v880, 16
    %v936 = vrot.slane %v934, 7
    %v937 = vshll.u32 %v880, 16
    %v939 = vor.u32 %v936, %v937
    %v940 = vrot.slane %v936, 4
    %v942 = vshrl.u32 %v881, 16
    %v944 = vrot.slane %v942, 7
    %v945 = vshll.u32 %v881, 16
    %v947 = vor.u32 %v944, %v945
    %v948 = vrot.slane %v944, 4
    %v950 = vshrl.u32 %v882, 16
    %v952 = vrot.slane %v950, 7
    %v953 = vshll.u32 %v882, 16
    %v955 = vor.u32 %v952, %v953
    %v956 = vrot.slane %v952, 4
    %v958 = vshrl.u32 %v883, 16
    %v960 = vrot.slane %v958, 7
    %v961 = vshll.u32 %v883, 16
    %v963 = vor.u32 %v960, %v961
    %v964 = vrot.slane %v960, 4
    %v966 = vshrl.u32 %v884, 16
    %v968 = vrot.slane %v966, 7
    %v969 = vshll.u32 %v884, 16
    %v971 = vor.u32 %v968, %v969
    %v972 = vrot.slane %v968, 4
    %v974 = vshrl.u32 %v885, 16
    %v976 = vrot.slane %v974, 7
    %v977 = vshll.u32 %v885, 16
    %v979 = vor.u32 %v976, %v977
    %v980 = vrot.slane %v976, 4
    %v982 = vshrl.u32 %v886, 16
    %v984 = vrot.slane %v982, 7
    %v985 = vshll.u32 %v886, 16
    %v987 = vor.u32 %v984, %v985
    %v988 = vrot.slane %v984, 4
    %v990 = vshrl.u32 %v887, 16
    %v992 = vrot.slane %v990, 7
    %v993 = vshll.u32 %v887, 16
    %v995 = vor.u32 %v992, %v993
    %v996 = vrot.slane %v992, 4
    %v998 = vshrl.u32 %v888, 16
    %v1000 = vrot.slane %v998, 7
    %v1001 = vshll.u32 %v888, 16
    %v1003 = vor.u32 %v1000, %v1001
    %v1004 = vrot.slane %v1000, 4
    %v1006 = vshrl.u32 %v889, 16
    %v1008 = vrot.slane %v1006, 7
    %v1009 = vshll.u32 %v889, 16
    %v1011 = vor.u32 %v1008, %v1009
    %v1012 = vrot.slane %v1008, 4
    %v1014 = vshrl.u32 %v890, 16
    %v1016 = vrot.slane %v1014, 7
    %v1017 = vshll.u32 %v890, 16
    %v1019 = vor.u32 %v1016, %v1017
    %v1020 = vrot.slane %v1016, 4
    %v1022 = vshrl.u32 %v891, 16
    %v1024 = vrot.slane %v1022, 7
    %v1025 = vshll.u32 %v891, 16
    %v1027 = vor.u32 %v1024, %v1025
    %v1028 = vrot.slane %v1024, 4
    %v1030 = vshrl.u32 %v892, 16
    %v1032 = vrot.slane %v1030, 7
    %v1033 = vshll.u32 %v892, 16
    %v1035 = vor.u32 %v1032, %v1033
    %v1036 = vrot.slane %v1032, 4
    %v1038 = vshrl.u32 %v893, 16
    %v1040 = vrot.slane %v1038, 7
    %v1041 = vshll.u32 %v893, 16
    %v1043 = vor.u32 %v1040, %v1041
    %v1044 = vrot.slane %v1040, 4
    %v1046 = vshrl.u32 %v894, 16
    %v1048 = vrot.slane %v1046, 7
    %v1049 = vshll.u32 %v894, 16
    %v1051 = vor.u32 %v1048, %v1049
    %v1052 = vrot.slane %v1048, 4
    %v1054 = vshrl.u32 %v895, 16
    %v1056 = vrot.slane %v1054, 7
    %v1057 = vshll.u32 %v895, 16
    %v1059 = vor.u32 %v1056, %v1057
    %v1060 = vrot.slane %v1056, 4
    %v1062 = vshrl.u32 %v896, 16
    %v1064 = vrot.slane %v1062, 7
    %v1065 = vshll.u32 %v896, 16
    %v1067 = vor.u32 %v1064, %v1065
    %v1068 = vrot.slane %v1064, 4
    %v1070 = vshrl.u32 %v897, 16
    %v1072 = vrot.slane %v1070, 7
    %v1073 = vshll.u32 %v897, 16
    %v1075 = vor.u32 %v1072, %v1073
    %v1076 = vrot.slane %v1072, 4
    %v1078 = vshrl.u32 %v898, 16
    %v1080 = vrot.slane %v1078, 7
    %v1081 = vshll.u32 %v898, 16
    %v1083 = vor.u32 %v1080, %v1081
    %v1084 = vrot.slane %v1080, 4
    %v1086 = vshrl.u32 %v899, 16
    %v1088 = vrot.slane %v1086, 7
    %v1089 = vshll.u32 %v899, 16
    %v1091 = vor.u32 %v1088, %v1089
    %v1092 = vrot.slane %v1088, 4
    %v1094 = vshrl.u32 %v900, 16
    %v1096 = vrot.slane %v1094, 7
    %v1097 = vshll.u32 %v900, 16
    %v1099 = vor.u32 %v1096, %v1097
    %v1100 = vrot.slane %v1096, 4
    %v1102 = vshrl.u32 %v901, 16
    %v1104 = vrot.slane %v1102, 7
    %v1105 = vshll.u32 %v901, 16
    %v1107 = vor.u32 %v1104, %v1105
    %v1108 = vrot.slane %v1104, 4
    %v1110 = vshrl.u32 %v902, 16
    %v1112 = vrot.slane %v1110, 7
    %v1113 = vshll.u32 %v902, 16
    %v1115 = vor.u32 %v1112, %v1113
    %v1116 = vrot.slane %v1112, 4
    %v1118 = vshrl.u32 %v903, 16
    %v1120 = vrot.slane %v1118, 7
    %v1121 = vshll.u32 %v903, 16
    %v1123 = vor.u32 %v1120, %v1121
    %v1124 = vrot.slane %v1120, 4
    %v1126 = vshrl.u32 %v904, 16
    %v1128 = vrot.slane %v1126, 7
    %v1129 = vshll.u32 %v904, 16
    %v1131 = vor.u32 %v1128, %v1129
    %v1132 = vrot.slane %v1128, 4
    %v1134 = vshrl.u32 %v905, 16
    %v1136 = vrot.slane %v1134, 7
    %v1137 = vshll.u32 %v905, 16
    %v1139 = vor.u32 %v1136, %v1137
    %v1140 = vrot.slane %v1136, 4
    %v1142 = vshrl.u32 %v906, 16
    %v1144 = vrot.slane %v1142, 7
    %v1145 = vshll.u32 %v906, 16
    %v1147 = vor.u32 %v1144, %v1145
    %v1148 = vrot.slane %v1144, 4
    %v1150 = vshrl.u32 %v907, 16
    %v1152 = vrot.slane %v1150, 7
    %v1153 = vshll.u32 %v907, 16
    %v1155 = vor.u32 %v1152, %v1153
    %v1156 = vrot.slane %v1152, 4
    %v1158 = vshrl.u32 %v908, 16
    %v1160 = vrot.slane %v1158, 7
    %v1161 = vshll.u32 %v908, 16
    %v1163 = vor.u32 %v1160, %v1161
    %v1164 = vrot.slane %v1160, 4
    %vm1229 = vcmask 257024
    %vm1230 = vmand %vm1229, %vm683
    %v1231 = vld [vmem:[%s583] sm:$0xf]
    %v1232 = vsel %vm1230, %v915, %v1231
    %1233 = vst [vmem:[%s583] sm:$0xf] %v1232
    %v1234 = vld [vmem:[%s583 + $0x4] sm:$0x1]
    %v1235 = vsel %vm586, %v916, %v1234
    %1236 = vst [vmem:[%s583 + $0x4] sm:$0x1] %v1235
    %v1237 = vld [vmem:[%s583 + $0x8] sm:$0xf]
    %v1238 = vsel %vm1230, %v923, %v1237
    %1239 = vst [vmem:[%s583 + $0x8] sm:$0xf] %v1238
    %v1240 = vld [vmem:[%s583 + $0xc] sm:$0x1]
    %v1241 = vsel %vm586, %v924, %v1240
    %1242 = vst [vmem:[%s583 + $0xc] sm:$0x1] %v1241
    %v1243 = vld [vmem:[%s583 + $0x10] sm:$0xf]
    %v1244 = vsel %vm1230, %v931, %v1243
    %1245 = vst [vmem:[%s583 + $0x10] sm:$0xf] %v1244
    %v1246 = vld [vmem:[%s583 + $0x14] sm:$0x1]
    %v1247 = vsel %vm586, %v932, %v1246
    %1248 = vst [vmem:[%s583 + $0x14] sm:$0x1] %v1247
    %v1249 = vld [vmem:[%s583 + $0x18] sm:$0xf]
    %v1250 = vsel %vm1230, %v939, %v1249
    %1251 = vst [vmem:[%s583 + $0x18] sm:$0xf] %v1250
    %v1252 = vld [vmem:[%s583 + $0x1c] sm:$0x1]
    %v1253 = vsel %vm586, %v940, %v1252
    %1254 = vst [vmem:[%s583 + $0x1c] sm:$0x1] %v1253
    %v1255 = vld [vmem:[%s583 + $0x20] sm:$0xf]
    %v1256 = vsel %vm1230, %v947, %v1255
    %1257 = vst [vmem:[%s583 + $0x20] sm:$0xf] %v1256
    %v1258 = vld [vmem:[%s583 + $0x24] sm:$0x1]
    %v1259 = vsel %vm586, %v948, %v1258
    %1260 = vst [vmem:[%s583 + $0x24] sm:$0x1] %v1259
    %v1261 = vld [vmem:[%s583 + $0x28] sm:$0xf]
    %v1262 = vsel %vm1230, %v955, %v1261
    %1263 = vst [vmem:[%s583 + $0x28] sm:$0xf] %v1262
    %v1264 = vld [vmem:[%s583 + $0x2c] sm:$0x1]
    %v1265 = vsel %vm586, %v956, %v1264
    %1266 = vst [vmem:[%s583 + $0x2c] sm:$0x1] %v1265
    %v1267 = vld [vmem:[%s583 + $0x30] sm:$0xf]
    %v1268 = vsel %vm1230, %v963, %v1267
    %1269 = vst [vmem:[%s583 + $0x30] sm:$0xf] %v1268
    %v1270 = vld [vmem:[%s583 + $0x34] sm:$0x1]
    %v1271 = vsel %vm586, %v964, %v1270
    %1272 = vst [vmem:[%s583 + $0x34] sm:$0x1] %v1271
    %v1273 = vld [vmem:[%s583 + $0x38] sm:$0xf]
    %v1274 = vsel %vm1230, %v971, %v1273
    %1275 = vst [vmem:[%s583 + $0x38] sm:$0xf] %v1274
    %v1276 = vld [vmem:[%s583 + $0x3c] sm:$0x1]
    %v1277 = vsel %vm586, %v972, %v1276
    %1278 = vst [vmem:[%s583 + $0x3c] sm:$0x1] %v1277
    %v1279 = vld [vmem:[%s583 + $0x50] sm:$0xf]
    %v1280 = vsel %vm1230, %v979, %v1279
    %1281 = vst [vmem:[%s583 + $0x50] sm:$0xf] %v1280
    %v1282 = vld [vmem:[%s583 + $0x54] sm:$0x1]
    %v1283 = vsel %vm586, %v980, %v1282
    %1284 = vst [vmem:[%s583 + $0x54] sm:$0x1] %v1283
    %v1285 = vld [vmem:[%s583 + $0x58] sm:$0xf]
    %v1286 = vsel %vm1230, %v987, %v1285
    %1287 = vst [vmem:[%s583 + $0x58] sm:$0xf] %v1286
    %v1288 = vld [vmem:[%s583 + $0x5c] sm:$0x1]
    %v1289 = vsel %vm586, %v988, %v1288
    %1290 = vst [vmem:[%s583 + $0x5c] sm:$0x1] %v1289
    %v1291 = vld [vmem:[%s583 + $0x60] sm:$0xf]
    %v1292 = vsel %vm1230, %v995, %v1291
    %1293 = vst [vmem:[%s583 + $0x60] sm:$0xf] %v1292
    %v1294 = vld [vmem:[%s583 + $0x64] sm:$0x1]
    %v1295 = vsel %vm586, %v996, %v1294
    %1296 = vst [vmem:[%s583 + $0x64] sm:$0x1] %v1295
    %v1297 = vld [vmem:[%s583 + $0x68] sm:$0xf]
    %v1298 = vsel %vm1230, %v1003, %v1297
    %1299 = vst [vmem:[%s583 + $0x68] sm:$0xf] %v1298
    %v1300 = vld [vmem:[%s583 + $0x6c] sm:$0x1]
    %v1301 = vsel %vm586, %v1004, %v1300
    %1302 = vst [vmem:[%s583 + $0x6c] sm:$0x1] %v1301
    %v1303 = vld [vmem:[%s583 + $0x70] sm:$0xf]
    %v1304 = vsel %vm1230, %v1011, %v1303
    %1305 = vst [vmem:[%s583 + $0x70] sm:$0xf] %v1304
    %v1306 = vld [vmem:[%s583 + $0x74] sm:$0x1]
    %v1307 = vsel %vm586, %v1012, %v1306
    %1308 = vst [vmem:[%s583 + $0x74] sm:$0x1] %v1307
    %v1309 = vld [vmem:[%s583 + $0x78] sm:$0xf]
    %v1310 = vsel %vm1230, %v1019, %v1309
    %1311 = vst [vmem:[%s583 + $0x78] sm:$0xf] %v1310
    %v1312 = vld [vmem:[%s583 + $0x7c] sm:$0x1]
    %v1313 = vsel %vm586, %v1020, %v1312
    %1314 = vst [vmem:[%s583 + $0x7c] sm:$0x1] %v1313
    %v1315 = vld [vmem:[%s583 + $0x80] sm:$0xf]
    %v1316 = vsel %vm1230, %v1027, %v1315
    %1317 = vst [vmem:[%s583 + $0x80] sm:$0xf] %v1316
    %v1318 = vld [vmem:[%s583 + $0x84] sm:$0x1]
    %v1319 = vsel %vm586, %v1028, %v1318
    %1320 = vst [vmem:[%s583 + $0x84] sm:$0x1] %v1319
    %v1321 = vld [vmem:[%s583 + $0x88] sm:$0xf]
    %v1322 = vsel %vm1230, %v1035, %v1321
    %1323 = vst [vmem:[%s583 + $0x88] sm:$0xf] %v1322
    %v1324 = vld [vmem:[%s583 + $0x8c] sm:$0x1]
    %v1325 = vsel %vm586, %v1036, %v1324
    %1326 = vst [vmem:[%s583 + $0x8c] sm:$0x1] %v1325
    %v1327 = vld [vmem:[%s583 + $0xa0] sm:$0xf]
    %v1328 = vsel %vm1230, %v1043, %v1327
    %1329 = vst [vmem:[%s583 + $0xa0] sm:$0xf] %v1328
    %v1330 = vld [vmem:[%s583 + $0xa4] sm:$0x1]
    %v1331 = vsel %vm586, %v1044, %v1330
    %1332 = vst [vmem:[%s583 + $0xa4] sm:$0x1] %v1331
    %v1333 = vld [vmem:[%s583 + $0xa8] sm:$0xf]
    %v1334 = vsel %vm1230, %v1051, %v1333
    %1335 = vst [vmem:[%s583 + $0xa8] sm:$0xf] %v1334
    %v1336 = vld [vmem:[%s583 + $0xac] sm:$0x1]
    %v1337 = vsel %vm586, %v1052, %v1336
    %1338 = vst [vmem:[%s583 + $0xac] sm:$0x1] %v1337
    %v1339 = vld [vmem:[%s583 + $0xb0] sm:$0xf]
    %v1340 = vsel %vm1230, %v1059, %v1339
    %1341 = vst [vmem:[%s583 + $0xb0] sm:$0xf] %v1340
    %v1342 = vld [vmem:[%s583 + $0xb4] sm:$0x1]
    %v1343 = vsel %vm586, %v1060, %v1342
    %1344 = vst [vmem:[%s583 + $0xb4] sm:$0x1] %v1343
    %v1345 = vld [vmem:[%s583 + $0xb8] sm:$0xf]
    %v1346 = vsel %vm1230, %v1067, %v1345
    %1347 = vst [vmem:[%s583 + $0xb8] sm:$0xf] %v1346
    %v1348 = vld [vmem:[%s583 + $0xbc] sm:$0x1]
    %v1349 = vsel %vm586, %v1068, %v1348
    %1350 = vst [vmem:[%s583 + $0xbc] sm:$0x1] %v1349
    %v1351 = vld [vmem:[%s583 + $0xc0] sm:$0xf]
    %v1352 = vsel %vm1230, %v1075, %v1351
    %1353 = vst [vmem:[%s583 + $0xc0] sm:$0xf] %v1352
    %v1354 = vld [vmem:[%s583 + $0xc4] sm:$0x1]
    %v1355 = vsel %vm586, %v1076, %v1354
    %1356 = vst [vmem:[%s583 + $0xc4] sm:$0x1] %v1355
    %v1357 = vld [vmem:[%s583 + $0xc8] sm:$0xf]
    %v1358 = vsel %vm1230, %v1083, %v1357
    %1359 = vst [vmem:[%s583 + $0xc8] sm:$0xf] %v1358
    %v1360 = vld [vmem:[%s583 + $0xcc] sm:$0x1]
    %v1361 = vsel %vm586, %v1084, %v1360
    %1362 = vst [vmem:[%s583 + $0xcc] sm:$0x1] %v1361
    %v1363 = vld [vmem:[%s583 + $0xd0] sm:$0xf]
    %v1364 = vsel %vm1230, %v1091, %v1363
    %1365 = vst [vmem:[%s583 + $0xd0] sm:$0xf] %v1364
    %v1366 = vld [vmem:[%s583 + $0xd4] sm:$0x1]
    %v1367 = vsel %vm586, %v1092, %v1366
    %1368 = vst [vmem:[%s583 + $0xd4] sm:$0x1] %v1367
    %v1369 = vld [vmem:[%s583 + $0xd8] sm:$0xf]
    %v1370 = vsel %vm1230, %v1099, %v1369
    %1371 = vst [vmem:[%s583 + $0xd8] sm:$0xf] %v1370
    %v1372 = vld [vmem:[%s583 + $0xdc] sm:$0x1]
    %v1373 = vsel %vm586, %v1100, %v1372
    %1374 = vst [vmem:[%s583 + $0xdc] sm:$0x1] %v1373
    %v1375 = vld [vmem:[%s583 + $0xf0] sm:$0xf]
    %v1376 = vsel %vm1230, %v1107, %v1375
    %1377 = vst [vmem:[%s583 + $0xf0] sm:$0xf] %v1376
    %v1378 = vld [vmem:[%s583 + $0xf4] sm:$0x1]
    %v1379 = vsel %vm586, %v1108, %v1378
    %1380 = vst [vmem:[%s583 + $0xf4] sm:$0x1] %v1379
    %v1381 = vld [vmem:[%s583 + $0xf8] sm:$0xf]
    %v1382 = vsel %vm1230, %v1115, %v1381
    %1383 = vst [vmem:[%s583 + $0xf8] sm:$0xf] %v1382
    %v1384 = vld [vmem:[%s583 + $0xfc] sm:$0x1]
    %v1385 = vsel %vm586, %v1116, %v1384
    %1386 = vst [vmem:[%s583 + $0xfc] sm:$0x1] %v1385
    %v1387 = vld [vmem:[%s583 + $0x100] sm:$0xf]
    %v1388 = vsel %vm1230, %v1123, %v1387
    %1389 = vst [vmem:[%s583 + $0x100] sm:$0xf] %v1388
    %v1390 = vld [vmem:[%s583 + $0x104] sm:$0x1]
    %v1391 = vsel %vm586, %v1124, %v1390
    %1392 = vst [vmem:[%s583 + $0x104] sm:$0x1] %v1391
    %v1393 = vld [vmem:[%s583 + $0x108] sm:$0xf]
    %v1394 = vsel %vm1230, %v1131, %v1393
    %1395 = vst [vmem:[%s583 + $0x108] sm:$0xf] %v1394
    %v1396 = vld [vmem:[%s583 + $0x10c] sm:$0x1]
    %v1397 = vsel %vm586, %v1132, %v1396
    %1398 = vst [vmem:[%s583 + $0x10c] sm:$0x1] %v1397
    %v1399 = vld [vmem:[%s583 + $0x110] sm:$0xf]
    %v1400 = vsel %vm1230, %v1139, %v1399
    %1401 = vst [vmem:[%s583 + $0x110] sm:$0xf] %v1400
    %v1402 = vld [vmem:[%s583 + $0x114] sm:$0x1]
    %v1403 = vsel %vm586, %v1140, %v1402
    %1404 = vst [vmem:[%s583 + $0x114] sm:$0x1] %v1403
    %v1405 = vld [vmem:[%s583 + $0x118] sm:$0xf]
    %v1406 = vsel %vm1230, %v1147, %v1405
    %1407 = vst [vmem:[%s583 + $0x118] sm:$0xf] %v1406
    %v1408 = vld [vmem:[%s583 + $0x11c] sm:$0x1]
    %v1409 = vsel %vm586, %v1148, %v1408
    %1410 = vst [vmem:[%s583 + $0x11c] sm:$0x1] %v1409
    %v1411 = vld [vmem:[%s583 + $0x120] sm:$0xf]
    %v1412 = vsel %vm1230, %v1155, %v1411
    %1413 = vst [vmem:[%s583 + $0x120] sm:$0xf] %v1412
    %v1414 = vld [vmem:[%s583 + $0x124] sm:$0x1]
    %v1415 = vsel %vm586, %v1156, %v1414
    %1416 = vst [vmem:[%s583 + $0x124] sm:$0x1] %v1415
    %v1417 = vld [vmem:[%s583 + $0x128] sm:$0xf]
    %v1418 = vsel %vm1230, %v1163, %v1417
    %1419 = vst [vmem:[%s583 + $0x128] sm:$0xf] %v1418
    %v1420 = vld [vmem:[%s583 + $0x12c] sm:$0x1]
    %v1421 = vsel %vm586, %v1164, %v1420
    %1422 = vst [vmem:[%s583 + $0x12c] sm:$0x1] %v1421
    %v1423 = vld [vmem:[#allocation2] sm:$0xf]
    %v1424 = vld [vmem:[#allocation2 + $0x8] sm:$0xf]
    %v1425 = vld [vmem:[#allocation2 + $0x10] sm:$0xf]
    %v1426 = vld [vmem:[#allocation2 + $0x18] sm:$0xf]
    %v1427 = vld [vmem:[#allocation2 + $0x20] sm:$0xf]
    %v1428 = vld [vmem:[#allocation2 + $0x28] sm:$0xf]
    %v1429 = vld [vmem:[#allocation2 + $0x30] sm:$0xf]
    %v1430 = vld [vmem:[#allocation2 + $0x38] sm:$0xf]
    %v1431 = vld [vmem:[#allocation2 + $0x50] sm:$0xf]
    %v1432 = vld [vmem:[#allocation2 + $0x58] sm:$0xf]
    %v1433 = vld [vmem:[#allocation2 + $0x60] sm:$0xf]
    %v1434 = vld [vmem:[#allocation2 + $0x68] sm:$0xf]
    %v1435 = vld [vmem:[#allocation2 + $0x70] sm:$0xf]
    %v1436 = vld [vmem:[#allocation2 + $0x78] sm:$0xf]
    %v1437 = vld [vmem:[#allocation2 + $0x80] sm:$0xf]
    %v1438 = vld [vmem:[#allocation2 + $0x88] sm:$0xf]
    %v1439 = vld [vmem:[#allocation2 + $0xa0] sm:$0xf]
    %v1440 = vld [vmem:[#allocation2 + $0xa8] sm:$0xf]
    %v1441 = vld [vmem:[#allocation2 + $0xb0] sm:$0xf]
    %v1442 = vld [vmem:[#allocation2 + $0xb8] sm:$0xf]
    %v1443 = vld [vmem:[#allocation2 + $0xc0] sm:$0xf]
    %v1444 = vld [vmem:[#allocation2 + $0xc8] sm:$0xf]
    %v1445 = vld [vmem:[#allocation2 + $0xd0] sm:$0xf]
    %v1446 = vld [vmem:[#allocation2 + $0xd8] sm:$0xf]
    %v1447 = vld [vmem:[#allocation2 + $0xf0] sm:$0xf]
    %v1448 = vld [vmem:[#allocation2 + $0xf8] sm:$0xf]
    %v1449 = vld [vmem:[#allocation2 + $0x100] sm:$0xf]
    %v1450 = vld [vmem:[#allocation2 + $0x108] sm:$0xf]
    %v1451 = vld [vmem:[#allocation2 + $0x110] sm:$0xf]
    %v1452 = vld [vmem:[#allocation2 + $0x118] sm:$0xf]
    %v1453 = vld [vmem:[#allocation2 + $0x120] sm:$0xf]
    %v1454 = vld [vmem:[#allocation2 + $0x128] sm:$0xf]
    %v1487 = vunpack.c.l.b16 %v1423
    %v1488 = vunpack.c.l.b16 %v1424
    %v1489 = vunpack.c.l.b16 %v1425
    %v1490 = vunpack.c.l.b16 %v1426
    %v1491 = vunpack.c.l.b16 %v1427
    %v1492 = vunpack.c.l.b16 %v1428
    %v1493 = vunpack.c.l.b16 %v1429
    %v1494 = vunpack.c.l.b16 %v1430
    %v1495 = vunpack.c.l.b16 %v1431
    %v1496 = vunpack.c.l.b16 %v1432
    %v1497 = vunpack.c.l.b16 %v1433
    %v1498 = vunpack.c.l.b16 %v1434
    %v1499 = vunpack.c.l.b16 %v1435
    %v1500 = vunpack.c.l.b16 %v1436
    %v1501 = vunpack.c.l.b16 %v1437
    %v1502 = vunpack.c.l.b16 %v1438
    %v1503 = vunpack.c.l.b16 %v1439
    %v1504 = vunpack.c.l.b16 %v1440
    %v1505 = vunpack.c.l.b16 %v1441
    %v1506 = vunpack.c.l.b16 %v1442
    %v1507 = vunpack.c.l.b16 %v1443
    %v1508 = vunpack.c.l.b16 %v1444
    %v1509 = vunpack.c.l.b16 %v1445
    %v1510 = vunpack.c.l.b16 %v1446
    %v1511 = vunpack.c.l.b16 %v1447
    %v1512 = vunpack.c.l.b16 %v1448
    %v1513 = vunpack.c.l.b16 %v1449
    %v1514 = vunpack.c.l.b16 %v1450
    %v1515 = vunpack.c.l.b16 %v1451
    %v1516 = vunpack.c.l.b16 %v1452
    %v1517 = vunpack.c.l.b16 %v1453
    %v1518 = vunpack.c.l.b16 %v1454
    %v1519 = vpack.c.b16 %v1488, %v1487
    %v1520 = vpack.c.b16 %v1490, %v1489
    %v1521 = vpack.c.b16 %v1492, %v1491
    %v1522 = vpack.c.b16 %v1494, %v1493
    %v1523 = vpack.c.b16 %v1496, %v1495
    %v1524 = vpack.c.b16 %v1498, %v1497
    %v1525 = vpack.c.b16 %v1500, %v1499
    %v1526 = vpack.c.b16 %v1502, %v1501
    %v1527 = vpack.c.b16 %v1504, %v1503
    %v1528 = vpack.c.b16 %v1506, %v1505
    %v1529 = vpack.c.b16 %v1508, %v1507
    %v1530 = vpack.c.b16 %v1510, %v1509
    %v1531 = vpack.c.b16 %v1512, %v1511
    %v1532 = vpack.c.b16 %v1514, %v1513
    %v1533 = vpack.c.b16 %v1516, %v1515
    %v1534 = vpack.c.b16 %v1518, %v1517
    %vm1551 = vcmask 261120
    %1552 = vst.msk [vmem:[#allocation3] sm:$0xff] %vm1551, %v1519
    %1553 = vst.msk [vmem:[#allocation3 + $0x18] sm:$0xff] %vm1551, %v1520
    %1554 = vst.msk [vmem:[#allocation3 + $0x30] sm:$0xff] %vm1551, %v1521
    %1555 = vst.msk [vmem:[#allocation3 + $0x48] sm:$0xff] %vm1551, %v1522
    %1556 = vst.msk [vmem:[#allocation3 + $0x60] sm:$0xff] %vm1551, %v1523
    %1557 = vst.msk [vmem:[#allocation3 + $0x78] sm:$0xff] %vm1551, %v1524
    %1558 = vst.msk [vmem:[#allocation3 + $0x90] sm:$0xff] %vm1551, %v1525
    %1559 = vst.msk [vmem:[#allocation3 + $0xa8] sm:$0xff] %vm1551, %v1526
    %1560 = vst.msk [vmem:[#allocation3 + $0xc0] sm:$0xff] %vm1551, %v1527
    %1561 = vst.msk [vmem:[#allocation3 + $0xd8] sm:$0xff] %vm1551, %v1528
    %1562 = vst.msk [vmem:[#allocation3 + $0xf0] sm:$0xff] %vm1551, %v1529
    %1563 = vst.msk [vmem:[#allocation3 + $0x108] sm:$0xff] %vm1551, %v1530
    %1564 = vst.msk [vmem:[#allocation3 + $0x120] sm:$0xff] %vm1551, %v1531
    %1565 = vst.msk [vmem:[#allocation3 + $0x138] sm:$0xff] %vm1551, %v1532
    %1566 = vst.msk [vmem:[#allocation3 + $0x150] sm:$0xff] %vm1551, %v1533
    %1567 = vst.msk [vmem:[#allocation3 + $0x168] sm:$0xff] %vm1551, %v1534
    %v1568 = vld [vmem:[#allocation2] sm:$0xf]
    %v1569 = vld [vmem:[#allocation2 + $0x4] sm:$0x1]
    %v1570 = vld [vmem:[#allocation2 + $0x8] sm:$0xf]
    %v1571 = vld [vmem:[#allocation2 + $0xc] sm:$0x1]
    %v1572 = vld [vmem:[#allocation2 + $0x10] sm:$0xf]
    %v1573 = vld [vmem:[#allocation2 + $0x14] sm:$0x1]
    %v1574 = vld [vmem:[#allocation2 + $0x18] sm:$0xf]
    %v1575 = vld [vmem:[#allocation2 + $0x1c] sm:$0x1]
    %v1576 = vld [vmem:[#allocation2 + $0x20] sm:$0xf]
    %v1577 = vld [vmem:[#allocation2 + $0x24] sm:$0x1]
    %v1578 = vld [vmem:[#allocation2 + $0x28] sm:$0xf]
    %v1579 = vld [vmem:[#allocation2 + $0x2c] sm:$0x1]
    %v1580 = vld [vmem:[#allocation2 + $0x30] sm:$0xf]
    %v1581 = vld [vmem:[#allocation2 + $0x34] sm:$0x1]
    %v1582 = vld [vmem:[#allocation2 + $0x38] sm:$0xf]
    %v1583 = vld [vmem:[#allocation2 + $0x3c] sm:$0x1]
    %v1584 = vld [vmem:[#allocation2 + $0x50] sm:$0xf]
    %v1585 = vld [vmem:[#allocation2 + $0x54] sm:$0x1]
    %v1586 = vld [vmem:[#allocation2 + $0x58] sm:$0xf]
    %v1587 = vld [vmem:[#allocation2 + $0x5c] sm:$0x1]
    %v1588 = vld [vmem:[#allocation2 + $0x60] sm:$0xf]
    %v1589 = vld [vmem:[#allocation2 + $0x64] sm:$0x1]
    %v1590 = vld [vmem:[#allocation2 + $0x68] sm:$0xf]
    %v1591 = vld [vmem:[#allocation2 + $0x6c] sm:$0x1]
    %v1592 = vld [vmem:[#allocation2 + $0x70] sm:$0xf]
    %v1593 = vld [vmem:[#allocation2 + $0x74] sm:$0x1]
    %v1594 = vld [vmem:[#allocation2 + $0x78] sm:$0xf]
    %v1595 = vld [vmem:[#allocation2 + $0x7c] sm:$0x1]
    %v1596 = vld [vmem:[#allocation2 + $0x80] sm:$0xf]
    %v1597 = vld [vmem:[#allocation2 + $0x84] sm:$0x1]
    %v1598 = vld [vmem:[#allocation2 + $0x88] sm:$0xf]
    %v1599 = vld [vmem:[#allocation2 + $0x8c] sm:$0x1]
    %v1600 = vld [vmem:[#allocation2 + $0xa0] sm:$0xf]
    %v1601 = vld [vmem:[#allocation2 + $0xa4] sm:$0x1]
    %v1602 = vld [vmem:[#allocation2 + $0xa8] sm:$0xf]
    %v1603 = vld [vmem:[#allocation2 + $0xac] sm:$0x1]
    %v1604 = vld [vmem:[#allocation2 + $0xb0] sm:$0xf]
    %v1605 = vld [vmem:[#allocation2 + $0xb4] sm:$0x1]
    %v1606 = vld [vmem:[#allocation2 + $0xb8] sm:$0xf]
    %v1607 = vld [vmem:[#allocation2 + $0xbc] sm:$0x1]
    %v1608 = vld [vmem:[#allocation2 + $0xc0] sm:$0xf]
    %v1609 = vld [vmem:[#allocation2 + $0xc4] sm:$0x1]
    %v1610 = vld [vmem:[#allocation2 + $0xc8] sm:$0xf]
    %v1611 = vld [vmem:[#allocation2 + $0xcc] sm:$0x1]
    %v1612 = vld [vmem:[#allocation2 + $0xd0] sm:$0xf]
    %v1613 = vld [vmem:[#allocation2 + $0xd4] sm:$0x1]
    %v1614 = vld [vmem:[#allocation2 + $0xd8] sm:$0xf]
    %v1615 = vld [vmem:[#allocation2 + $0xdc] sm:$0x1]
    %v1616 = vld [vmem:[#allocation2 + $0xf0] sm:$0xf]
    %v1617 = vld [vmem:[#allocation2 + $0xf4] sm:$0x1]
    %v1618 = vld [vmem:[#allocation2 + $0xf8] sm:$0xf]
    %v1619 = vld [vmem:[#allocation2 + $0xfc] sm:$0x1]
    %v1620 = vld [vmem:[#allocation2 + $0x100] sm:$0xf]
    %v1621 = vld [vmem:[#allocation2 + $0x104] sm:$0x1]
    %v1622 = vld [vmem:[#allocation2 + $0x108] sm:$0xf]
    %v1623 = vld [vmem:[#allocation2 + $0x10c] sm:$0x1]
    %v1624 = vld [vmem:[#allocation2 + $0x110] sm:$0xf]
    %v1625 = vld [vmem:[#allocation2 + $0x114] sm:$0x1]
    %v1626 = vld [vmem:[#allocation2 + $0x118] sm:$0xf]
    %v1627 = vld [vmem:[#allocation2 + $0x11c] sm:$0x1]
    %v1628 = vld [vmem:[#allocation2 + $0x120] sm:$0xf]
    %v1629 = vld [vmem:[#allocation2 + $0x124] sm:$0x1]
    %v1630 = vld [vmem:[#allocation2 + $0x128] sm:$0xf]
    %v1631 = vld [vmem:[#allocation2 + $0x12c] sm:$0x1]
    %vm1632 = vsmask.f32 3328
    %vm1633 = vsmask.f32 7440
    %vm1634 = vmor %vm1632, %vm1633
    %v1636 = vshrl.u32 %v1568, 16
    %v1638 = vrot.slane %v1636, 4
    %v1639 = vshll.u32 %v1568, 16
    %v1641 = vrot.slane %v1639, 5
    %v1642 = vor.u32 %v1638, %v1641
    %v1643 = vrot.slane %v1642, 4
    %v1645 = vshll.u32 %v1569, 16
    %v1647 = vrot.slane %v1645, 5
    %v1648 = vsel %vm1634, %v1643, %v1647
    %v1650 = vshrl.u32 %v1570, 16
    %v1652 = vrot.slane %v1650, 4
    %v1653 = vshll.u32 %v1570, 16
    %v1655 = vrot.slane %v1653, 5
    %v1656 = vor.u32 %v1652, %v1655
    %v1657 = vrot.slane %v1656, 4
    %v1659 = vshll.u32 %v1571, 16
    %v1661 = vrot.slane %v1659, 5
    %v1662 = vsel %vm1634, %v1657, %v1661
    %v1664 = vshrl.u32 %v1572, 16
    %v1666 = vrot.slane %v1664, 4
    %v1667 = vshll.u32 %v1572, 16
    %v1669 = vrot.slane %v1667, 5
    %v1670 = vor.u32 %v1666, %v1669
    %v1671 = vrot.slane %v1670, 4
    %v1673 = vshll.u32 %v1573, 16
    %v1675 = vrot.slane %v1673, 5
    %v1676 = vsel %vm1634, %v1671, %v1675
    %v1678 = vshrl.u32 %v1574, 16
    %v1680 = vrot.slane %v1678, 4
    %v1681 = vshll.u32 %v1574, 16
    %v1683 = vrot.slane %v1681, 5
    %v1684 = vor.u32 %v1680, %v1683
    %v1685 = vrot.slane %v1684, 4
    %v1687 = vshll.u32 %v1575, 16
    %v1689 = vrot.slane %v1687, 5
    %v1690 = vsel %vm1634, %v1685, %v1689
    %v1692 = vshrl.u32 %v1576, 16
    %v1694 = vrot.slane %v1692, 4
    %v1695 = vshll.u32 %v1576, 16
    %v1697 = vrot.slane %v1695, 5
    %v1698 = vor.u32 %v1694, %v1697
    %v1699 = vrot.slane %v1698, 4
    %v1701 = vshll.u32 %v1577, 16
    %v1703 = vrot.slane %v1701, 5
    %v1704 = vsel %vm1634, %v1699, %v1703
    %v1706 = vshrl.u32 %v1578, 16
    %v1708 = vrot.slane %v1706, 4
    %v1709 = vshll.u32 %v1578, 16
    %v1711 = vrot.slane %v1709, 5
    %v1712 = vor.u32 %v1708, %v1711
    %v1713 = vrot.slane %v1712, 4
    %v1715 = vshll.u32 %v1579, 16
    %v1717 = vrot.slane %v1715, 5
    %v1718 = vsel %vm1634, %v1713, %v1717
    %v1720 = vshrl.u32 %v1580, 16
    %v1722 = vrot.slane %v1720, 4
    %v1723 = vshll.u32 %v1580, 16
    %v1725 = vrot.slane %v1723, 5
    %v1726 = vor.u32 %v1722, %v1725
    %v1727 = vrot.slane %v1726, 4
    %v1729 = vshll.u32 %v1581, 16
    %v1731 = vrot.slane %v1729, 5
    %v1732 = vsel %vm1634, %v1727, %v1731
    %v1734 = vshrl.u32 %v1582, 16
    %v1736 = vrot.slane %v1734, 4
    %v1737 = vshll.u32 %v1582, 16
    %v1739 = vrot.slane %v1737, 5
    %v1740 = vor.u32 %v1736, %v1739
    %v1741 = vrot.slane %v1740, 4
    %v1743 = vshll.u32 %v1583, 16
    %v1745 = vrot.slane %v1743, 5
    %v1746 = vsel %vm1634, %v1741, %v1745
    %v1748 = vshrl.u32 %v1584, 16
    %v1750 = vrot.slane %v1748, 4
    %v1751 = vshll.u32 %v1584, 16
    %v1753 = vrot.slane %v1751, 5
    %v1754 = vor.u32 %v1750, %v1753
    %v1755 = vrot.slane %v1754, 4
    %v1757 = vshll.u32 %v1585, 16
    %v1759 = vrot.slane %v1757, 5
    %v1760 = vsel %vm1634, %v1755, %v1759
    %v1762 = vshrl.u32 %v1586, 16
    %v1764 = vrot.slane %v1762, 4
    %v1765 = vshll.u32 %v1586, 16
    %v1767 = vrot.slane %v1765, 5
    %v1768 = vor.u32 %v1764, %v1767
    %v1769 = vrot.slane %v1768, 4
    %v1771 = vshll.u32 %v1587, 16
    %v1773 = vrot.slane %v1771, 5
    %v1774 = vsel %vm1634, %v1769, %v1773
    %v1776 = vshrl.u32 %v1588, 16
    %v1778 = vrot.slane %v1776, 4
    %v1779 = vshll.u32 %v1588, 16
    %v1781 = vrot.slane %v1779, 5
    %v1782 = vor.u32 %v1778, %v1781
    %v1783 = vrot.slane %v1782, 4
    %v1785 = vshll.u32 %v1589, 16
    %v1787 = vrot.slane %v1785, 5
    %v1788 = vsel %vm1634, %v1783, %v1787
    %v1790 = vshrl.u32 %v1590, 16
    %v1792 = vrot.slane %v1790, 4
    %v1793 = vshll.u32 %v1590, 16
    %v1795 = vrot.slane %v1793, 5
    %v1796 = vor.u32 %v1792, %v1795
    %v1797 = vrot.slane %v1796, 4
    %v1799 = vshll.u32 %v1591, 16
    %v1801 = vrot.slane %v1799, 5
    %v1802 = vsel %vm1634, %v1797, %v1801
    %v1804 = vshrl.u32 %v1592, 16
    %v1806 = vrot.slane %v1804, 4
    %v1807 = vshll.u32 %v1592, 16
    %v1809 = vrot.slane %v1807, 5
    %v1810 = vor.u32 %v1806, %v1809
    %v1811 = vrot.slane %v1810, 4
    %v1813 = vshll.u32 %v1593, 16
    %v1815 = vrot.slane %v1813, 5
    %v1816 = vsel %vm1634, %v1811, %v1815
    %v1818 = vshrl.u32 %v1594, 16
    %v1820 = vrot.slane %v1818, 4
    %v1821 = vshll.u32 %v1594, 16
    %v1823 = vrot.slane %v1821, 5
    %v1824 = vor.u32 %v1820, %v1823
    %v1825 = vrot.slane %v1824, 4
    %v1827 = vshll.u32 %v1595, 16
    %v1829 = vrot.slane %v1827, 5
    %v1830 = vsel %vm1634, %v1825, %v1829
    %v1832 = vshrl.u32 %v1596, 16
    %v1834 = vrot.slane %v1832, 4
    %v1835 = vshll.u32 %v1596, 16
    %v1837 = vrot.slane %v1835, 5
    %v1838 = vor.u32 %v1834, %v1837
    %v1839 = vrot.slane %v1838, 4
    %v1841 = vshll.u32 %v1597, 16
    %v1843 = vrot.slane %v1841, 5
    %v1844 = vsel %vm1634, %v1839, %v1843
    %v1846 = vshrl.u32 %v1598, 16
    %v1848 = vrot.slane %v1846, 4
    %v1849 = vshll.u32 %v1598, 16
    %v1851 = vrot.slane %v1849, 5
    %v1852 = vor.u32 %v1848, %v1851
    %v1853 = vrot.slane %v1852, 4
    %v1855 = vshll.u32 %v1599, 16
    %v1857 = vrot.slane %v1855, 5
    %v1858 = vsel %vm1634, %v1853, %v1857
    %v1860 = vshrl.u32 %v1600, 16
    %v1862 = vrot.slane %v1860, 4
    %v1863 = vshll.u32 %v1600, 16
    %v1865 = vrot.slane %v1863, 5
    %v1866 = vor.u32 %v1862, %v1865
    %v1867 = vrot.slane %v1866, 4
    %v1869 = vshll.u32 %v1601, 16
    %v1871 = vrot.slane %v1869, 5
    %v1872 = vsel %vm1634, %v1867, %v1871
    %v1874 = vshrl.u32 %v1602, 16
    %v1876 = vrot.slane %v1874, 4
    %v1877 = vshll.u32 %v1602, 16
    %v1879 = vrot.slane %v1877, 5
    %v1880 = vor.u32 %v1876, %v1879
    %v1881 = vrot.slane %v1880, 4
    %v1883 = vshll.u32 %v1603, 16
    %v1885 = vrot.slane %v1883, 5
    %v1886 = vsel %vm1634, %v1881, %v1885
    %v1888 = vshrl.u32 %v1604, 16
    %v1890 = vrot.slane %v1888, 4
    %v1891 = vshll.u32 %v1604, 16
    %v1893 = vrot.slane %v1891, 5
    %v1894 = vor.u32 %v1890, %v1893
    %v1895 = vrot.slane %v1894, 4
    %v1897 = vshll.u32 %v1605, 16
    %v1899 = vrot.slane %v1897, 5
    %v1900 = vsel %vm1634, %v1895, %v1899
    %v1902 = vshrl.u32 %v1606, 16
    %v1904 = vrot.slane %v1902, 4
    %v1905 = vshll.u32 %v1606, 16
    %v1907 = vrot.slane %v1905, 5
    %v1908 = vor.u32 %v1904, %v1907
    %v1909 = vrot.slane %v1908, 4
    %v1911 = vshll.u32 %v1607, 16
    %v1913 = vrot.slane %v1911, 5
    %v1914 = vsel %vm1634, %v1909, %v1913
    %v1916 = vshrl.u32 %v1608, 16
    %v1918 = vrot.slane %v1916, 4
    %v1919 = vshll.u32 %v1608, 16
    %v1921 = vrot.slane %v1919, 5
    %v1922 = vor.u32 %v1918, %v1921
    %v1923 = vrot.slane %v1922, 4
    %v1925 = vshll.u32 %v1609, 16
    %v1927 = vrot.slane %v1925, 5
    %v1928 = vsel %vm1634, %v1923, %v1927
    %v1930 = vshrl.u32 %v1610, 16
    %v1932 = vrot.slane %v1930, 4
    %v1933 = vshll.u32 %v1610, 16
    %v1935 = vrot.slane %v1933, 5
    %v1936 = vor.u32 %v1932, %v1935
    %v1937 = vrot.slane %v1936, 4
    %v1939 = vshll.u32 %v1611, 16
    %v1941 = vrot.slane %v1939, 5
    %v1942 = vsel %vm1634, %v1937, %v1941
    %v1944 = vshrl.u32 %v1612, 16
    %v1946 = vrot.slane %v1944, 4
    %v1947 = vshll.u32 %v1612, 16
    %v1949 = vrot.slane %v1947, 5
    %v1950 = vor.u32 %v1946, %v1949
    %v1951 = vrot.slane %v1950, 4
    %v1953 = vshll.u32 %v1613, 16
    %v1955 = vrot.slane %v1953, 5
    %v1956 = vsel %vm1634, %v1951, %v1955
    %v1958 = vshrl.u32 %v1614, 16
    %v1960 = vrot.slane %v1958, 4
    %v1961 = vshll.u32 %v1614, 16
    %v1963 = vrot.slane %v1961, 5
    %v1964 = vor.u32 %v1960, %v1963
    %v1965 = vrot.slane %v1964, 4
    %v1967 = vshll.u32 %v1615, 16
    %v1969 = vrot.slane %v1967, 5
    %v1970 = vsel %vm1634, %v1965, %v1969
    %v1972 = vshrl.u32 %v1616, 16
    %v1974 = vrot.slane %v1972, 4
    %v1975 = vshll.u32 %v1616, 16
    %v1977 = vrot.slane %v1975, 5
    %v1978 = vor.u32 %v1974, %v1977
    %v1979 = vrot.slane %v1978, 4
    %v1981 = vshll.u32 %v1617, 16
    %v1983 = vrot.slane %v1981, 5
    %v1984 = vsel %vm1634, %v1979, %v1983
    %v1986 = vshrl.u32 %v1618, 16
    %v1988 = vrot.slane %v1986, 4
    %v1989 = vshll.u32 %v1618, 16
    %v1991 = vrot.slane %v1989, 5
    %v1992 = vor.u32 %v1988, %v1991
    %v1993 = vrot.slane %v1992, 4
    %v1995 = vshll.u32 %v1619, 16
    %v1997 = vrot.slane %v1995, 5
    %v1998 = vsel %vm1634, %v1993, %v1997
    %v2000 = vshrl.u32 %v1620, 16
    %v2002 = vrot.slane %v2000, 4
    %v2003 = vshll.u32 %v1620, 16
    %v2005 = vrot.slane %v2003, 5
    %v2006 = vor.u32 %v2002, %v2005
    %v2007 = vrot.slane %v2006, 4
    %v2009 = vshll.u32 %v1621, 16
    %v2011 = vrot.slane %v2009, 5
    %v2012 = vsel %vm1634, %v2007, %v2011
    %v2014 = vshrl.u32 %v1622, 16
    %v2016 = vrot.slane %v2014, 4
    %v2017 = vshll.u32 %v1622, 16
    %v2019 = vrot.slane %v2017, 5
    %v2020 = vor.u32 %v2016, %v2019
    %v2021 = vrot.slane %v2020, 4
    %v2023 = vshll.u32 %v1623, 16
    %v2025 = vrot.slane %v2023, 5
    %v2026 = vsel %vm1634, %v2021, %v2025
    %v2028 = vshrl.u32 %v1624, 16
    %v2030 = vrot.slane %v2028, 4
    %v2031 = vshll.u32 %v1624, 16
    %v2033 = vrot.slane %v2031, 5
    %v2034 = vor.u32 %v2030, %v2033
    %v2035 = vrot.slane %v2034, 4
    %v2037 = vshll.u32 %v1625, 16
    %v2039 = vrot.slane %v2037, 5
    %v2040 = vsel %vm1634, %v2035, %v2039
    %v2042 = vshrl.u32 %v1626, 16
    %v2044 = vrot.slane %v2042, 4
    %v2045 = vshll.u32 %v1626, 16
    %v2047 = vrot.slane %v2045, 5
    %v2048 = vor.u32 %v2044, %v2047
    %v2049 = vrot.slane %v2048, 4
    %v2051 = vshll.u32 %v1627, 16
    %v2053 = vrot.slane %v2051, 5
    %v2054 = vsel %vm1634, %v2049, %v2053
    %v2056 = vshrl.u32 %v1628, 16
    %v2058 = vrot.slane %v2056, 4
    %v2059 = vshll.u32 %v1628, 16
    %v2061 = vrot.slane %v2059, 5
    %v2062 = vor.u32 %v2058, %v2061
    %v2063 = vrot.slane %v2062, 4
    %v2065 = vshll.u32 %v1629, 16
    %v2067 = vrot.slane %v2065, 5
    %v2068 = vsel %vm1634, %v2063, %v2067
    %v2070 = vshrl.u32 %v1630, 16
    %v2072 = vrot.slane %v2070, 4
    %v2073 = vshll.u32 %v1630, 16
    %v2075 = vrot.slane %v2073, 5
    %v2076 = vor.u32 %v2072, %v2075
    %v2077 = vrot.slane %v2076, 4
    %v2079 = vshll.u32 %v1631, 16
    %v2081 = vrot.slane %v2079, 5
    %v2082 = vsel %vm1634, %v2077, %v2081
    %v2083 = vunpack.c.l.b16 %v1648
    %v2084 = vunpack.c.l.b16 %v1662
    %v2085 = vunpack.c.l.b16 %v1676
    %v2086 = vunpack.c.l.b16 %v1690
    %v2087 = vunpack.c.l.b16 %v1704
    %v2088 = vunpack.c.l.b16 %v1718
    %v2089 = vunpack.c.l.b16 %v1732
    %v2090 = vunpack.c.l.b16 %v1746
    %v2091 = vunpack.c.l.b16 %v1760
    %v2092 = vunpack.c.l.b16 %v1774
    %v2093 = vunpack.c.l.b16 %v1788
    %v2094 = vunpack.c.l.b16 %v1802
    %v2095 = vunpack.c.l.b16 %v1816
    %v2096 = vunpack.c.l.b16 %v1830
    %v2097 = vunpack.c.l.b16 %v1844
    %v2098 = vunpack.c.l.b16 %v1858
    %v2099 = vunpack.c.l.b16 %v1872
    %v2100 = vunpack.c.l.b16 %v1886
    %v2101 = vunpack.c.l.b16 %v1900
    %v2102 = vunpack.c.l.b16 %v1914
    %v2103 = vunpack.c.l.b16 %v1928
    %v2104 = vunpack.c.l.b16 %v1942
    %v2105 = vunpack.c.l.b16 %v1956
    %v2106 = vunpack.c.l.b16 %v1970
    %v2107 = vunpack.c.l.b16 %v1984
    %v2108 = vunpack.c.l.b16 %v1998
    %v2109 = vunpack.c.l.b16 %v2012
    %v2110 = vunpack.c.l.b16 %v2026
    %v2111 = vunpack.c.l.b16 %v2040
    %v2112 = vunpack.c.l.b16 %v2054
    %v2113 = vunpack.c.l.b16 %v2068
    %v2114 = vunpack.c.l.b16 %v2082
    %v2115 = vpack.c.b16 %v2084, %v2083
    %v2116 = vpack.c.b16 %v2086, %v2085
    %v2117 = vpack.c.b16 %v2088, %v2087
    %v2118 = vpack.c.b16 %v2090, %v2089
    %v2119 = vpack.c.b16 %v2092, %v2091
    %v2120 = vpack.c.b16 %v2094, %v2093
    %v2121 = vpack.c.b16 %v2096, %v2095
    %v2122 = vpack.c.b16 %v2098, %v2097
    %v2123 = vpack.c.b16 %v2100, %v2099
    %v2124 = vpack.c.b16 %v2102, %v2101
    %v2125 = vpack.c.b16 %v2104, %v2103
    %v2126 = vpack.c.b16 %v2106, %v2105
    %v2127 = vpack.c.b16 %v2108, %v2107
    %v2128 = vpack.c.b16 %v2110, %v2109
    %v2129 = vpack.c.b16 %v2112, %v2111
    %v2130 = vpack.c.b16 %v2114, %v2113
    %2131 = vrot.lane.b32.xlu0 %v2115, 32
    %v2132 = vpop.permute.xlu0 %2131
    %2133 = vrot.lane.b32.xlu0 %v2116, 32
    %v2134 = vpop.permute.xlu0 %2133
    %2135 = vrot.lane.b32.xlu0 %v2117, 32
    %v2136 = vpop.permute.xlu0 %2135
    %2137 = vrot.lane.b32.xlu0 %v2118, 32
    %v2138 = vpop.permute.xlu0 %2137
    %2139 = vrot.lane.b32.xlu0 %v2119, 32
    %v2140 = vpop.permute.xlu0 %2139
    %2141 = vrot.lane.b32.xlu0 %v2120, 32
    %v2142 = vpop.permute.xlu0 %2141
    %2143 = vrot.lane.b32.xlu0 %v2121, 32
    %v2144 = vpop.permute.xlu0 %2143
    %2145 = vrot.lane.b32.xlu0 %v2122, 32
    %v2146 = vpop.permute.xlu0 %2145
    %2147 = vrot.lane.b32.xlu0 %v2123, 32
    %v2148 = vpop.permute.xlu0 %2147
    %2149 = vrot.lane.b32.xlu0 %v2124, 32
    %v2150 = vpop.permute.xlu0 %2149
    %2151 = vrot.lane.b32.xlu0 %v2125, 32
    %v2152 = vpop.permute.xlu0 %2151
    %2153 = vrot.lane.b32.xlu0 %v2126, 32
    %v2154 = vpop.permute.xlu0 %2153
    %2155 = vrot.lane.b32.xlu0 %v2127, 32
    %v2156 = vpop.permute.xlu0 %2155
    %2157 = vrot.lane.b32.xlu0 %v2128, 32
    %v2158 = vpop.permute.xlu0 %2157
    %2159 = vrot.lane.b32.xlu0 %v2129, 32
    %v2160 = vpop.permute.xlu0 %2159
    %2161 = vrot.lane.b32.xlu0 %v2130, 32
    %v2162 = vpop.permute.xlu0 %2161
    %vm2179 = vcmask 523520
    %2180 = vst.msk [vmem:[#allocation3] sm:$0xff] %vm2179, %v2132
    %2181 = vst.msk [vmem:[#allocation3 + $0x18] sm:$0xff] %vm2179, %v2134
    %2182 = vst.msk [vmem:[#allocation3 + $0x30] sm:$0xff] %vm2179, %v2136
    %2183 = vst.msk [vmem:[#allocation3 + $0x48] sm:$0xff] %vm2179, %v2138
    %2184 = vst.msk [vmem:[#allocation3 + $0x60] sm:$0xff] %vm2179, %v2140
    %2185 = vst.msk [vmem:[#allocation3 + $0x78] sm:$0xff] %vm2179, %v2142
    %2186 = vst.msk [vmem:[#allocation3 + $0x90] sm:$0xff] %vm2179, %v2144
    %2187 = vst.msk [vmem:[#allocation3 + $0xa8] sm:$0xff] %vm2179, %v2146
    %2188 = vst.msk [vmem:[#allocation3 + $0xc0] sm:$0xff] %vm2179, %v2148
    %2189 = vst.msk [vmem:[#allocation3 + $0xd8] sm:$0xff] %vm2179, %v2150
    %2190 = vst.msk [vmem:[#allocation3 + $0xf0] sm:$0xff] %vm2179, %v2152
    %2191 = vst.msk [vmem:[#allocation3 + $0x108] sm:$0xff] %vm2179, %v2154
    %2192 = vst.msk [vmem:[#allocation3 + $0x120] sm:$0xff] %vm2179, %v2156
    %2193 = vst.msk [vmem:[#allocation3 + $0x138] sm:$0xff] %vm2179, %v2158
    %2194 = vst.msk [vmem:[#allocation3 + $0x150] sm:$0xff] %vm2179, %v2160
    %2195 = vst.msk [vmem:[#allocation3 + $0x168] sm:$0xff] %vm2179, %v2162
    %v2196 = vld [vmem:[#allocation2] sm:$0xe]
    %v2197 = vld [vmem:[#allocation2 + $0x4] sm:$0x1]
    %v2198 = vld [vmem:[#allocation2 + $0x8] sm:$0xe]
    %v2199 = vld [vmem:[#allocation2 + $0xc] sm:$0x1]
    %v2200 = vld [vmem:[#allocation2 + $0x10] sm:$0xe]
    %v2201 = vld [vmem:[#allocation2 + $0x14] sm:$0x1]
    %v2202 = vld [vmem:[#allocation2 + $0x18] sm:$0xe]
    %v2203 = vld [vmem:[#allocation2 + $0x1c] sm:$0x1]
    %v2204 = vld [vmem:[#allocation2 + $0x20] sm:$0xe]
    %v2205 = vld [vmem:[#allocation2 + $0x24] sm:$0x1]
    %v2206 = vld [vmem:[#allocation2 + $0x28] sm:$0xe]
    %v2207 = vld [vmem:[#allocation2 + $0x2c] sm:$0x1]
    %v2208 = vld [vmem:[#allocation2 + $0x30] sm:$0xe]
    %v2209 = vld [vmem:[#allocation2 + $0x34] sm:$0x1]
    %v2210 = vld [vmem:[#allocation2 + $0x38] sm:$0xe]
    %v2211 = vld [vmem:[#allocation2 + $0x3c] sm:$0x1]
    %v2212 = vld [vmem:[#allocation2 + $0x50] sm:$0xe]
    %v2213 = vld [vmem:[#allocation2 + $0x54] sm:$0x1]
    %v2214 = vld [vmem:[#allocation2 + $0x58] sm:$0xe]
    %v2215 = vld [vmem:[#allocation2 + $0x5c] sm:$0x1]
    %v2216 = vld [vmem:[#allocation2 + $0x60] sm:$0xe]
    %v2217 = vld [vmem:[#allocation2 + $0x64] sm:$0x1]
    %v2218 = vld [vmem:[#allocation2 + $0x68] sm:$0xe]
    %v2219 = vld [vmem:[#allocation2 + $0x6c] sm:$0x1]
    %v2220 = vld [vmem:[#allocation2 + $0x70] sm:$0xe]
    %v2221 = vld [vmem:[#allocation2 + $0x74] sm:$0x1]
    %v2222 = vld [vmem:[#allocation2 + $0x78] sm:$0xe]
    %v2223 = vld [vmem:[#allocation2 + $0x7c] sm:$0x1]
    %v2224 = vld [vmem:[#allocation2 + $0x80] sm:$0xe]
    %v2225 = vld [vmem:[#allocation2 + $0x84] sm:$0x1]
    %v2226 = vld [vmem:[#allocation2 + $0x88] sm:$0xe]
    %v2227 = vld [vmem:[#allocation2 + $0x8c] sm:$0x1]
    %v2228 = vld [vmem:[#allocation2 + $0xa0] sm:$0xe]
    %v2229 = vld [vmem:[#allocation2 + $0xa4] sm:$0x1]
    %v2230 = vld [vmem:[#allocation2 + $0xa8] sm:$0xe]
    %v2231 = vld [vmem:[#allocation2 + $0xac] sm:$0x1]
    %v2232 = vld [vmem:[#allocation2 + $0xb0] sm:$0xe]
    %v2233 = vld [vmem:[#allocation2 + $0xb4] sm:$0x1]
    %v2234 = vld [vmem:[#allocation2 + $0xb8] sm:$0xe]
    %v2235 = vld [vmem:[#allocation2 + $0xbc] sm:$0x1]
    %v2236 = vld [vmem:[#allocation2 + $0xc0] sm:$0xe]
    %v2237 = vld [vmem:[#allocation2 + $0xc4] sm:$0x1]
    %v2238 = vld [vmem:[#allocation2 + $0xc8] sm:$0xe]
    %v2239 = vld [vmem:[#allocation2 + $0xcc] sm:$0x1]
    %v2240 = vld [vmem:[#allocation2 + $0xd0] sm:$0xe]
    %v2241 = vld [vmem:[#allocation2 + $0xd4] sm:$0x1]
    %v2242 = vld [vmem:[#allocation2 + $0xd8] sm:$0xe]
    %v2243 = vld [vmem:[#allocation2 + $0xdc] sm:$0x1]
    %v2244 = vld [vmem:[#allocation2 + $0xf0] sm:$0xe]
    %v2245 = vld [vmem:[#allocation2 + $0xf4] sm:$0x1]
    %v2246 = vld [vmem:[#allocation2 + $0xf8] sm:$0xe]
    %v2247 = vld [vmem:[#allocation2 + $0xfc] sm:$0x1]
    %v2248 = vld [vmem:[#allocation2 + $0x100] sm:$0xe]
    %v2249 = vld [vmem:[#allocation2 + $0x104] sm:$0x1]
    %v2250 = vld [vmem:[#allocation2 + $0x108] sm:$0xe]
    %v2251 = vld [vmem:[#allocation2 + $0x10c] sm:$0x1]
    %v2252 = vld [vmem:[#allocation2 + $0x110] sm:$0xe]
    %v2253 = vld [vmem:[#allocation2 + $0x114] sm:$0x1]
    %v2254 = vld [vmem:[#allocation2 + $0x118] sm:$0xe]
    %v2255 = vld [vmem:[#allocation2 + $0x11c] sm:$0x1]
    %v2256 = vld [vmem:[#allocation2 + $0x120] sm:$0xe]
    %v2257 = vld [vmem:[#allocation2 + $0x124] sm:$0x1]
    %v2258 = vld [vmem:[#allocation2 + $0x128] sm:$0xe]
    %v2259 = vld [vmem:[#allocation2 + $0x12c] sm:$0x1]
    %vm2324 = vcmask 1042432
    %vm2325 = vcmask 1046532
    %vm2326 = vmor %vm2324, %vm2325
    %v2327 = vrot.slane %v2196, 5
    %v2328 = vrot.slane %v2327, 4
    %v2329 = vrot.slane %v2197, 5
    %v2330 = vsel %vm2326, %v2328, %v2329
    %v2331 = vrot.slane %v2198, 5
    %v2332 = vrot.slane %v2331, 4
    %v2333 = vrot.slane %v2199, 5
    %v2334 = vsel %vm2326, %v2332, %v2333
    %v2335 = vrot.slane %v2200, 5
    %v2336 = vrot.slane %v2335, 4
    %v2337 = vrot.slane %v2201, 5
    %v2338 = vsel %vm2326, %v2336, %v2337
    %v2339 = vrot.slane %v2202, 5
    %v2340 = vrot.slane %v2339, 4
    %v2341 = vrot.slane %v2203, 5
    %v2342 = vsel %vm2326, %v2340, %v2341
    %v2343 = vrot.slane %v2204, 5
    %v2344 = vrot.slane %v2343, 4
    %v2345 = vrot.slane %v2205, 5
    %v2346 = vsel %vm2326, %v2344, %v2345
    %v2347 = vrot.slane %v2206, 5
    %v2348 = vrot.slane %v2347, 4
    %v2349 = vrot.slane %v2207, 5
    %v2350 = vsel %vm2326, %v2348, %v2349
    %v2351 = vrot.slane %v2208, 5
    %v2352 = vrot.slane %v2351, 4
    %v2353 = vrot.slane %v2209, 5
    %v2354 = vsel %vm2326, %v2352, %v2353
    %v2355 = vrot.slane %v2210, 5
    %v2356 = vrot.slane %v2355, 4
    %v2357 = vrot.slane %v2211, 5
    %v2358 = vsel %vm2326, %v2356, %v2357
    %v2359 = vrot.slane %v2212, 5
    %v2360 = vrot.slane %v2359, 4
    %v2361 = vrot.slane %v2213, 5
    %v2362 = vsel %vm2326, %v2360, %v2361
    %v2363 = vrot.slane %v2214, 5
    %v2364 = vrot.slane %v2363, 4
    %v2365 = vrot.slane %v2215, 5
    %v2366 = vsel %vm2326, %v2364, %v2365
    %v2367 = vrot.slane %v2216, 5
    %v2368 = vrot.slane %v2367, 4
    %v2369 = vrot.slane %v2217, 5
    %v2370 = vsel %vm2326, %v2368, %v2369
    %v2371 = vrot.slane %v2218, 5
    %v2372 = vrot.slane %v2371, 4
    %v2373 = vrot.slane %v2219, 5
    %v2374 = vsel %vm2326, %v2372, %v2373
    %v2375 = vrot.slane %v2220, 5
    %v2376 = vrot.slane %v2375, 4
    %v2377 = vrot.slane %v2221, 5
    %v2378 = vsel %vm2326, %v2376, %v2377
    %v2379 = vrot.slane %v2222, 5
    %v2380 = vrot.slane %v2379, 4
    %v2381 = vrot.slane %v2223, 5
    %v2382 = vsel %vm2326, %v2380, %v2381
    %v2383 = vrot.slane %v2224, 5
    %v2384 = vrot.slane %v2383, 4
    %v2385 = vrot.slane %v2225, 5
    %v2386 = vsel %vm2326, %v2384, %v2385
    %v2387 = vrot.slane %v2226, 5
    %v2388 = vrot.slane %v2387, 4
    %v2389 = vrot.slane %v2227, 5
    %v2390 = vsel %vm2326, %v2388, %v2389
    %v2391 = vrot.slane %v2228, 5
    %v2392 = vrot.slane %v2391, 4
    %v2393 = vrot.slane %v2229, 5
    %v2394 = vsel %vm2326, %v2392, %v2393
    %v2395 = vrot.slane %v2230, 5
    %v2396 = vrot.slane %v2395, 4
    %v2397 = vrot.slane %v2231, 5
    %v2398 = vsel %vm2326, %v2396, %v2397
    %v2399 = vrot.slane %v2232, 5
    %v2400 = vrot.slane %v2399, 4
    %v2401 = vrot.slane %v2233, 5
    %v2402 = vsel %vm2326, %v2400, %v2401
    %v2403 = vrot.slane %v2234, 5
    %v2404 = vrot.slane %v2403, 4
    %v2405 = vrot.slane %v2235, 5
    %v2406 = vsel %vm2326, %v2404, %v2405
    %v2407 = vrot.slane %v2236, 5
    %v2408 = vrot.slane %v2407, 4
    %v2409 = vrot.slane %v2237, 5
    %v2410 = vsel %vm2326, %v2408, %v2409
    %v2411 = vrot.slane %v2238, 5
    %v2412 = vrot.slane %v2411, 4
    %v2413 = vrot.slane %v2239, 5
    %v2414 = vsel %vm2326, %v2412, %v2413
    %v2415 = vrot.slane %v2240, 5
    %v2416 = vrot.slane %v2415, 4
    %v2417 = vrot.slane %v2241, 5
    %v2418 = vsel %vm2326, %v2416, %v2417
    %v2419 = vrot.slane %v2242, 5
    %v2420 = vrot.slane %v2419, 4
    %v2421 = vrot.slane %v2243, 5
    %v2422 = vsel %vm2326, %v2420, %v2421
    %v2423 = vrot.slane %v2244, 5
    %v2424 = vrot.slane %v2423, 4
    %v2425 = vrot.slane %v2245, 5
    %v2426 = vsel %vm2326, %v2424, %v2425
    %v2427 = vrot.slane %v2246, 5
    %v2428 = vrot.slane %v2427, 4
    %v2429 = vrot.slane %v2247, 5
    %v2430 = vsel %vm2326, %v2428, %v2429
    %v2431 = vrot.slane %v2248, 5
    %v2432 = vrot.slane %v2431, 4
    %v2433 = vrot.slane %v2249, 5
    %v2434 = vsel %vm2326, %v2432, %v2433
    %v2435 = vrot.slane %v2250, 5
    %v2436 = vrot.slane %v2435, 4
    %v2437 = vrot.slane %v2251, 5
    %v2438 = vsel %vm2326, %v2436, %v2437
    %v2439 = vrot.slane %v2252, 5
    %v2440 = vrot.slane %v2439, 4
    %v2441 = vrot.slane %v2253, 5
    %v2442 = vsel %vm2326, %v2440, %v2441
    %v2443 = vrot.slane %v2254, 5
    %v2444 = vrot.slane %v2443, 4
    %v2445 = vrot.slane %v2255, 5
    %v2446 = vsel %vm2326, %v2444, %v2445
    %v2447 = vrot.slane %v2256, 5
    %v2448 = vrot.slane %v2447, 4
    %v2449 = vrot.slane %v2257, 5
    %v2450 = vsel %vm2326, %v2448, %v2449
    %v2451 = vrot.slane %v2258, 5
    %v2452 = vrot.slane %v2451, 4
    %v2453 = vrot.slane %v2259, 5
    %v2454 = vsel %vm2326, %v2452, %v2453
    %v2455 = vunpack.c.l.b16 %v2330
    %v2456 = vunpack.c.l.b16 %v2334
    %v2457 = vunpack.c.l.b16 %v2338
    %v2458 = vunpack.c.l.b16 %v2342
    %v2459 = vunpack.c.l.b16 %v2346
    %v2460 = vunpack.c.l.b16 %v2350
    %v2461 = vunpack.c.l.b16 %v2354
    %v2462 = vunpack.c.l.b16 %v2358
    %v2463 = vunpack.c.l.b16 %v2362
    %v2464 = vunpack.c.l.b16 %v2366
    %v2465 = vunpack.c.l.b16 %v2370
    %v2466 = vunpack.c.l.b16 %v2374
    %v2467 = vunpack.c.l.b16 %v2378
    %v2468 = vunpack.c.l.b16 %v2382
    %v2469 = vunpack.c.l.b16 %v2386
    %v2470 = vunpack.c.l.b16 %v2390
    %v2471 = vunpack.c.l.b16 %v2394
    %v2472 = vunpack.c.l.b16 %v2398
    %v2473 = vunpack.c.l.b16 %v2402
    %v2474 = vunpack.c.l.b16 %v2406
    %v2475 = vunpack.c.l.b16 %v2410
    %v2476 = vunpack.c.l.b16 %v2414
    %v2477 = vunpack.c.l.b16 %v2418
    %v2478 = vunpack.c.l.b16 %v2422
    %v2479 = vunpack.c.l.b16 %v2426
    %v2480 = vunpack.c.l.b16 %v2430
    %v2481 = vunpack.c.l.b16 %v2434
    %v2482 = vunpack.c.l.b16 %v2438
    %v2483 = vunpack.c.l.b16 %v2442
    %v2484 = vunpack.c.l.b16 %v2446
    %v2485 = vunpack.c.l.b16 %v2450
    %v2486 = vunpack.c.l.b16 %v2454
    %v2487 = vpack.c.b16 %v2456, %v2455
    %v2488 = vpack.c.b16 %v2458, %v2457
    %v2489 = vpack.c.b16 %v2460, %v2459
    %v2490 = vpack.c.b16 %v2462, %v2461
    %v2491 = vpack.c.b16 %v2464, %v2463
    %v2492 = vpack.c.b16 %v2466, %v2465
    %v2493 = vpack.c.b16 %v2468, %v2467
    %v2494 = vpack.c.b16 %v2470, %v2469
    %v2495 = vpack.c.b16 %v2472, %v2471
    %v2496 = vpack.c.b16 %v2474, %v2473
    %v2497 = vpack.c.b16 %v2476, %v2475
    %v2498 = vpack.c.b16 %v2478, %v2477
    %v2499 = vpack.c.b16 %v2480, %v2479
    %v2500 = vpack.c.b16 %v2482, %v2481
    %v2501 = vpack.c.b16 %v2484, %v2483
    %v2502 = vpack.c.b16 %v2486, %v2485
    %2503 = vrot.lane.b32.xlu0 %v2487, 64
    %v2504 = vpop.permute.xlu0 %2503
    %2505 = vrot.lane.b32.xlu0 %v2488, 64
    %v2506 = vpop.permute.xlu0 %2505
    %2507 = vrot.lane.b32.xlu0 %v2489, 64
    %v2508 = vpop.permute.xlu0 %2507
    %2509 = vrot.lane.b32.xlu0 %v2490, 64
    %v2510 = vpop.permute.xlu0 %2509
    %2511 = vrot.lane.b32.xlu0 %v2491, 64
    %v2512 = vpop.permute.xlu0 %2511
    %2513 = vrot.lane.b32.xlu0 %v2492, 64
    %v2514 = vpop.permute.xlu0 %2513
    %2515 = vrot.lane.b32.xlu0 %v2493, 64
    %v2516 = vpop.permute.xlu0 %2515
    %2517 = vrot.lane.b32.xlu0 %v2494, 64
    %v2518 = vpop.permute.xlu0 %2517
    %2519 = vrot.lane.b32.xlu0 %v2495, 64
    %v2520 = vpop.permute.xlu0 %2519
    %2521 = vrot.lane.b32.xlu0 %v2496, 64
    %v2522 = vpop.permute.xlu0 %2521
    %2523 = vrot.lane.b32.xlu0 %v2497, 64
    %v2524 = vpop.permute.xlu0 %2523
    %2525 = vrot.lane.b32.xlu0 %v2498, 64
    %v2526 = vpop.permute.xlu0 %2525
    %2527 = vrot.lane.b32.xlu0 %v2499, 64
    %v2528 = vpop.permute.xlu0 %2527
    %2529 = vrot.lane.b32.xlu0 %v2500, 64
    %v2530 = vpop.permute.xlu0 %2529
    %2531 = vrot.lane.b32.xlu0 %v2501, 64
    %v2532 = vpop.permute.xlu0 %2531
    %2533 = vrot.lane.b32.xlu0 %v2502, 64
    %v2534 = vpop.permute.xlu0 %2533
    %vm2551 = vcmask 785920
    %2552 = vst.msk [vmem:[#allocation3] sm:$0xff] %vm2551, %v2504
    %2553 = vst.msk [vmem:[#allocation3 + $0x18] sm:$0xff] %vm2551, %v2506
    %2554 = vst.msk [vmem:[#allocation3 + $0x30] sm:$0xff] %vm2551, %v2508
    %2555 = vst.msk [vmem:[#allocation3 + $0x48] sm:$0xff] %vm2551, %v2510
    %2556 = vst.msk [vmem:[#allocation3 + $0x60] sm:$0xff] %vm2551, %v2512
    %2557 = vst.msk [vmem:[#allocation3 + $0x78] sm:$0xff] %vm2551, %v2514
    %2558 = vst.msk [vmem:[#allocation3 + $0x90] sm:$0xff] %vm2551, %v2516
    %2559 = vst.msk [vmem:[#allocation3 + $0xa8] sm:$0xff] %vm2551, %v2518
    %2560 = vst.msk [vmem:[#allocation3 + $0xc0] sm:$0xff] %vm2551, %v2520
    %2561 = vst.msk [vmem:[#allocation3 + $0xd8] sm:$0xff] %vm2551, %v2522
    %2562 = vst.msk [vmem:[#allocation3 + $0xf0] sm:$0xff] %vm2551, %v2524
    %2563 = vst.msk [vmem:[#allocation3 + $0x108] sm:$0xff] %vm2551, %v2526
    %2564 = vst.msk [vmem:[#allocation3 + $0x120] sm:$0xff] %vm2551, %v2528
    %2565 = vst.msk [vmem:[#allocation3 + $0x138] sm:$0xff] %vm2551, %v2530
    %2566 = vst.msk [vmem:[#allocation3 + $0x150] sm:$0xff] %vm2551, %v2532
    %2567 = vst.msk [vmem:[#allocation3 + $0x168] sm:$0xff] %vm2551, %v2534
    %v2568 = vld [vmem:[%s583] sm:$0xf]
    %v2569 = vld [vmem:[%s583 + $0x8] sm:$0xf]
    %v2570 = vld [vmem:[%s583 + $0x10] sm:$0xf]
    %v2571 = vld [vmem:[%s583 + $0x18] sm:$0xf]
    %v2572 = vld [vmem:[%s583 + $0x20] sm:$0xf]
    %v2573 = vld [vmem:[%s583 + $0x28] sm:$0xf]
    %v2574 = vld [vmem:[%s583 + $0x30] sm:$0xf]
    %v2575 = vld [vmem:[%s583 + $0x38] sm:$0xf]
    %v2576 = vld [vmem:[%s583 + $0x50] sm:$0xf]
    %v2577 = vld [vmem:[%s583 + $0x58] sm:$0xf]
    %v2578 = vld [vmem:[%s583 + $0x60] sm:$0xf]
    %v2579 = vld [vmem:[%s583 + $0x68] sm:$0xf]
    %v2580 = vld [vmem:[%s583 + $0x70] sm:$0xf]
    %v2581 = vld [vmem:[%s583 + $0x78] sm:$0xf]
    %v2582 = vld [vmem:[%s583 + $0x80] sm:$0xf]
    %v2583 = vld [vmem:[%s583 + $0x88] sm:$0xf]
    %v2584 = vld [vmem:[%s583 + $0xa0] sm:$0xf]
    %v2585 = vld [vmem:[%s583 + $0xa8] sm:$0xf]
    %v2586 = vld [vmem:[%s583 + $0xb0] sm:$0xf]
    %v2587 = vld [vmem:[%s583 + $0xb8] sm:$0xf]
    %v2588 = vld [vmem:[%s583 + $0xc0] sm:$0xf]
    %v2589 = vld [vmem:[%s583 + $0xc8] sm:$0xf]
    %v2590 = vld [vmem:[%s583 + $0xd0] sm:$0xf]
    %v2591 = vld [vmem:[%s583 + $0xd8] sm:$0xf]
    %v2592 = vld [vmem:[%s583 + $0xf0] sm:$0xf]
    %v2593 = vld [vmem:[%s583 + $0xf8] sm:$0xf]
    %v2594 = vld [vmem:[%s583 + $0x100] sm:$0xf]
    %v2595 = vld [vmem:[%s583 + $0x108] sm:$0xf]
    %v2596 = vld [vmem:[%s583 + $0x110] sm:$0xf]
    %v2597 = vld [vmem:[%s583 + $0x118] sm:$0xf]
    %v2598 = vld [vmem:[%s583 + $0x120] sm:$0xf]
    %v2599 = vld [vmem:[%s583 + $0x128] sm:$0xf]
    %v2632 = vunpack.c.l.b16 %v2568
    %v2633 = vunpack.c.l.b16 %v2569
    %v2634 = vunpack.c.l.b16 %v2570
    %v2635 = vunpack.c.l.b16 %v2571
    %v2636 = vunpack.c.l.b16 %v2572
    %v2637 = vunpack.c.l.b16 %v2573
    %v2638 = vunpack.c.l.b16 %v2574
    %v2639 = vunpack.c.l.b16 %v2575
    %v2640 = vunpack.c.l.b16 %v2576
    %v2641 = vunpack.c.l.b16 %v2577
    %v2642 = vunpack.c.l.b16 %v2578
    %v2643 = vunpack.c.l.b16 %v2579
    %v2644 = vunpack.c.l.b16 %v2580
    %v2645 = vunpack.c.l.b16 %v2581
    %v2646 = vunpack.c.l.b16 %v2582
    %v2647 = vunpack.c.l.b16 %v2583
    %v2648 = vunpack.c.l.b16 %v2584
    %v2649 = vunpack.c.l.b16 %v2585
    %v2650 = vunpack.c.l.b16 %v2586
    %v2651 = vunpack.c.l.b16 %v2587
    %v2652 = vunpack.c.l.b16 %v2588
    %v2653 = vunpack.c.l.b16 %v2589
    %v2654 = vunpack.c.l.b16 %v2590
    %v2655 = vunpack.c.l.b16 %v2591
    %v2656 = vunpack.c.l.b16 %v2592
    %v2657 = vunpack.c.l.b16 %v2593
    %v2658 = vunpack.c.l.b16 %v2594
    %v2659 = vunpack.c.l.b16 %v2595
    %v2660 = vunpack.c.l.b16 %v2596
    %v2661 = vunpack.c.l.b16 %v2597
    %v2662 = vunpack.c.l.b16 %v2598
    %v2663 = vunpack.c.l.b16 %v2599
    %v2664 = vpack.c.b16 %v2633, %v2632
    %v2665 = vpack.c.b16 %v2635, %v2634
    %v2666 = vpack.c.b16 %v2637, %v2636
    %v2667 = vpack.c.b16 %v2639, %v2638
    %v2668 = vpack.c.b16 %v2641, %v2640
    %v2669 = vpack.c.b16 %v2643, %v2642
    %v2670 = vpack.c.b16 %v2645, %v2644
    %v2671 = vpack.c.b16 %v2647, %v2646
    %v2672 = vpack.c.b16 %v2649, %v2648
    %v2673 = vpack.c.b16 %v2651, %v2650
    %v2674 = vpack.c.b16 %v2653, %v2652
    %v2675 = vpack.c.b16 %v2655, %v2654
    %v2676 = vpack.c.b16 %v2657, %v2656
    %v2677 = vpack.c.b16 %v2659, %v2658
    %v2678 = vpack.c.b16 %v2661, %v2660
    %v2679 = vpack.c.b16 %v2663, %v2662
    %2680 = vrot.lane.b32.xlu0 %v2664, 96
    %v2681 = vpop.permute.xlu0 %2680
    %2682 = vrot.lane.b32.xlu0 %v2665, 96
    %v2683 = vpop.permute.xlu0 %2682
    %2684 = vrot.lane.b32.xlu0 %v2666, 96
    %v2685 = vpop.permute.xlu0 %2684
    %2686 = vrot.lane.b32.xlu0 %v2667, 96
    %v2687 = vpop.permute.xlu0 %2686
    %2688 = vrot.lane.b32.xlu0 %v2668, 96
    %v2689 = vpop.permute.xlu0 %2688
    %2690 = vrot.lane.b32.xlu0 %v2669, 96
    %v2691 = vpop.permute.xlu0 %2690
    %2692 = vrot.lane.b32.xlu0 %v2670, 96
    %v2693 = vpop.permute.xlu0 %2692
    %2694 = vrot.lane.b32.xlu0 %v2671, 96
    %v2695 = vpop.permute.xlu0 %2694
    %2696 = vrot.lane.b32.xlu0 %v2672, 96
    %v2697 = vpop.permute.xlu0 %2696
    %2698 = vrot.lane.b32.xlu0 %v2673, 96
    %v2699 = vpop.permute.xlu0 %2698
    %2700 = vrot.lane.b32.xlu0 %v2674, 96
    %v2701 = vpop.permute.xlu0 %2700
    %2702 = vrot.lane.b32.xlu0 %v2675, 96
    %v2703 = vpop.permute.xlu0 %2702
    %2704 = vrot.lane.b32.xlu0 %v2676, 96
    %v2705 = vpop.permute.xlu0 %2704
    %2706 = vrot.lane.b32.xlu0 %v2677, 96
    %v2707 = vpop.permute.xlu0 %2706
    %2708 = vrot.lane.b32.xlu0 %v2678, 96
    %v2709 = vpop.permute.xlu0 %2708
    %2710 = vrot.lane.b32.xlu0 %v2679, 96
    %v2711 = vpop.permute.xlu0 %2710
    %vm2728 = vcmask 1048320
    %2729 = vst.msk [vmem:[#allocation3] sm:$0xff] %vm2728, %v2681
    %2730 = vst.msk [vmem:[#allocation3 + $0x18] sm:$0xff] %vm2728, %v2683
    %2731 = vst.msk [vmem:[#allocation3 + $0x30] sm:$0xff] %vm2728, %v2685
    %2732 = vst.msk [vmem:[#allocation3 + $0x48] sm:$0xff] %vm2728, %v2687
    %2733 = vst.msk [vmem:[#allocation3 + $0x60] sm:$0xff] %vm2728, %v2689
    %2734 = vst.msk [vmem:[#allocation3 + $0x78] sm:$0xff] %vm2728, %v2691
    %2735 = vst.msk [vmem:[#allocation3 + $0x90] sm:$0xff] %vm2728, %v2693
    %2736 = vst.msk [vmem:[#allocation3 + $0xa8] sm:$0xff] %vm2728, %v2695
    %2737 = vst.msk [vmem:[#allocation3 + $0xc0] sm:$0xff] %vm2728, %v2697
    %2738 = vst.msk [vmem:[#allocation3 + $0xd8] sm:$0xff] %vm2728, %v2699
    %2739 = vst.msk [vmem:[#allocation3 + $0xf0] sm:$0xff] %vm2728, %v2701
    %2740 = vst.msk [vmem:[#allocation3 + $0x108] sm:$0xff] %vm2728, %v2703
    %2741 = vst.msk [vmem:[#allocation3 + $0x120] sm:$0xff] %vm2728, %v2705
    %2742 = vst.msk [vmem:[#allocation3 + $0x138] sm:$0xff] %vm2728, %v2707
    %2743 = vst.msk [vmem:[#allocation3 + $0x150] sm:$0xff] %vm2728, %v2709
    %2744 = vst.msk [vmem:[#allocation3 + $0x168] sm:$0xff] %vm2728, %v2711
    %v2745 = vld [vmem:[%s583] sm:$0xf]
    %v2746 = vld [vmem:[%s583 + $0x4] sm:$0x1]
    %v2747 = vld [vmem:[%s583 + $0x8] sm:$0xf]
    %v2748 = vld [vmem:[%s583 + $0xc] sm:$0x1]
    %v2749 = vld [vmem:[%s583 + $0x10] sm:$0xf]
    %v2750 = vld [vmem:[%s583 + $0x14] sm:$0x1]
    %v2751 = vld [vmem:[%s583 + $0x18] sm:$0xf]
    %v2752 = vld [vmem:[%s583 + $0x1c] sm:$0x1]
    %v2753 = vld [vmem:[%s583 + $0x20] sm:$0xf]
    %v2754 = vld [vmem:[%s583 + $0x24] sm:$0x1]
    %v2755 = vld [vmem:[%s583 + $0x28] sm:$0xf]
    %v2756 = vld [vmem:[%s583 + $0x2c] sm:$0x1]
    %v2757 = vld [vmem:[%s583 + $0x30] sm:$0xf]
    %v2758 = vld [vmem:[%s583 + $0x34] sm:$0x1]
    %v2759 = vld [vmem:[%s583 + $0x38] sm:$0xf]
    %v2760 = vld [vmem:[%s583 + $0x3c] sm:$0x1]
    %v2761 = vld [vmem:[%s583 + $0x50] sm:$0xf]
    %v2762 = vld [vmem:[%s583 + $0x54] sm:$0x1]
    %v2763 = vld [vmem:[%s583 + $0x58] sm:$0xf]
    %v2764 = vld [vmem:[%s583 + $0x5c] sm:$0x1]
    %v2765 = vld [vmem:[%s583 + $0x60] sm:$0xf]
    %v2766 = vld [vmem:[%s583 + $0x64] sm:$0x1]
    %v2767 = vld [vmem:[%s583 + $0x68] sm:$0xf]
    %v2768 = vld [vmem:[%s583 + $0x6c] sm:$0x1]
    %v2769 = vld [vmem:[%s583 + $0x70] sm:$0xf]
    %v2770 = vld [vmem:[%s583 + $0x74] sm:$0x1]
    %v2771 = vld [vmem:[%s583 + $0x78] sm:$0xf]
    %v2772 = vld [vmem:[%s583 + $0x7c] sm:$0x1]
    %v2773 = vld [vmem:[%s583 + $0x80] sm:$0xf]
    %v2774 = vld [vmem:[%s583 + $0x84] sm:$0x1]
    %v2775 = vld [vmem:[%s583 + $0x88] sm:$0xf]
    %v2776 = vld [vmem:[%s583 + $0x8c] sm:$0x1]
    %v2777 = vld [vmem:[%s583 + $0xa0] sm:$0xf]
    %v2778 = vld [vmem:[%s583 + $0xa4] sm:$0x1]
    %v2779 = vld [vmem:[%s583 + $0xa8] sm:$0xf]
    %v2780 = vld [vmem:[%s583 + $0xac] sm:$0x1]
    %v2781 = vld [vmem:[%s583 + $0xb0] sm:$0xf]
    %v2782 = vld [vmem:[%s583 + $0xb4] sm:$0x1]
    %v2783 = vld [vmem:[%s583 + $0xb8] sm:$0xf]
    %v2784 = vld [vmem:[%s583 + $0xbc] sm:$0x1]
    %v2785 = vld [vmem:[%s583 + $0xc0] sm:$0xf]
    %v2786 = vld [vmem:[%s583 + $0xc4] sm:$0x1]
    %v2787 = vld [vmem:[%s583 + $0xc8] sm:$0xf]
    %v2788 = vld [vmem:[%s583 + $0xcc] sm:$0x1]
    %v2789 = vld [vmem:[%s583 + $0xd0] sm:$0xf]
    %v2790 = vld [vmem:[%s583 + $0xd4] sm:$0x1]
    %v2791 = vld [vmem:[%s583 + $0xd8] sm:$0xf]
    %v2792 = vld [vmem:[%s583 + $0xdc] sm:$0x1]
    %v2793 = vld [vmem:[%s583 + $0xf0] sm:$0xf]
    %v2794 = vld [vmem:[%s583 + $0xf4] sm:$0x1]
    %v2795 = vld [vmem:[%s583 + $0xf8] sm:$0xf]
    %v2796 = vld [vmem:[%s583 + $0xfc] sm:$0x1]
    %v2797 = vld [vmem:[%s583 + $0x100] sm:$0xf]
    %v2798 = vld [vmem:[%s583 + $0x104] sm:$0x1]
    %v2799 = vld [vmem:[%s583 + $0x108] sm:$0xf]
    %v2800 = vld [vmem:[%s583 + $0x10c] sm:$0x1]
    %v2801 = vld [vmem:[%s583 + $0x110] sm:$0xf]
    %v2802 = vld [vmem:[%s583 + $0x114] sm:$0x1]
    %v2803 = vld [vmem:[%s583 + $0x118] sm:$0xf]
    %v2804 = vld [vmem:[%s583 + $0x11c] sm:$0x1]
    %v2805 = vld [vmem:[%s583 + $0x120] sm:$0xf]
    %v2806 = vld [vmem:[%s583 + $0x124] sm:$0x1]
    %v2807 = vld [vmem:[%s583 + $0x128] sm:$0xf]
    %v2808 = vld [vmem:[%s583 + $0x12c] sm:$0x1]
    %v2810 = vshrl.u32 %v2745, 16
    %v2812 = vrot.slane %v2810, 4
    %v2813 = vshll.u32 %v2745, 16
    %v2815 = vrot.slane %v2813, 5
    %v2816 = vor.u32 %v2812, %v2815
    %v2817 = vrot.slane %v2816, 4
    %v2819 = vshll.u32 %v2746, 16
    %v2821 = vrot.slane %v2819, 5
    %v2822 = vsel %vm1634, %v2817, %v2821
    %v2824 = vshrl.u32 %v2747, 16
    %v2826 = vrot.slane %v2824, 4
    %v2827 = vshll.u32 %v2747, 16
    %v2829 = vrot.slane %v2827, 5
    %v2830 = vor.u32 %v2826, %v2829
    %v2831 = vrot.slane %v2830, 4
    %v2833 = vshll.u32 %v2748, 16
    %v2835 = vrot.slane %v2833, 5
    %v2836 = vsel %vm1634, %v2831, %v2835
    %v2838 = vshrl.u32 %v2749, 16
    %v2840 = vrot.slane %v2838, 4
    %v2841 = vshll.u32 %v2749, 16
    %v2843 = vrot.slane %v2841, 5
    %v2844 = vor.u32 %v2840, %v2843
    %v2845 = vrot.slane %v2844, 4
    %v2847 = vshll.u32 %v2750, 16
    %v2849 = vrot.slane %v2847, 5
    %v2850 = vsel %vm1634, %v2845, %v2849
    %v2852 = vshrl.u32 %v2751, 16
    %v2854 = vrot.slane %v2852, 4
    %v2855 = vshll.u32 %v2751, 16
    %v2857 = vrot.slane %v2855, 5
    %v2858 = vor.u32 %v2854, %v2857
    %v2859 = vrot.slane %v2858, 4
    %v2861 = vshll.u32 %v2752, 16
    %v2863 = vrot.slane %v2861, 5
    %v2864 = vsel %vm1634, %v2859, %v2863
    %v2866 = vshrl.u32 %v2753, 16
    %v2868 = vrot.slane %v2866, 4
    %v2869 = vshll.u32 %v2753, 16
    %v2871 = vrot.slane %v2869, 5
    %v2872 = vor.u32 %v2868, %v2871
    %v2873 = vrot.slane %v2872, 4
    %v2875 = vshll.u32 %v2754, 16
    %v2877 = vrot.slane %v2875, 5
    %v2878 = vsel %vm1634, %v2873, %v2877
    %v2880 = vshrl.u32 %v2755, 16
    %v2882 = vrot.slane %v2880, 4
    %v2883 = vshll.u32 %v2755, 16
    %v2885 = vrot.slane %v2883, 5
    %v2886 = vor.u32 %v2882, %v2885
    %v2887 = vrot.slane %v2886, 4
    %v2889 = vshll.u32 %v2756, 16
    %v2891 = vrot.slane %v2889, 5
    %v2892 = vsel %vm1634, %v2887, %v2891
    %v2894 = vshrl.u32 %v2757, 16
    %v2896 = vrot.slane %v2894, 4
    %v2897 = vshll.u32 %v2757, 16
    %v2899 = vrot.slane %v2897, 5
    %v2900 = vor.u32 %v2896, %v2899
    %v2901 = vrot.slane %v2900, 4
    %v2903 = vshll.u32 %v2758, 16
    %v2905 = vrot.slane %v2903, 5
    %v2906 = vsel %vm1634, %v2901, %v2905
    %v2908 = vshrl.u32 %v2759, 16
    %v2910 = vrot.slane %v2908, 4
    %v2911 = vshll.u32 %v2759, 16
    %v2913 = vrot.slane %v2911, 5
    %v2914 = vor.u32 %v2910, %v2913
    %v2915 = vrot.slane %v2914, 4
    %v2917 = vshll.u32 %v2760, 16
    %v2919 = vrot.slane %v2917, 5
    %v2920 = vsel %vm1634, %v2915, %v2919
    %v2922 = vshrl.u32 %v2761, 16
    %v2924 = vrot.slane %v2922, 4
    %v2925 = vshll.u32 %v2761, 16
    %v2927 = vrot.slane %v2925, 5
    %v2928 = vor.u32 %v2924, %v2927
    %v2929 = vrot.slane %v2928, 4
    %v2931 = vshll.u32 %v2762, 16
    %v2933 = vrot.slane %v2931, 5
    %v2934 = vsel %vm1634, %v2929, %v2933
    %v2936 = vshrl.u32 %v2763, 16
    %v2938 = vrot.slane %v2936, 4
    %v2939 = vshll.u32 %v2763, 16
    %v2941 = vrot.slane %v2939, 5
    %v2942 = vor.u32 %v2938, %v2941
    %v2943 = vrot.slane %v2942, 4
    %v2945 = vshll.u32 %v2764, 16
    %v2947 = vrot.slane %v2945, 5
    %v2948 = vsel %vm1634, %v2943, %v2947
    %v2950 = vshrl.u32 %v2765, 16
    %v2952 = vrot.slane %v2950, 4
    %v2953 = vshll.u32 %v2765, 16
    %v2955 = vrot.slane %v2953, 5
    %v2956 = vor.u32 %v2952, %v2955
    %v2957 = vrot.slane %v2956, 4
    %v2959 = vshll.u32 %v2766, 16
    %v2961 = vrot.slane %v2959, 5
    %v2962 = vsel %vm1634, %v2957, %v2961
    %v2964 = vshrl.u32 %v2767, 16
    %v2966 = vrot.slane %v2964, 4
    %v2967 = vshll.u32 %v2767, 16
    %v2969 = vrot.slane %v2967, 5
    %v2970 = vor.u32 %v2966, %v2969
    %v2971 = vrot.slane %v2970, 4
    %v2973 = vshll.u32 %v2768, 16
    %v2975 = vrot.slane %v2973, 5
    %v2976 = vsel %vm1634, %v2971, %v2975
    %v2978 = vshrl.u32 %v2769, 16
    %v2980 = vrot.slane %v2978, 4
    %v2981 = vshll.u32 %v2769, 16
    %v2983 = vrot.slane %v2981, 5
    %v2984 = vor.u32 %v2980, %v2983
    %v2985 = vrot.slane %v2984, 4
    %v2987 = vshll.u32 %v2770, 16
    %v2989 = vrot.slane %v2987, 5
    %v2990 = vsel %vm1634, %v2985, %v2989
    %v2992 = vshrl.u32 %v2771, 16
    %v2994 = vrot.slane %v2992, 4
    %v2995 = vshll.u32 %v2771, 16
    %v2997 = vrot.slane %v2995, 5
    %v2998 = vor.u32 %v2994, %v2997
    %v2999 = vrot.slane %v2998, 4
    %v3001 = vshll.u32 %v2772, 16
    %v3003 = vrot.slane %v3001, 5
    %v3004 = vsel %vm1634, %v2999, %v3003
    %v3006 = vshrl.u32 %v2773, 16
    %v3008 = vrot.slane %v3006, 4
    %v3009 = vshll.u32 %v2773, 16
    %v3011 = vrot.slane %v3009, 5
    %v3012 = vor.u32 %v3008, %v3011
    %v3013 = vrot.slane %v3012, 4
    %v3015 = vshll.u32 %v2774, 16
    %v3017 = vrot.slane %v3015, 5
    %v3018 = vsel %vm1634, %v3013, %v3017
    %v3020 = vshrl.u32 %v2775, 16
    %v3022 = vrot.slane %v3020, 4
    %v3023 = vshll.u32 %v2775, 16
    %v3025 = vrot.slane %v3023, 5
    %v3026 = vor.u32 %v3022, %v3025
    %v3027 = vrot.slane %v3026, 4
    %v3029 = vshll.u32 %v2776, 16
    %v3031 = vrot.slane %v3029, 5
    %v3032 = vsel %vm1634, %v3027, %v3031
    %v3034 = vshrl.u32 %v2777, 16
    %v3036 = vrot.slane %v3034, 4
    %v3037 = vshll.u32 %v2777, 16
    %v3039 = vrot.slane %v3037, 5
    %v3040 = vor.u32 %v3036, %v3039
    %v3041 = vrot.slane %v3040, 4
    %v3043 = vshll.u32 %v2778, 16
    %v3045 = vrot.slane %v3043, 5
    %v3046 = vsel %vm1634, %v3041, %v3045
    %v3048 = vshrl.u32 %v2779, 16
    %v3050 = vrot.slane %v3048, 4
    %v3051 = vshll.u32 %v2779, 16
    %v3053 = vrot.slane %v3051, 5
    %v3054 = vor.u32 %v3050, %v3053
    %v3055 = vrot.slane %v3054, 4
    %v3057 = vshll.u32 %v2780, 16
    %v3059 = vrot.slane %v3057, 5
    %v3060 = vsel %vm1634, %v3055, %v3059
    %v3062 = vshrl.u32 %v2781, 16
    %v3064 = vrot.slane %v3062, 4
    %v3065 = vshll.u32 %v2781, 16
    %v3067 = vrot.slane %v3065, 5
    %v3068 = vor.u32 %v3064, %v3067
    %v3069 = vrot.slane %v3068, 4
    %v3071 = vshll.u32 %v2782, 16
    %v3073 = vrot.slane %v3071, 5
    %v3074 = vsel %vm1634, %v3069, %v3073
    %v3076 = vshrl.u32 %v2783, 16
    %v3078 = vrot.slane %v3076, 4
    %v3079 = vshll.u32 %v2783, 16
    %v3081 = vrot.slane %v3079, 5
    %v3082 = vor.u32 %v3078, %v3081
    %v3083 = vrot.slane %v3082, 4
    %v3085 = vshll.u32 %v2784, 16
    %v3087 = vrot.slane %v3085, 5
    %v3088 = vsel %vm1634, %v3083, %v3087
    %v3090 = vshrl.u32 %v2785, 16
    %v3092 = vrot.slane %v3090, 4
    %v3093 = vshll.u32 %v2785, 16
    %v3095 = vrot.slane %v3093, 5
    %v3096 = vor.u32 %v3092, %v3095
    %v3097 = vrot.slane %v3096, 4
    %v3099 = vshll.u32 %v2786, 16
    %v3101 = vrot.slane %v3099, 5
    %v3102 = vsel %vm1634, %v3097, %v3101
    %v3104 = vshrl.u32 %v2787, 16
    %v3106 = vrot.slane %v3104, 4
    %v3107 = vshll.u32 %v2787, 16
    %v3109 = vrot.slane %v3107, 5
    %v3110 = vor.u32 %v3106, %v3109
    %v3111 = vrot.slane %v3110, 4
    %v3113 = vshll.u32 %v2788, 16
    %v3115 = vrot.slane %v3113, 5
    %v3116 = vsel %vm1634, %v3111, %v3115
    %v3118 = vshrl.u32 %v2789, 16
    %v3120 = vrot.slane %v3118, 4
    %v3121 = vshll.u32 %v2789, 16
    %v3123 = vrot.slane %v3121, 5
    %v3124 = vor.u32 %v3120, %v3123
    %v3125 = vrot.slane %v3124, 4
    %v3127 = vshll.u32 %v2790, 16
    %v3129 = vrot.slane %v3127, 5
    %v3130 = vsel %vm1634, %v3125, %v3129
    %v3132 = vshrl.u32 %v2791, 16
    %v3134 = vrot.slane %v3132, 4
    %v3135 = vshll.u32 %v2791, 16
    %v3137 = vrot.slane %v3135, 5
    %v3138 = vor.u32 %v3134, %v3137
    %v3139 = vrot.slane %v3138, 4
    %v3141 = vshll.u32 %v2792, 16
    %v3143 = vrot.slane %v3141, 5
    %v3144 = vsel %vm1634, %v3139, %v3143
    %v3146 = vshrl.u32 %v2793, 16
    %v3148 = vrot.slane %v3146, 4
    %v3149 = vshll.u32 %v2793, 16
    %v3151 = vrot.slane %v3149, 5
    %v3152 = vor.u32 %v3148, %v3151
    %v3153 = vrot.slane %v3152, 4
    %v3155 = vshll.u32 %v2794, 16
    %v3157 = vrot.slane %v3155, 5
    %v3158 = vsel %vm1634, %v3153, %v3157
    %v3160 = vshrl.u32 %v2795, 16
    %v3162 = vrot.slane %v3160, 4
    %v3163 = vshll.u32 %v2795, 16
    %v3165 = vrot.slane %v3163, 5
    %v3166 = vor.u32 %v3162, %v3165
    %v3167 = vrot.slane %v3166, 4
    %v3169 = vshll.u32 %v2796, 16
    %v3171 = vrot.slane %v3169, 5
    %v3172 = vsel %vm1634, %v3167, %v3171
    %v3174 = vshrl.u32 %v2797, 16
    %v3176 = vrot.slane %v3174, 4
    %v3177 = vshll.u32 %v2797, 16
    %v3179 = vrot.slane %v3177, 5
    %v3180 = vor.u32 %v3176, %v3179
    %v3181 = vrot.slane %v3180, 4
    %v3183 = vshll.u32 %v2798, 16
    %v3185 = vrot.slane %v3183, 5
    %v3186 = vsel %vm1634, %v3181, %v3185
    %v3188 = vshrl.u32 %v2799, 16
    %v3190 = vrot.slane %v3188, 4
    %v3191 = vshll.u32 %v2799, 16
    %v3193 = vrot.slane %v3191, 5
    %v3194 = vor.u32 %v3190, %v3193
    %v3195 = vrot.slane %v3194, 4
    %v3197 = vshll.u32 %v2800, 16
    %v3199 = vrot.slane %v3197, 5
    %v3200 = vsel %vm1634, %v3195, %v3199
    %v3202 = vshrl.u32 %v2801, 16
    %v3204 = vrot.slane %v3202, 4
    %v3205 = vshll.u32 %v2801, 16
    %v3207 = vrot.slane %v3205, 5
    %v3208 = vor.u32 %v3204, %v3207
    %v3209 = vrot.slane %v3208, 4
    %v3211 = vshll.u32 %v2802, 16
    %v3213 = vrot.slane %v3211, 5
    %v3214 = vsel %vm1634, %v3209, %v3213
    %v3216 = vshrl.u32 %v2803, 16
    %v3218 = vrot.slane %v3216, 4
    %v3219 = vshll.u32 %v2803, 16
    %v3221 = vrot.slane %v3219, 5
    %v3222 = vor.u32 %v3218, %v3221
    %v3223 = vrot.slane %v3222, 4
    %v3225 = vshll.u32 %v2804, 16
    %v3227 = vrot.slane %v3225, 5
    %v3228 = vsel %vm1634, %v3223, %v3227
    %v3230 = vshrl.u32 %v2805, 16
    %v3232 = vrot.slane %v3230, 4
    %v3233 = vshll.u32 %v2805, 16
    %v3235 = vrot.slane %v3233, 5
    %v3236 = vor.u32 %v3232, %v3235
    %v3237 = vrot.slane %v3236, 4
    %v3239 = vshll.u32 %v2806, 16
    %v3241 = vrot.slane %v3239, 5
    %v3242 = vsel %vm1634, %v3237, %v3241
    %v3244 = vshrl.u32 %v2807, 16
    %v3246 = vrot.slane %v3244, 4
    %v3247 = vshll.u32 %v2807, 16
    %v3249 = vrot.slane %v3247, 5
    %v3250 = vor.u32 %v3246, %v3249
    %v3251 = vrot.slane %v3250, 4
    %v3253 = vshll.u32 %v2808, 16
    %v3255 = vrot.slane %v3253, 5
    %v3256 = vsel %vm1634, %v3251, %v3255
    %v3257 = vunpack.c.l.b16 %v2822
    %v3258 = vunpack.c.l.b16 %v2836
    %v3259 = vunpack.c.l.b16 %v2850
    %v3260 = vunpack.c.l.b16 %v2864
    %v3261 = vunpack.c.l.b16 %v2878
    %v3262 = vunpack.c.l.b16 %v2892
    %v3263 = vunpack.c.l.b16 %v2906
    %v3264 = vunpack.c.l.b16 %v2920
    %v3265 = vunpack.c.l.b16 %v2934
    %v3266 = vunpack.c.l.b16 %v2948
    %v3267 = vunpack.c.l.b16 %v2962
    %v3268 = vunpack.c.l.b16 %v2976
    %v3269 = vunpack.c.l.b16 %v2990
    %v3270 = vunpack.c.l.b16 %v3004
    %v3271 = vunpack.c.l.b16 %v3018
    %v3272 = vunpack.c.l.b16 %v3032
    %v3273 = vunpack.c.l.b16 %v3046
    %v3274 = vunpack.c.l.b16 %v3060
    %v3275 = vunpack.c.l.b16 %v3074
    %v3276 = vunpack.c.l.b16 %v3088
    %v3277 = vunpack.c.l.b16 %v3102
    %v3278 = vunpack.c.l.b16 %v3116
    %v3279 = vunpack.c.l.b16 %v3130
    %v3280 = vunpack.c.l.b16 %v3144
    %v3281 = vunpack.c.l.b16 %v3158
    %v3282 = vunpack.c.l.b16 %v3172
    %v3283 = vunpack.c.l.b16 %v3186
    %v3284 = vunpack.c.l.b16 %v3200
    %v3285 = vunpack.c.l.b16 %v3214
    %v3286 = vunpack.c.l.b16 %v3228
    %v3287 = vunpack.c.l.b16 %v3242
    %v3288 = vunpack.c.l.b16 %v3256
    %v3289 = vpack.c.b16 %v3258, %v3257
    %v3290 = vpack.c.b16 %v3260, %v3259
    %v3291 = vpack.c.b16 %v3262, %v3261
    %v3292 = vpack.c.b16 %v3264, %v3263
    %v3293 = vpack.c.b16 %v3266, %v3265
    %v3294 = vpack.c.b16 %v3268, %v3267
    %v3295 = vpack.c.b16 %v3270, %v3269
    %v3296 = vpack.c.b16 %v3272, %v3271
    %v3297 = vpack.c.b16 %v3274, %v3273
    %v3298 = vpack.c.b16 %v3276, %v3275
    %v3299 = vpack.c.b16 %v3278, %v3277
    %v3300 = vpack.c.b16 %v3280, %v3279
    %v3301 = vpack.c.b16 %v3282, %v3281
    %v3302 = vpack.c.b16 %v3284, %v3283
    %v3303 = vpack.c.b16 %v3286, %v3285
    %v3304 = vpack.c.b16 %v3288, %v3287
    %3321 = vst.msk [vmem:[#allocation3 + $0x8] sm:$0xff] %vm1551, %v3289
    %3322 = vst.msk [vmem:[#allocation3 + $0x20] sm:$0xff] %vm1551, %v3290
    %3323 = vst.msk [vmem:[#allocation3 + $0x38] sm:$0xff] %vm1551, %v3291
    %3324 = vst.msk [vmem:[#allocation3 + $0x50] sm:$0xff] %vm1551, %v3292
    %3325 = vst.msk [vmem:[#allocation3 + $0x68] sm:$0xff] %vm1551, %v3293
    %3326 = vst.msk [vmem:[#allocation3 + $0x80] sm:$0xff] %vm1551, %v3294
    %3327 = vst.msk [vmem:[#allocation3 + $0x98] sm:$0xff] %vm1551, %v3295
    %3328 = vst.msk [vmem:[#allocation3 + $0xb0] sm:$0xff] %vm1551, %v3296
    %3329 = vst.msk [vmem:[#allocation3 + $0xc8] sm:$0xff] %vm1551, %v3297
    %3330 = vst.msk [vmem:[#allocation3 + $0xe0] sm:$0xff] %vm1551, %v3298
    %3331 = vst.msk [vmem:[#allocation3 + $0xf8] sm:$0xff] %vm1551, %v3299
    %3332 = vst.msk [vmem:[#allocation3 + $0x110] sm:$0xff] %vm1551, %v3300
    %3333 = vst.msk [vmem:[#allocation3 + $0x128] sm:$0xff] %vm1551, %v3301
    %3334 = vst.msk [vmem:[#allocation3 + $0x140] sm:$0xff] %vm1551, %v3302
    %3335 = vst.msk [vmem:[#allocation3 + $0x158] sm:$0xff] %vm1551, %v3303
    %3336 = vst.msk [vmem:[#allocation3 + $0x170] sm:$0xff] %vm1551, %v3304
    %v3337 = vld [vmem:[%s583] sm:$0xe]
    %v3338 = vld [vmem:[%s583 + $0x4] sm:$0x1]
    %v3339 = vld [vmem:[%s583 + $0x8] sm:$0xe]
    %v3340 = vld [vmem:[%s583 + $0xc] sm:$0x1]
    %v3341 = vld [vmem:[%s583 + $0x10] sm:$0xe]
    %v3342 = vld [vmem:[%s583 + $0x14] sm:$0x1]
    %v3343 = vld [vmem:[%s583 + $0x18] sm:$0xe]
    %v3344 = vld [vmem:[%s583 + $0x1c] sm:$0x1]
    %v3345 = vld [vmem:[%s583 + $0x20] sm:$0xe]
    %v3346 = vld [vmem:[%s583 + $0x24] sm:$0x1]
    %v3347 = vld [vmem:[%s583 + $0x28] sm:$0xe]
    %v3348 = vld [vmem:[%s583 + $0x2c] sm:$0x1]
    %v3349 = vld [vmem:[%s583 + $0x30] sm:$0xe]
    %v3350 = vld [vmem:[%s583 + $0x34] sm:$0x1]
    %v3351 = vld [vmem:[%s583 + $0x38] sm:$0xe]
    %v3352 = vld [vmem:[%s583 + $0x3c] sm:$0x1]
    %v3353 = vld [vmem:[%s583 + $0x50] sm:$0xe]
    %v3354 = vld [vmem:[%s583 + $0x54] sm:$0x1]
    %v3355 = vld [vmem:[%s583 + $0x58] sm:$0xe]
    %v3356 = vld [vmem:[%s583 + $0x5c] sm:$0x1]
    %v3357 = vld [vmem:[%s583 + $0x60] sm:$0xe]
    %v3358 = vld [vmem:[%s583 + $0x64] sm:$0x1]
    %v3359 = vld [vmem:[%s583 + $0x68] sm:$0xe]
    %v3360 = vld [vmem:[%s583 + $0x6c] sm:$0x1]
    %v3361 = vld [vmem:[%s583 + $0x70] sm:$0xe]
    %v3362 = vld [vmem:[%s583 + $0x74] sm:$0x1]
    %v3363 = vld [vmem:[%s583 + $0x78] sm:$0xe]
    %v3364 = vld [vmem:[%s583 + $0x7c] sm:$0x1]
    %v3365 = vld [vmem:[%s583 + $0x80] sm:$0xe]
    %v3366 = vld [vmem:[%s583 + $0x84] sm:$0x1]
    %v3367 = vld [vmem:[%s583 + $0x88] sm:$0xe]
    %v3368 = vld [vmem:[%s583 + $0x8c] sm:$0x1]
    %v3369 = vld [vmem:[%s583 + $0xa0] sm:$0xe]
    %v3370 = vld [vmem:[%s583 + $0xa4] sm:$0x1]
    %v3371 = vld [vmem:[%s583 + $0xa8] sm:$0xe]
    %v3372 = vld [vmem:[%s583 + $0xac] sm:$0x1]
    %v3373 = vld [vmem:[%s583 + $0xb0] sm:$0xe]
    %v3374 = vld [vmem:[%s583 + $0xb4] sm:$0x1]
    %v3375 = vld [vmem:[%s583 + $0xb8] sm:$0xe]
    %v3376 = vld [vmem:[%s583 + $0xbc] sm:$0x1]
    %v3377 = vld [vmem:[%s583 + $0xc0] sm:$0xe]
    %v3378 = vld [vmem:[%s583 + $0xc4] sm:$0x1]
    %v3379 = vld [vmem:[%s583 + $0xc8] sm:$0xe]
    %v3380 = vld [vmem:[%s583 + $0xcc] sm:$0x1]
    %v3381 = vld [vmem:[%s583 + $0xd0] sm:$0xe]
    %v3382 = vld [vmem:[%s583 + $0xd4] sm:$0x1]
    %v3383 = vld [vmem:[%s583 + $0xd8] sm:$0xe]
    %v3384 = vld [vmem:[%s583 + $0xdc] sm:$0x1]
    %v3385 = vld [vmem:[%s583 + $0xf0] sm:$0xe]
    %v3386 = vld [vmem:[%s583 + $0xf4] sm:$0x1]
    %v3387 = vld [vmem:[%s583 + $0xf8] sm:$0xe]
    %v3388 = vld [vmem:[%s583 + $0xfc] sm:$0x1]
    %v3389 = vld [vmem:[%s583 + $0x100] sm:$0xe]
    %v3390 = vld [vmem:[%s583 + $0x104] sm:$0x1]
    %v3391 = vld [vmem:[%s583 + $0x108] sm:$0xe]
    %v3392 = vld [vmem:[%s583 + $0x10c] sm:$0x1]
    %v3393 = vld [vmem:[%s583 + $0x110] sm:$0xe]
    %v3394 = vld [vmem:[%s583 + $0x114] sm:$0x1]
    %v3395 = vld [vmem:[%s583 + $0x118] sm:$0xe]
    %v3396 = vld [vmem:[%s583 + $0x11c] sm:$0x1]
    %v3397 = vld [vmem:[%s583 + $0x120] sm:$0xe]
    %v3398 = vld [vmem:[%s583 + $0x124] sm:$0x1]
    %v3399 = vld [vmem:[%s583 + $0x128] sm:$0xe]
    %v3400 = vld [vmem:[%s583 + $0x12c] sm:$0x1]
    %v3465 = vrot.slane %v3337, 5
    %v3466 = vrot.slane %v3465, 4
    %v3467 = vrot.slane %v3338, 5
    %v3468 = vsel %vm2326, %v3466, %v3467
    %v3469 = vrot.slane %v3339, 5
    %v3470 = vrot.slane %v3469, 4
    %v3471 = vrot.slane %v3340, 5
    %v3472 = vsel %vm2326, %v3470, %v3471
    %v3473 = vrot.slane %v3341, 5
    %v3474 = vrot.slane %v3473, 4
    %v3475 = vrot.slane %v3342, 5
    %v3476 = vsel %vm2326, %v3474, %v3475
    %v3477 = vrot.slane %v3343, 5
    %v3478 = vrot.slane %v3477, 4
    %v3479 = vrot.slane %v3344, 5
    %v3480 = vsel %vm2326, %v3478, %v3479
    %v3481 = vrot.slane %v3345, 5
    %v3482 = vrot.slane %v3481, 4
    %v3483 = vrot.slane %v3346, 5
    %v3484 = vsel %vm2326, %v3482, %v3483
    %v3485 = vrot.slane %v3347, 5
    %v3486 = vrot.slane %v3485, 4
    %v3487 = vrot.slane %v3348, 5
    %v3488 = vsel %vm2326, %v3486, %v3487
    %v3489 = vrot.slane %v3349, 5
    %v3490 = vrot.slane %v3489, 4
    %v3491 = vrot.slane %v3350, 5
    %v3492 = vsel %vm2326, %v3490, %v3491
    %v3493 = vrot.slane %v3351, 5
    %v3494 = vrot.slane %v3493, 4
    %v3495 = vrot.slane %v3352, 5
    %v3496 = vsel %vm2326, %v3494, %v3495
    %v3497 = vrot.slane %v3353, 5
    %v3498 = vrot.slane %v3497, 4
    %v3499 = vrot.slane %v3354, 5
    %v3500 = vsel %vm2326, %v3498, %v3499
    %v3501 = vrot.slane %v3355, 5
    %v3502 = vrot.slane %v3501, 4
    %v3503 = vrot.slane %v3356, 5
    %v3504 = vsel %vm2326, %v3502, %v3503
    %v3505 = vrot.slane %v3357, 5
    %v3506 = vrot.slane %v3505, 4
    %v3507 = vrot.slane %v3358, 5
    %v3508 = vsel %vm2326, %v3506, %v3507
    %v3509 = vrot.slane %v3359, 5
    %v3510 = vrot.slane %v3509, 4
    %v3511 = vrot.slane %v3360, 5
    %v3512 = vsel %vm2326, %v3510, %v3511
    %v3513 = vrot.slane %v3361, 5
    %v3514 = vrot.slane %v3513, 4
    %v3515 = vrot.slane %v3362, 5
    %v3516 = vsel %vm2326, %v3514, %v3515
    %v3517 = vrot.slane %v3363, 5
    %v3518 = vrot.slane %v3517, 4
    %v3519 = vrot.slane %v3364, 5
    %v3520 = vsel %vm2326, %v3518, %v3519
    %v3521 = vrot.slane %v3365, 5
    %v3522 = vrot.slane %v3521, 4
    %v3523 = vrot.slane %v3366, 5
    %v3524 = vsel %vm2326, %v3522, %v3523
    %v3525 = vrot.slane %v3367, 5
    %v3526 = vrot.slane %v3525, 4
    %v3527 = vrot.slane %v3368, 5
    %v3528 = vsel %vm2326, %v3526, %v3527
    %v3529 = vrot.slane %v3369, 5
    %v3530 = vrot.slane %v3529, 4
    %v3531 = vrot.slane %v3370, 5
    %v3532 = vsel %vm2326, %v3530, %v3531
    %v3533 = vrot.slane %v3371, 5
    %v3534 = vrot.slane %v3533, 4
    %v3535 = vrot.slane %v3372, 5
    %v3536 = vsel %vm2326, %v3534, %v3535
    %v3537 = vrot.slane %v3373, 5
    %v3538 = vrot.slane %v3537, 4
    %v3539 = vrot.slane %v3374, 5
    %v3540 = vsel %vm2326, %v3538, %v3539
    %v3541 = vrot.slane %v3375, 5
    %v3542 = vrot.slane %v3541, 4
    %v3543 = vrot.slane %v3376, 5
    %v3544 = vsel %vm2326, %v3542, %v3543
    %v3545 = vrot.slane %v3377, 5
    %v3546 = vrot.slane %v3545, 4
    %v3547 = vrot.slane %v3378, 5
    %v3548 = vsel %vm2326, %v3546, %v3547
    %v3549 = vrot.slane %v3379, 5
    %v3550 = vrot.slane %v3549, 4
    %v3551 = vrot.slane %v3380, 5
    %v3552 = vsel %vm2326, %v3550, %v3551
    %v3553 = vrot.slane %v3381, 5
    %v3554 = vrot.slane %v3553, 4
    %v3555 = vrot.slane %v3382, 5
    %v3556 = vsel %vm2326, %v3554, %v3555
    %v3557 = vrot.slane %v3383, 5
    %v3558 = vrot.slane %v3557, 4
    %v3559 = vrot.slane %v3384, 5
    %v3560 = vsel %vm2326, %v3558, %v3559
    %v3561 = vrot.slane %v3385, 5
    %v3562 = vrot.slane %v3561, 4
    %v3563 = vrot.slane %v3386, 5
    %v3564 = vsel %vm2326, %v3562, %v3563
    %v3565 = vrot.slane %v3387, 5
    %v3566 = vrot.slane %v3565, 4
    %v3567 = vrot.slane %v3388, 5
    %v3568 = vsel %vm2326, %v3566, %v3567
    %v3569 = vrot.slane %v3389, 5
    %v3570 = vrot.slane %v3569, 4
    %v3571 = vrot.slane %v3390, 5
    %v3572 = vsel %vm2326, %v3570, %v3571
    %v3573 = vrot.slane %v3391, 5
    %v3574 = vrot.slane %v3573, 4
    %v3575 = vrot.slane %v3392, 5
    %v3576 = vsel %vm2326, %v3574, %v3575
    %v3577 = vrot.slane %v3393, 5
    %v3578 = vrot.slane %v3577, 4
    %v3579 = vrot.slane %v3394, 5
    %v3580 = vsel %vm2326, %v3578, %v3579
    %v3581 = vrot.slane %v3395, 5
    %v3582 = vrot.slane %v3581, 4
    %v3583 = vrot.slane %v3396, 5
    %v3584 = vsel %vm2326, %v3582, %v3583
    %v3585 = vrot.slane %v3397, 5
    %v3586 = vrot.slane %v3585, 4
    %v3587 = vrot.slane %v3398, 5
    %v3588 = vsel %vm2326, %v3586, %v3587
    %v3589 = vrot.slane %v3399, 5
    %v3590 = vrot.slane %v3589, 4
    %v3591 = vrot.slane %v3400, 5
    %v3592 = vsel %vm2326, %v3590, %v3591
    %v3593 = vunpack.c.l.b16 %v3468
    %v3594 = vunpack.c.l.b16 %v3472
    %v3595 = vunpack.c.l.b16 %v3476
    %v3596 = vunpack.c.l.b16 %v3480
    %v3597 = vunpack.c.l.b16 %v3484
    %v3598 = vunpack.c.l.b16 %v3488
    %v3599 = vunpack.c.l.b16 %v3492
    %v3600 = vunpack.c.l.b16 %v3496
    %v3601 = vunpack.c.l.b16 %v3500
    %v3602 = vunpack.c.l.b16 %v3504
    %v3603 = vunpack.c.l.b16 %v3508
    %v3604 = vunpack.c.l.b16 %v3512
    %v3605 = vunpack.c.l.b16 %v3516
    %v3606 = vunpack.c.l.b16 %v3520
    %v3607 = vunpack.c.l.b16 %v3524
    %v3608 = vunpack.c.l.b16 %v3528
    %v3609 = vunpack.c.l.b16 %v3532
    %v3610 = vunpack.c.l.b16 %v3536
    %v3611 = vunpack.c.l.b16 %v3540
    %v3612 = vunpack.c.l.b16 %v3544
    %v3613 = vunpack.c.l.b16 %v3548
    %v3614 = vunpack.c.l.b16 %v3552
    %v3615 = vunpack.c.l.b16 %v3556
    %v3616 = vunpack.c.l.b16 %v3560
    %v3617 = vunpack.c.l.b16 %v3564
    %v3618 = vunpack.c.l.b16 %v3568
    %v3619 = vunpack.c.l.b16 %v3572
    %v3620 = vunpack.c.l.b16 %v3576
    %v3621 = vunpack.c.l.b16 %v3580
    %v3622 = vunpack.c.l.b16 %v3584
    %v3623 = vunpack.c.l.b16 %v3588
    %v3624 = vunpack.c.l.b16 %v3592
    %v3625 = vpack.c.b16 %v3594, %v3593
    %v3626 = vpack.c.b16 %v3596, %v3595
    %v3627 = vpack.c.b16 %v3598, %v3597
    %v3628 = vpack.c.b16 %v3600, %v3599
    %v3629 = vpack.c.b16 %v3602, %v3601
    %v3630 = vpack.c.b16 %v3604, %v3603
    %v3631 = vpack.c.b16 %v3606, %v3605
    %v3632 = vpack.c.b16 %v3608, %v3607
    %v3633 = vpack.c.b16 %v3610, %v3609
    %v3634 = vpack.c.b16 %v3612, %v3611
    %v3635 = vpack.c.b16 %v3614, %v3613
    %v3636 = vpack.c.b16 %v3616, %v3615
    %v3637 = vpack.c.b16 %v3618, %v3617
    %v3638 = vpack.c.b16 %v3620, %v3619
    %v3639 = vpack.c.b16 %v3622, %v3621
    %v3640 = vpack.c.b16 %v3624, %v3623
    %3641 = vrot.lane.b32.xlu0 %v3625, 32
    %v3642 = vpop.permute.xlu0 %3641
    %3643 = vrot.lane.b32.xlu0 %v3626, 32
    %v3644 = vpop.permute.xlu0 %3643
    %3645 = vrot.lane.b32.xlu0 %v3627, 32
    %v3646 = vpop.permute.xlu0 %3645
    %3647 = vrot.lane.b32.xlu0 %v3628, 32
    %v3648 = vpop.permute.xlu0 %3647
    %3649 = vrot.lane.b32.xlu0 %v3629, 32
    %v3650 = vpop.permute.xlu0 %3649
    %3651 = vrot.lane.b32.xlu0 %v3630, 32
    %v3652 = vpop.permute.xlu0 %3651
    %3653 = vrot.lane.b32.xlu0 %v3631, 32
    %v3654 = vpop.permute.xlu0 %3653
    %3655 = vrot.lane.b32.xlu0 %v3632, 32
    %v3656 = vpop.permute.xlu0 %3655
    %3657 = vrot.lane.b32.xlu0 %v3633, 32
    %v3658 = vpop.permute.xlu0 %3657
    %3659 = vrot.lane.b32.xlu0 %v3634, 32
    %v3660 = vpop.permute.xlu0 %3659
    %3661 = vrot.lane.b32.xlu0 %v3635, 32
    %v3662 = vpop.permute.xlu0 %3661
    %3663 = vrot.lane.b32.xlu0 %v3636, 32
    %v3664 = vpop.permute.xlu0 %3663
    %3665 = vrot.lane.b32.xlu0 %v3637, 32
    %v3666 = vpop.permute.xlu0 %3665
    %3667 = vrot.lane.b32.xlu0 %v3638, 32
    %v3668 = vpop.permute.xlu0 %3667
    %3669 = vrot.lane.b32.xlu0 %v3639, 32
    %v3670 = vpop.permute.xlu0 %3669
    %3671 = vrot.lane.b32.xlu0 %v3640, 32
    %v3672 = vpop.permute.xlu0 %3671
    %3689 = vst.msk [vmem:[#allocation3 + $0x8] sm:$0xff] %vm2179, %v3642
    %3690 = vst.msk [vmem:[#allocation3 + $0x20] sm:$0xff] %vm2179, %v3644
    %3691 = vst.msk [vmem:[#allocation3 + $0x38] sm:$0xff] %vm2179, %v3646
    %3692 = vst.msk [vmem:[#allocation3 + $0x50] sm:$0xff] %vm2179, %v3648
    %3693 = vst.msk [vmem:[#allocation3 + $0x68] sm:$0xff] %vm2179, %v3650
    %3694 = vst.msk [vmem:[#allocation3 + $0x80] sm:$0xff] %vm2179, %v3652
    %3695 = vst.msk [vmem:[#allocation3 + $0x98] sm:$0xff] %vm2179, %v3654
    %3696 = vst.msk [vmem:[#allocation3 + $0xb0] sm:$0xff] %vm2179, %v3656
    %3697 = vst.msk [vmem:[#allocation3 + $0xc8] sm:$0xff] %vm2179, %v3658
    %3698 = vst.msk [vmem:[#allocation3 + $0xe0] sm:$0xff] %vm2179, %v3660
    %3699 = vst.msk [vmem:[#allocation3 + $0xf8] sm:$0xff] %vm2179, %v3662
    %3700 = vst.msk [vmem:[#allocation3 + $0x110] sm:$0xff] %vm2179, %v3664
    %3701 = vst.msk [vmem:[#allocation3 + $0x128] sm:$0xff] %vm2179, %v3666
    %3702 = vst.msk [vmem:[#allocation3 + $0x140] sm:$0xff] %vm2179, %v3668
    %3703 = vst.msk [vmem:[#allocation3 + $0x158] sm:$0xff] %vm2179, %v3670
    %3704 = vst.msk [vmem:[#allocation3 + $0x170] sm:$0xff] %vm2179, %v3672
    %s3705 = scalar_lea.vmem [#allocation2], 16
    %v3706 = vld [vmem:[%s3705] sm:$0xf]
    %v3707 = vld [vmem:[%s3705 + $0x8] sm:$0xf]
    %v3708 = vld [vmem:[%s3705 + $0x10] sm:$0xf]
    %v3709 = vld [vmem:[%s3705 + $0x18] sm:$0xf]
    %v3710 = vld [vmem:[%s3705 + $0x20] sm:$0xf]
    %v3711 = vld [vmem:[%s3705 + $0x28] sm:$0xf]
    %v3712 = vld [vmem:[%s3705 + $0x30] sm:$0xf]
    %v3713 = vld [vmem:[%s3705 + $0x38] sm:$0xf]
    %v3714 = vld [vmem:[%s3705 + $0x50] sm:$0xf]
    %v3715 = vld [vmem:[%s3705 + $0x58] sm:$0xf]
    %v3716 = vld [vmem:[%s3705 + $0x60] sm:$0xf]
    %v3717 = vld [vmem:[%s3705 + $0x68] sm:$0xf]
    %v3718 = vld [vmem:[%s3705 + $0x70] sm:$0xf]
    %v3719 = vld [vmem:[%s3705 + $0x78] sm:$0xf]
    %v3720 = vld [vmem:[%s3705 + $0x80] sm:$0xf]
    %v3721 = vld [vmem:[%s3705 + $0x88] sm:$0xf]
    %v3722 = vld [vmem:[%s3705 + $0xa0] sm:$0xf]
    %v3723 = vld [vmem:[%s3705 + $0xa8] sm:$0xf]
    %v3724 = vld [vmem:[%s3705 + $0xb0] sm:$0xf]
    %v3725 = vld [vmem:[%s3705 + $0xb8] sm:$0xf]
    %v3726 = vld [vmem:[%s3705 + $0xc0] sm:$0xf]
    %v3727 = vld [vmem:[%s3705 + $0xc8] sm:$0xf]
    %v3728 = vld [vmem:[%s3705 + $0xd0] sm:$0xf]
    %v3729 = vld [vmem:[%s3705 + $0xd8] sm:$0xf]
    %v3730 = vld [vmem:[%s3705 + $0xf0] sm:$0xf]
    %v3731 = vld [vmem:[%s3705 + $0xf8] sm:$0xf]
    %v3732 = vld [vmem:[%s3705 + $0x100] sm:$0xf]
    %v3733 = vld [vmem:[%s3705 + $0x108] sm:$0xf]
    %v3734 = vld [vmem:[%s3705 + $0x110] sm:$0xf]
    %v3735 = vld [vmem:[%s3705 + $0x118] sm:$0xf]
    %v3736 = vld [vmem:[%s3705 + $0x120] sm:$0xf]
    %v3737 = vld [vmem:[%s3705 + $0x128] sm:$0xf]
    %v3770 = vunpack.c.l.b16 %v3706
    %v3771 = vunpack.c.l.b16 %v3707
    %v3772 = vunpack.c.l.b16 %v3708
    %v3773 = vunpack.c.l.b16 %v3709
    %v3774 = vunpack.c.l.b16 %v3710
    %v3775 = vunpack.c.l.b16 %v3711
    %v3776 = vunpack.c.l.b16 %v3712
    %v3777 = vunpack.c.l.b16 %v3713
    %v3778 = vunpack.c.l.b16 %v3714
    %v3779 = vunpack.c.l.b16 %v3715
    %v3780 = vunpack.c.l.b16 %v3716
    %v3781 = vunpack.c.l.b16 %v3717
    %v3782 = vunpack.c.l.b16 %v3718
    %v3783 = vunpack.c.l.b16 %v3719
    %v3784 = vunpack.c.l.b16 %v3720
    %v3785 = vunpack.c.l.b16 %v3721
    %v3786 = vunpack.c.l.b16 %v3722
    %v3787 = vunpack.c.l.b16 %v3723
    %v3788 = vunpack.c.l.b16 %v3724
    %v3789 = vunpack.c.l.b16 %v3725
    %v3790 = vunpack.c.l.b16 %v3726
    %v3791 = vunpack.c.l.b16 %v3727
    %v3792 = vunpack.c.l.b16 %v3728
    %v3793 = vunpack.c.l.b16 %v3729
    %v3794 = vunpack.c.l.b16 %v3730
    %v3795 = vunpack.c.l.b16 %v3731
    %v3796 = vunpack.c.l.b16 %v3732
    %v3797 = vunpack.c.l.b16 %v3733
    %v3798 = vunpack.c.l.b16 %v3734
    %v3799 = vunpack.c.l.b16 %v3735
    %v3800 = vunpack.c.l.b16 %v3736
    %v3801 = vunpack.c.l.b16 %v3737
    %v3802 = vpack.c.b16 %v3771, %v3770
    %v3803 = vpack.c.b16 %v3773, %v3772
    %v3804 = vpack.c.b16 %v3775, %v3774
    %v3805 = vpack.c.b16 %v3777, %v3776
    %v3806 = vpack.c.b16 %v3779, %v3778
    %v3807 = vpack.c.b16 %v3781, %v3780
    %v3808 = vpack.c.b16 %v3783, %v3782
    %v3809 = vpack.c.b16 %v3785, %v3784
    %v3810 = vpack.c.b16 %v3787, %v3786
    %v3811 = vpack.c.b16 %v3789, %v3788
    %v3812 = vpack.c.b16 %v3791, %v3790
    %v3813 = vpack.c.b16 %v3793, %v3792
    %v3814 = vpack.c.b16 %v3795, %v3794
    %v3815 = vpack.c.b16 %v3797, %v3796
    %v3816 = vpack.c.b16 %v3799, %v3798
    %v3817 = vpack.c.b16 %v3801, %v3800
    %3818 = vrot.lane.b32.xlu0 %v3802, 64
    %v3819 = vpop.permute.xlu0 %3818
    %3820 = vrot.lane.b32.xlu0 %v3803, 64
    %v3821 = vpop.permute.xlu0 %3820
    %3822 = vrot.lane.b32.xlu0 %v3804, 64
    %v3823 = vpop.permute.xlu0 %3822
    %3824 = vrot.lane.b32.xlu0 %v3805, 64
    %v3825 = vpop.permute.xlu0 %3824
    %3826 = vrot.lane.b32.xlu0 %v3806, 64
    %v3827 = vpop.permute.xlu0 %3826
    %3828 = vrot.lane.b32.xlu0 %v3807, 64
    %v3829 = vpop.permute.xlu0 %3828
    %3830 = vrot.lane.b32.xlu0 %v3808, 64
    %v3831 = vpop.permute.xlu0 %3830
    %3832 = vrot.lane.b32.xlu0 %v3809, 64
    %v3833 = vpop.permute.xlu0 %3832
    %3834 = vrot.lane.b32.xlu0 %v3810, 64
    %v3835 = vpop.permute.xlu0 %3834
    %3836 = vrot.lane.b32.xlu0 %v3811, 64
    %v3837 = vpop.permute.xlu0 %3836
    %3838 = vrot.lane.b32.xlu0 %v3812, 64
    %v3839 = vpop.permute.xlu0 %3838
    %3840 = vrot.lane.b32.xlu0 %v3813, 64
    %v3841 = vpop.permute.xlu0 %3840
    %3842 = vrot.lane.b32.xlu0 %v3814, 64
    %v3843 = vpop.permute.xlu0 %3842
    %3844 = vrot.lane.b32.xlu0 %v3815, 64
    %v3845 = vpop.permute.xlu0 %3844
    %3846 = vrot.lane.b32.xlu0 %v3816, 64
    %v3847 = vpop.permute.xlu0 %3846
    %3848 = vrot.lane.b32.xlu0 %v3817, 64
    %v3849 = vpop.permute.xlu0 %3848
    %3866 = vst.msk [vmem:[#allocation3 + $0x8] sm:$0xff] %vm2551, %v3819
    %3867 = vst.msk [vmem:[#allocation3 + $0x20] sm:$0xff] %vm2551, %v3821
    %3868 = vst.msk [vmem:[#allocation3 + $0x38] sm:$0xff] %vm2551, %v3823
    %3869 = vst.msk [vmem:[#allocation3 + $0x50] sm:$0xff] %vm2551, %v3825
    %3870 = vst.msk [vmem:[#allocation3 + $0x68] sm:$0xff] %vm2551, %v3827
    %3871 = vst.msk [vmem:[#allocation3 + $0x80] sm:$0xff] %vm2551, %v3829
    %3872 = vst.msk [vmem:[#allocation3 + $0x98] sm:$0xff] %vm2551, %v3831
    %3873 = vst.msk [vmem:[#allocation3 + $0xb0] sm:$0xff] %vm2551, %v3833
    %3874 = vst.msk [vmem:[#allocation3 + $0xc8] sm:$0xff] %vm2551, %v3835
    %3875 = vst.msk [vmem:[#allocation3 + $0xe0] sm:$0xff] %vm2551, %v3837
    %3876 = vst.msk [vmem:[#allocation3 + $0xf8] sm:$0xff] %vm2551, %v3839
    %3877 = vst.msk [vmem:[#allocation3 + $0x110] sm:$0xff] %vm2551, %v3841
    %3878 = vst.msk [vmem:[#allocation3 + $0x128] sm:$0xff] %vm2551, %v3843
    %3879 = vst.msk [vmem:[#allocation3 + $0x140] sm:$0xff] %vm2551, %v3845
    %3880 = vst.msk [vmem:[#allocation3 + $0x158] sm:$0xff] %vm2551, %v3847
    %3881 = vst.msk [vmem:[#allocation3 + $0x170] sm:$0xff] %vm2551, %v3849
    %v3882 = vld [vmem:[%s3705] sm:$0xf]
    %v3883 = vld [vmem:[%s3705 + $0x4] sm:$0x1]
    %v3884 = vld [vmem:[%s3705 + $0x8] sm:$0xf]
    %v3885 = vld [vmem:[%s3705 + $0xc] sm:$0x1]
    %v3886 = vld [vmem:[%s3705 + $0x10] sm:$0xf]
    %v3887 = vld [vmem:[%s3705 + $0x14] sm:$0x1]
    %v3888 = vld [vmem:[%s3705 + $0x18] sm:$0xf]
    %v3889 = vld [vmem:[%s3705 + $0x1c] sm:$0x1]
    %v3890 = vld [vmem:[%s3705 + $0x20] sm:$0xf]
    %v3891 = vld [vmem:[%s3705 + $0x24] sm:$0x1]
    %v3892 = vld [vmem:[%s3705 + $0x28] sm:$0xf]
    %v3893 = vld [vmem:[%s3705 + $0x2c] sm:$0x1]
    %v3894 = vld [vmem:[%s3705 + $0x30] sm:$0xf]
    %v3895 = vld [vmem:[%s3705 + $0x34] sm:$0x1]
    %v3896 = vld [vmem:[%s3705 + $0x38] sm:$0xf]
    %v3897 = vld [vmem:[%s3705 + $0x3c] sm:$0x1]
    %v3898 = vld [vmem:[%s3705 + $0x50] sm:$0xf]
    %v3899 = vld [vmem:[%s3705 + $0x54] sm:$0x1]
    %v3900 = vld [vmem:[%s3705 + $0x58] sm:$0xf]
    %v3901 = vld [vmem:[%s3705 + $0x5c] sm:$0x1]
    %v3902 = vld [vmem:[%s3705 + $0x60] sm:$0xf]
    %v3903 = vld [vmem:[%s3705 + $0x64] sm:$0x1]
    %v3904 = vld [vmem:[%s3705 + $0x68] sm:$0xf]
    %v3905 = vld [vmem:[%s3705 + $0x6c] sm:$0x1]
    %v3906 = vld [vmem:[%s3705 + $0x70] sm:$0xf]
    %v3907 = vld [vmem:[%s3705 + $0x74] sm:$0x1]
    %v3908 = vld [vmem:[%s3705 + $0x78] sm:$0xf]
    %v3909 = vld [vmem:[%s3705 + $0x7c] sm:$0x1]
    %v3910 = vld [vmem:[%s3705 + $0x80] sm:$0xf]
    %v3911 = vld [vmem:[%s3705 + $0x84] sm:$0x1]
    %v3912 = vld [vmem:[%s3705 + $0x88] sm:$0xf]
    %v3913 = vld [vmem:[%s3705 + $0x8c] sm:$0x1]
    %v3914 = vld [vmem:[%s3705 + $0xa0] sm:$0xf]
    %v3915 = vld [vmem:[%s3705 + $0xa4] sm:$0x1]
    %v3916 = vld [vmem:[%s3705 + $0xa8] sm:$0xf]
    %v3917 = vld [vmem:[%s3705 + $0xac] sm:$0x1]
    %v3918 = vld [vmem:[%s3705 + $0xb0] sm:$0xf]
    %v3919 = vld [vmem:[%s3705 + $0xb4] sm:$0x1]
    %v3920 = vld [vmem:[%s3705 + $0xb8] sm:$0xf]
    %v3921 = vld [vmem:[%s3705 + $0xbc] sm:$0x1]
    %v3922 = vld [vmem:[%s3705 + $0xc0] sm:$0xf]
    %v3923 = vld [vmem:[%s3705 + $0xc4] sm:$0x1]
    %v3924 = vld [vmem:[%s3705 + $0xc8] sm:$0xf]
    %v3925 = vld [vmem:[%s3705 + $0xcc] sm:$0x1]
    %v3926 = vld [vmem:[%s3705 + $0xd0] sm:$0xf]
    %v3927 = vld [vmem:[%s3705 + $0xd4] sm:$0x1]
    %v3928 = vld [vmem:[%s3705 + $0xd8] sm:$0xf]
    %v3929 = vld [vmem:[%s3705 + $0xdc] sm:$0x1]
    %v3930 = vld [vmem:[%s3705 + $0xf0] sm:$0xf]
    %v3931 = vld [vmem:[%s3705 + $0xf4] sm:$0x1]
    %v3932 = vld [vmem:[%s3705 + $0xf8] sm:$0xf]
    %v3933 = vld [vmem:[%s3705 + $0xfc] sm:$0x1]
    %v3934 = vld [vmem:[%s3705 + $0x100] sm:$0xf]
    %v3935 = vld [vmem:[%s3705 + $0x104] sm:$0x1]
    %v3936 = vld [vmem:[%s3705 + $0x108] sm:$0xf]
    %v3937 = vld [vmem:[%s3705 + $0x10c] sm:$0x1]
    %v3938 = vld [vmem:[%s3705 + $0x110] sm:$0xf]
    %v3939 = vld [vmem:[%s3705 + $0x114] sm:$0x1]
    %v3940 = vld [vmem:[%s3705 + $0x118] sm:$0xf]
    %v3941 = vld [vmem:[%s3705 + $0x11c] sm:$0x1]
    %v3942 = vld [vmem:[%s3705 + $0x120] sm:$0xf]
    %v3943 = vld [vmem:[%s3705 + $0x124] sm:$0x1]
    %v3944 = vld [vmem:[%s3705 + $0x128] sm:$0xf]
    %v3945 = vld [vmem:[%s3705 + $0x12c] sm:$0x1]
    %v3947 = vshrl.u32 %v3882, 16
    %v3949 = vrot.slane %v3947, 4
    %v3950 = vshll.u32 %v3882, 16
    %v3952 = vrot.slane %v3950, 5
    %v3953 = vor.u32 %v3949, %v3952
    %v3954 = vrot.slane %v3953, 4
    %v3956 = vshll.u32 %v3883, 16
    %v3958 = vrot.slane %v3956, 5
    %v3959 = vsel %vm1634, %v3954, %v3958
    %v3961 = vshrl.u32 %v3884, 16
    %v3963 = vrot.slane %v3961, 4
    %v3964 = vshll.u32 %v3884, 16
    %v3966 = vrot.slane %v3964, 5
    %v3967 = vor.u32 %v3963, %v3966
    %v3968 = vrot.slane %v3967, 4
    %v3970 = vshll.u32 %v3885, 16
    %v3972 = vrot.slane %v3970, 5
    %v3973 = vsel %vm1634, %v3968, %v3972
    %v3975 = vshrl.u32 %v3886, 16
    %v3977 = vrot.slane %v3975, 4
    %v3978 = vshll.u32 %v3886, 16
    %v3980 = vrot.slane %v3978, 5
    %v3981 = vor.u32 %v3977, %v3980
    %v3982 = vrot.slane %v3981, 4
    %v3984 = vshll.u32 %v3887, 16
    %v3986 = vrot.slane %v3984, 5
    %v3987 = vsel %vm1634, %v3982, %v3986
    %v3989 = vshrl.u32 %v3888, 16
    %v3991 = vrot.slane %v3989, 4
    %v3992 = vshll.u32 %v3888, 16
    %v3994 = vrot.slane %v3992, 5
    %v3995 = vor.u32 %v3991, %v3994
    %v3996 = vrot.slane %v3995, 4
    %v3998 = vshll.u32 %v3889, 16
    %v4000 = vrot.slane %v3998, 5
    %v4001 = vsel %vm1634, %v3996, %v4000
    %v4003 = vshrl.u32 %v3890, 16
    %v4005 = vrot.slane %v4003, 4
    %v4006 = vshll.u32 %v3890, 16
    %v4008 = vrot.slane %v4006, 5
    %v4009 = vor.u32 %v4005, %v4008
    %v4010 = vrot.slane %v4009, 4
    %v4012 = vshll.u32 %v3891, 16
    %v4014 = vrot.slane %v4012, 5
    %v4015 = vsel %vm1634, %v4010, %v4014
    %v4017 = vshrl.u32 %v3892, 16
    %v4019 = vrot.slane %v4017, 4
    %v4020 = vshll.u32 %v3892, 16
    %v4022 = vrot.slane %v4020, 5
    %v4023 = vor.u32 %v4019, %v4022
    %v4024 = vrot.slane %v4023, 4
    %v4026 = vshll.u32 %v3893, 16
    %v4028 = vrot.slane %v4026, 5
    %v4029 = vsel %vm1634, %v4024, %v4028
    %v4031 = vshrl.u32 %v3894, 16
    %v4033 = vrot.slane %v4031, 4
    %v4034 = vshll.u32 %v3894, 16
    %v4036 = vrot.slane %v4034, 5
    %v4037 = vor.u32 %v4033, %v4036
    %v4038 = vrot.slane %v4037, 4
    %v4040 = vshll.u32 %v3895, 16
    %v4042 = vrot.slane %v4040, 5
    %v4043 = vsel %vm1634, %v4038, %v4042
    %v4045 = vshrl.u32 %v3896, 16
    %v4047 = vrot.slane %v4045, 4
    %v4048 = vshll.u32 %v3896, 16
    %v4050 = vrot.slane %v4048, 5
    %v4051 = vor.u32 %v4047, %v4050
    %v4052 = vrot.slane %v4051, 4
    %v4054 = vshll.u32 %v3897, 16
    %v4056 = vrot.slane %v4054, 5
    %v4057 = vsel %vm1634, %v4052, %v4056
    %v4059 = vshrl.u32 %v3898, 16
    %v4061 = vrot.slane %v4059, 4
    %v4062 = vshll.u32 %v3898, 16
    %v4064 = vrot.slane %v4062, 5
    %v4065 = vor.u32 %v4061, %v4064
    %v4066 = vrot.slane %v4065, 4
    %v4068 = vshll.u32 %v3899, 16
    %v4070 = vrot.slane %v4068, 5
    %v4071 = vsel %vm1634, %v4066, %v4070
    %v4073 = vshrl.u32 %v3900, 16
    %v4075 = vrot.slane %v4073, 4
    %v4076 = vshll.u32 %v3900, 16
    %v4078 = vrot.slane %v4076, 5
    %v4079 = vor.u32 %v4075, %v4078
    %v4080 = vrot.slane %v4079, 4
    %v4082 = vshll.u32 %v3901, 16
    %v4084 = vrot.slane %v4082, 5
    %v4085 = vsel %vm1634, %v4080, %v4084
    %v4087 = vshrl.u32 %v3902, 16
    %v4089 = vrot.slane %v4087, 4
    %v4090 = vshll.u32 %v3902, 16
    %v4092 = vrot.slane %v4090, 5
    %v4093 = vor.u32 %v4089, %v4092
    %v4094 = vrot.slane %v4093, 4
    %v4096 = vshll.u32 %v3903, 16
    %v4098 = vrot.slane %v4096, 5
    %v4099 = vsel %vm1634, %v4094, %v4098
    %v4101 = vshrl.u32 %v3904, 16
    %v4103 = vrot.slane %v4101, 4
    %v4104 = vshll.u32 %v3904, 16
    %v4106 = vrot.slane %v4104, 5
    %v4107 = vor.u32 %v4103, %v4106
    %v4108 = vrot.slane %v4107, 4
    %v4110 = vshll.u32 %v3905, 16
    %v4112 = vrot.slane %v4110, 5
    %v4113 = vsel %vm1634, %v4108, %v4112
    %v4115 = vshrl.u32 %v3906, 16
    %v4117 = vrot.slane %v4115, 4
    %v4118 = vshll.u32 %v3906, 16
    %v4120 = vrot.slane %v4118, 5
    %v4121 = vor.u32 %v4117, %v4120
    %v4122 = vrot.slane %v4121, 4
    %v4124 = vshll.u32 %v3907, 16
    %v4126 = vrot.slane %v4124, 5
    %v4127 = vsel %vm1634, %v4122, %v4126
    %v4129 = vshrl.u32 %v3908, 16
    %v4131 = vrot.slane %v4129, 4
    %v4132 = vshll.u32 %v3908, 16
    %v4134 = vrot.slane %v4132, 5
    %v4135 = vor.u32 %v4131, %v4134
    %v4136 = vrot.slane %v4135, 4
    %v4138 = vshll.u32 %v3909, 16
    %v4140 = vrot.slane %v4138, 5
    %v4141 = vsel %vm1634, %v4136, %v4140
    %v4143 = vshrl.u32 %v3910, 16
    %v4145 = vrot.slane %v4143, 4
    %v4146 = vshll.u32 %v3910, 16
    %v4148 = vrot.slane %v4146, 5
    %v4149 = vor.u32 %v4145, %v4148
    %v4150 = vrot.slane %v4149, 4
    %v4152 = vshll.u32 %v3911, 16
    %v4154 = vrot.slane %v4152, 5
    %v4155 = vsel %vm1634, %v4150, %v4154
    %v4157 = vshrl.u32 %v3912, 16
    %v4159 = vrot.slane %v4157, 4
    %v4160 = vshll.u32 %v3912, 16
    %v4162 = vrot.slane %v4160, 5
    %v4163 = vor.u32 %v4159, %v4162
    %v4164 = vrot.slane %v4163, 4
    %v4166 = vshll.u32 %v3913, 16
    %v4168 = vrot.slane %v4166, 5
    %v4169 = vsel %vm1634, %v4164, %v4168
    %v4171 = vshrl.u32 %v3914, 16
    %v4173 = vrot.slane %v4171, 4
    %v4174 = vshll.u32 %v3914, 16
    %v4176 = vrot.slane %v4174, 5
    %v4177 = vor.u32 %v4173, %v4176
    %v4178 = vrot.slane %v4177, 4
    %v4180 = vshll.u32 %v3915, 16
    %v4182 = vrot.slane %v4180, 5
    %v4183 = vsel %vm1634, %v4178, %v4182
    %v4185 = vshrl.u32 %v3916, 16
    %v4187 = vrot.slane %v4185, 4
    %v4188 = vshll.u32 %v3916, 16
    %v4190 = vrot.slane %v4188, 5
    %v4191 = vor.u32 %v4187, %v4190
    %v4192 = vrot.slane %v4191, 4
    %v4194 = vshll.u32 %v3917, 16
    %v4196 = vrot.slane %v4194, 5
    %v4197 = vsel %vm1634, %v4192, %v4196
    %v4199 = vshrl.u32 %v3918, 16
    %v4201 = vrot.slane %v4199, 4
    %v4202 = vshll.u32 %v3918, 16
    %v4204 = vrot.slane %v4202, 5
    %v4205 = vor.u32 %v4201, %v4204
    %v4206 = vrot.slane %v4205, 4
    %v4208 = vshll.u32 %v3919, 16
    %v4210 = vrot.slane %v4208, 5
    %v4211 = vsel %vm1634, %v4206, %v4210
    %v4213 = vshrl.u32 %v3920, 16
    %v4215 = vrot.slane %v4213, 4
    %v4216 = vshll.u32 %v3920, 16
    %v4218 = vrot.slane %v4216, 5
    %v4219 = vor.u32 %v4215, %v4218
    %v4220 = vrot.slane %v4219, 4
    %v4222 = vshll.u32 %v3921, 16
    %v4224 = vrot.slane %v4222, 5
    %v4225 = vsel %vm1634, %v4220, %v4224
    %v4227 = vshrl.u32 %v3922, 16
    %v4229 = vrot.slane %v4227, 4
    %v4230 = vshll.u32 %v3922, 16
    %v4232 = vrot.slane %v4230, 5
    %v4233 = vor.u32 %v4229, %v4232
    %v4234 = vrot.slane %v4233, 4
    %v4236 = vshll.u32 %v3923, 16
    %v4238 = vrot.slane %v4236, 5
    %v4239 = vsel %vm1634, %v4234, %v4238
    %v4241 = vshrl.u32 %v3924, 16
    %v4243 = vrot.slane %v4241, 4
    %v4244 = vshll.u32 %v3924, 16
    %v4246 = vrot.slane %v4244, 5
    %v4247 = vor.u32 %v4243, %v4246
    %v4248 = vrot.slane %v4247, 4
    %v4250 = vshll.u32 %v3925, 16
    %v4252 = vrot.slane %v4250, 5
    %v4253 = vsel %vm1634, %v4248, %v4252
    %v4255 = vshrl.u32 %v3926, 16
    %v4257 = vrot.slane %v4255, 4
    %v4258 = vshll.u32 %v3926, 16
    %v4260 = vrot.slane %v4258, 5
    %v4261 = vor.u32 %v4257, %v4260
    %v4262 = vrot.slane %v4261, 4
    %v4264 = vshll.u32 %v3927, 16
    %v4266 = vrot.slane %v4264, 5
    %v4267 = vsel %vm1634, %v4262, %v4266
    %v4269 = vshrl.u32 %v3928, 16
    %v4271 = vrot.slane %v4269, 4
    %v4272 = vshll.u32 %v3928, 16
    %v4274 = vrot.slane %v4272, 5
    %v4275 = vor.u32 %v4271, %v4274
    %v4276 = vrot.slane %v4275, 4
    %v4278 = vshll.u32 %v3929, 16
    %v4280 = vrot.slane %v4278, 5
    %v4281 = vsel %vm1634, %v4276, %v4280
    %v4283 = vshrl.u32 %v3930, 16
    %v4285 = vrot.slane %v4283, 4
    %v4286 = vshll.u32 %v3930, 16
    %v4288 = vrot.slane %v4286, 5
    %v4289 = vor.u32 %v4285, %v4288
    %v4290 = vrot.slane %v4289, 4
    %v4292 = vshll.u32 %v3931, 16
    %v4294 = vrot.slane %v4292, 5
    %v4295 = vsel %vm1634, %v4290, %v4294
    %v4297 = vshrl.u32 %v3932, 16
    %v4299 = vrot.slane %v4297, 4
    %v4300 = vshll.u32 %v3932, 16
    %v4302 = vrot.slane %v4300, 5
    %v4303 = vor.u32 %v4299, %v4302
    %v4304 = vrot.slane %v4303, 4
    %v4306 = vshll.u32 %v3933, 16
    %v4308 = vrot.slane %v4306, 5
    %v4309 = vsel %vm1634, %v4304, %v4308
    %v4311 = vshrl.u32 %v3934, 16
    %v4313 = vrot.slane %v4311, 4
    %v4314 = vshll.u32 %v3934, 16
    %v4316 = vrot.slane %v4314, 5
    %v4317 = vor.u32 %v4313, %v4316
    %v4318 = vrot.slane %v4317, 4
    %v4320 = vshll.u32 %v3935, 16
    %v4322 = vrot.slane %v4320, 5
    %v4323 = vsel %vm1634, %v4318, %v4322
    %v4325 = vshrl.u32 %v3936, 16
    %v4327 = vrot.slane %v4325, 4
    %v4328 = vshll.u32 %v3936, 16
    %v4330 = vrot.slane %v4328, 5
    %v4331 = vor.u32 %v4327, %v4330
    %v4332 = vrot.slane %v4331, 4
    %v4334 = vshll.u32 %v3937, 16
    %v4336 = vrot.slane %v4334, 5
    %v4337 = vsel %vm1634, %v4332, %v4336
    %v4339 = vshrl.u32 %v3938, 16
    %v4341 = vrot.slane %v4339, 4
    %v4342 = vshll.u32 %v3938, 16
    %v4344 = vrot.slane %v4342, 5
    %v4345 = vor.u32 %v4341, %v4344
    %v4346 = vrot.slane %v4345, 4
    %v4348 = vshll.u32 %v3939, 16
    %v4350 = vrot.slane %v4348, 5
    %v4351 = vsel %vm1634, %v4346, %v4350
    %v4353 = vshrl.u32 %v3940, 16
    %v4355 = vrot.slane %v4353, 4
    %v4356 = vshll.u32 %v3940, 16
    %v4358 = vrot.slane %v4356, 5
    %v4359 = vor.u32 %v4355, %v4358
    %v4360 = vrot.slane %v4359, 4
    %v4362 = vshll.u32 %v3941, 16
    %v4364 = vrot.slane %v4362, 5
    %v4365 = vsel %vm1634, %v4360, %v4364
    %v4367 = vshrl.u32 %v3942, 16
    %v4369 = vrot.slane %v4367, 4
    %v4370 = vshll.u32 %v3942, 16
    %v4372 = vrot.slane %v4370, 5
    %v4373 = vor.u32 %v4369, %v4372
    %v4374 = vrot.slane %v4373, 4
    %v4376 = vshll.u32 %v3943, 16
    %v4378 = vrot.slane %v4376, 5
    %v4379 = vsel %vm1634, %v4374, %v4378
    %v4381 = vshrl.u32 %v3944, 16
    %v4383 = vrot.slane %v4381, 4
    %v4384 = vshll.u32 %v3944, 16
    %v4386 = vrot.slane %v4384, 5
    %v4387 = vor.u32 %v4383, %v4386
    %v4388 = vrot.slane %v4387, 4
    %v4390 = vshll.u32 %v3945, 16
    %v4392 = vrot.slane %v4390, 5
    %v4393 = vsel %vm1634, %v4388, %v4392
    %v4394 = vunpack.c.l.b16 %v3959
    %v4395 = vunpack.c.l.b16 %v3973
    %v4396 = vunpack.c.l.b16 %v3987
    %v4397 = vunpack.c.l.b16 %v4001
    %v4398 = vunpack.c.l.b16 %v4015
    %v4399 = vunpack.c.l.b16 %v4029
    %v4400 = vunpack.c.l.b16 %v4043
    %v4401 = vunpack.c.l.b16 %v4057
    %v4402 = vunpack.c.l.b16 %v4071
    %v4403 = vunpack.c.l.b16 %v4085
    %v4404 = vunpack.c.l.b16 %v4099
    %v4405 = vunpack.c.l.b16 %v4113
    %v4406 = vunpack.c.l.b16 %v4127
    %v4407 = vunpack.c.l.b16 %v4141
    %v4408 = vunpack.c.l.b16 %v4155
    %v4409 = vunpack.c.l.b16 %v4169
    %v4410 = vunpack.c.l.b16 %v4183
    %v4411 = vunpack.c.l.b16 %v4197
    %v4412 = vunpack.c.l.b16 %v4211
    %v4413 = vunpack.c.l.b16 %v4225
    %v4414 = vunpack.c.l.b16 %v4239
    %v4415 = vunpack.c.l.b16 %v4253
    %v4416 = vunpack.c.l.b16 %v4267
    %v4417 = vunpack.c.l.b16 %v4281
    %v4418 = vunpack.c.l.b16 %v4295
    %v4419 = vunpack.c.l.b16 %v4309
    %v4420 = vunpack.c.l.b16 %v4323
    %v4421 = vunpack.c.l.b16 %v4337
    %v4422 = vunpack.c.l.b16 %v4351
    %v4423 = vunpack.c.l.b16 %v4365
    %v4424 = vunpack.c.l.b16 %v4379
    %v4425 = vunpack.c.l.b16 %v4393
    %v4426 = vpack.c.b16 %v4395, %v4394
    %v4427 = vpack.c.b16 %v4397, %v4396
    %v4428 = vpack.c.b16 %v4399, %v4398
    %v4429 = vpack.c.b16 %v4401, %v4400
    %v4430 = vpack.c.b16 %v4403, %v4402
    %v4431 = vpack.c.b16 %v4405, %v4404
    %v4432 = vpack.c.b16 %v4407, %v4406
    %v4433 = vpack.c.b16 %v4409, %v4408
    %v4434 = vpack.c.b16 %v4411, %v4410
    %v4435 = vpack.c.b16 %v4413, %v4412
    %v4436 = vpack.c.b16 %v4415, %v4414
    %v4437 = vpack.c.b16 %v4417, %v4416
    %v4438 = vpack.c.b16 %v4419, %v4418
    %v4439 = vpack.c.b16 %v4421, %v4420
    %v4440 = vpack.c.b16 %v4423, %v4422
    %v4441 = vpack.c.b16 %v4425, %v4424
    %4442 = vrot.lane.b32.xlu0 %v4426, 96
    %v4443 = vpop.permute.xlu0 %4442
    %4444 = vrot.lane.b32.xlu0 %v4427, 96
    %v4445 = vpop.permute.xlu0 %4444
    %4446 = vrot.lane.b32.xlu0 %v4428, 96
    %v4447 = vpop.permute.xlu0 %4446
    %4448 = vrot.lane.b32.xlu0 %v4429, 96
    %v4449 = vpop.permute.xlu0 %4448
    %4450 = vrot.lane.b32.xlu0 %v4430, 96
    %v4451 = vpop.permute.xlu0 %4450
    %4452 = vrot.lane.b32.xlu0 %v4431, 96
    %v4453 = vpop.permute.xlu0 %4452
    %4454 = vrot.lane.b32.xlu0 %v4432, 96
    %v4455 = vpop.permute.xlu0 %4454
    %4456 = vrot.lane.b32.xlu0 %v4433, 96
    %v4457 = vpop.permute.xlu0 %4456
    %4458 = vrot.lane.b32.xlu0 %v4434, 96
    %v4459 = vpop.permute.xlu0 %4458
    %4460 = vrot.lane.b32.xlu0 %v4435, 96
    %v4461 = vpop.permute.xlu0 %4460
    %4462 = vrot.lane.b32.xlu0 %v4436, 96
    %v4463 = vpop.permute.xlu0 %4462
    %4464 = vrot.lane.b32.xlu0 %v4437, 96
    %v4465 = vpop.permute.xlu0 %4464
    %4466 = vrot.lane.b32.xlu0 %v4438, 96
    %v4467 = vpop.permute.xlu0 %4466
    %4468 = vrot.lane.b32.xlu0 %v4439, 96
    %v4469 = vpop.permute.xlu0 %4468
    %4470 = vrot.lane.b32.xlu0 %v4440, 96
    %v4471 = vpop.permute.xlu0 %4470
    %4472 = vrot.lane.b32.xlu0 %v4441, 96
    %v4473 = vpop.permute.xlu0 %4472
    %4490 = vst.msk [vmem:[#allocation3 + $0x8] sm:$0xff] %vm2728, %v4443
    %4491 = vst.msk [vmem:[#allocation3 + $0x20] sm:$0xff] %vm2728, %v4445
    %4492 = vst.msk [vmem:[#allocation3 + $0x38] sm:$0xff] %vm2728, %v4447
    %4493 = vst.msk [vmem:[#allocation3 + $0x50] sm:$0xff] %vm2728, %v4449
    %4494 = vst.msk [vmem:[#allocation3 + $0x68] sm:$0xff] %vm2728, %v4451
    %4495 = vst.msk [vmem:[#allocation3 + $0x80] sm:$0xff] %vm2728, %v4453
    %4496 = vst.msk [vmem:[#allocation3 + $0x98] sm:$0xff] %vm2728, %v4455
    %4497 = vst.msk [vmem:[#allocation3 + $0xb0] sm:$0xff] %vm2728, %v4457
    %4498 = vst.msk [vmem:[#allocation3 + $0xc8] sm:$0xff] %vm2728, %v4459
    %4499 = vst.msk [vmem:[#allocation3 + $0xe0] sm:$0xff] %vm2728, %v4461
    %4500 = vst.msk [vmem:[#allocation3 + $0xf8] sm:$0xff] %vm2728, %v4463
    %4501 = vst.msk [vmem:[#allocation3 + $0x110] sm:$0xff] %vm2728, %v4465
    %4502 = vst.msk [vmem:[#allocation3 + $0x128] sm:$0xff] %vm2728, %v4467
    %4503 = vst.msk [vmem:[#allocation3 + $0x140] sm:$0xff] %vm2728, %v4469
    %4504 = vst.msk [vmem:[#allocation3 + $0x158] sm:$0xff] %vm2728, %v4471
    %4505 = vst.msk [vmem:[#allocation3 + $0x170] sm:$0xff] %vm2728, %v4473
    %v4506 = vld [vmem:[%s3705] sm:$0xe]
    %v4507 = vld [vmem:[%s3705 + $0x4] sm:$0x1]
    %v4508 = vld [vmem:[%s3705 + $0x8] sm:$0xe]
    %v4509 = vld [vmem:[%s3705 + $0xc] sm:$0x1]
    %v4510 = vld [vmem:[%s3705 + $0x10] sm:$0xe]
    %v4511 = vld [vmem:[%s3705 + $0x14] sm:$0x1]
    %v4512 = vld [vmem:[%s3705 + $0x18] sm:$0xe]
    %v4513 = vld [vmem:[%s3705 + $0x1c] sm:$0x1]
    %v4514 = vld [vmem:[%s3705 + $0x20] sm:$0xe]
    %v4515 = vld [vmem:[%s3705 + $0x24] sm:$0x1]
    %v4516 = vld [vmem:[%s3705 + $0x28] sm:$0xe]
    %v4517 = vld [vmem:[%s3705 + $0x2c] sm:$0x1]
    %v4518 = vld [vmem:[%s3705 + $0x30] sm:$0xe]
    %v4519 = vld [vmem:[%s3705 + $0x34] sm:$0x1]
    %v4520 = vld [vmem:[%s3705 + $0x38] sm:$0xe]
    %v4521 = vld [vmem:[%s3705 + $0x3c] sm:$0x1]
    %v4522 = vld [vmem:[%s3705 + $0x50] sm:$0xe]
    %v4523 = vld [vmem:[%s3705 + $0x54] sm:$0x1]
    %v4524 = vld [vmem:[%s3705 + $0x58] sm:$0xe]
    %v4525 = vld [vmem:[%s3705 + $0x5c] sm:$0x1]
    %v4526 = vld [vmem:[%s3705 + $0x60] sm:$0xe]
    %v4527 = vld [vmem:[%s3705 + $0x64] sm:$0x1]
    %v4528 = vld [vmem:[%s3705 + $0x68] sm:$0xe]
    %v4529 = vld [vmem:[%s3705 + $0x6c] sm:$0x1]
    %v4530 = vld [vmem:[%s3705 + $0x70] sm:$0xe]
    %v4531 = vld [vmem:[%s3705 + $0x74] sm:$0x1]
    %v4532 = vld [vmem:[%s3705 + $0x78] sm:$0xe]
    %v4533 = vld [vmem:[%s3705 + $0x7c] sm:$0x1]
    %v4534 = vld [vmem:[%s3705 + $0x80] sm:$0xe]
    %v4535 = vld [vmem:[%s3705 + $0x84] sm:$0x1]
    %v4536 = vld [vmem:[%s3705 + $0x88] sm:$0xe]
    %v4537 = vld [vmem:[%s3705 + $0x8c] sm:$0x1]
    %v4538 = vld [vmem:[%s3705 + $0xa0] sm:$0xe]
    %v4539 = vld [vmem:[%s3705 + $0xa4] sm:$0x1]
    %v4540 = vld [vmem:[%s3705 + $0xa8] sm:$0xe]
    %v4541 = vld [vmem:[%s3705 + $0xac] sm:$0x1]
    %v4542 = vld [vmem:[%s3705 + $0xb0] sm:$0xe]
    %v4543 = vld [vmem:[%s3705 + $0xb4] sm:$0x1]
    %v4544 = vld [vmem:[%s3705 + $0xb8] sm:$0xe]
    %v4545 = vld [vmem:[%s3705 + $0xbc] sm:$0x1]
    %v4546 = vld [vmem:[%s3705 + $0xc0] sm:$0xe]
    %v4547 = vld [vmem:[%s3705 + $0xc4] sm:$0x1]
    %v4548 = vld [vmem:[%s3705 + $0xc8] sm:$0xe]
    %v4549 = vld [vmem:[%s3705 + $0xcc] sm:$0x1]
    %v4550 = vld [vmem:[%s3705 + $0xd0] sm:$0xe]
    %v4551 = vld [vmem:[%s3705 + $0xd4] sm:$0x1]
    %v4552 = vld [vmem:[%s3705 + $0xd8] sm:$0xe]
    %v4553 = vld [vmem:[%s3705 + $0xdc] sm:$0x1]
    %v4554 = vld [vmem:[%s3705 + $0xf0] sm:$0xe]
    %v4555 = vld [vmem:[%s3705 + $0xf4] sm:$0x1]
    %v4556 = vld [vmem:[%s3705 + $0xf8] sm:$0xe]
    %v4557 = vld [vmem:[%s3705 + $0xfc] sm:$0x1]
    %v4558 = vld [vmem:[%s3705 + $0x100] sm:$0xe]
    %v4559 = vld [vmem:[%s3705 + $0x104] sm:$0x1]
    %v4560 = vld [vmem:[%s3705 + $0x108] sm:$0xe]
    %v4561 = vld [vmem:[%s3705 + $0x10c] sm:$0x1]
    %v4562 = vld [vmem:[%s3705 + $0x110] sm:$0xe]
    %v4563 = vld [vmem:[%s3705 + $0x114] sm:$0x1]
    %v4564 = vld [vmem:[%s3705 + $0x118] sm:$0xe]
    %v4565 = vld [vmem:[%s3705 + $0x11c] sm:$0x1]
    %v4566 = vld [vmem:[%s3705 + $0x120] sm:$0xe]
    %v4567 = vld [vmem:[%s3705 + $0x124] sm:$0x1]
    %v4568 = vld [vmem:[%s3705 + $0x128] sm:$0xe]
    %v4569 = vld [vmem:[%s3705 + $0x12c] sm:$0x1]
    %v4634 = vrot.slane %v4506, 5
    %v4635 = vrot.slane %v4634, 4
    %v4636 = vrot.slane %v4507, 5
    %v4637 = vsel %vm2326, %v4635, %v4636
    %v4638 = vrot.slane %v4508, 5
    %v4639 = vrot.slane %v4638, 4
    %v4640 = vrot.slane %v4509, 5
    %v4641 = vsel %vm2326, %v4639, %v4640
    %v4642 = vrot.slane %v4510, 5
    %v4643 = vrot.slane %v4642, 4
    %v4644 = vrot.slane %v4511, 5
    %v4645 = vsel %vm2326, %v4643, %v4644
    %v4646 = vrot.slane %v4512, 5
    %v4647 = vrot.slane %v4646, 4
    %v4648 = vrot.slane %v4513, 5
    %v4649 = vsel %vm2326, %v4647, %v4648
    %v4650 = vrot.slane %v4514, 5
    %v4651 = vrot.slane %v4650, 4
    %v4652 = vrot.slane %v4515, 5
    %v4653 = vsel %vm2326, %v4651, %v4652
    %v4654 = vrot.slane %v4516, 5
    %v4655 = vrot.slane %v4654, 4
    %v4656 = vrot.slane %v4517, 5
    %v4657 = vsel %vm2326, %v4655, %v4656
    %v4658 = vrot.slane %v4518, 5
    %v4659 = vrot.slane %v4658, 4
    %v4660 = vrot.slane %v4519, 5
    %v4661 = vsel %vm2326, %v4659, %v4660
    %v4662 = vrot.slane %v4520, 5
    %v4663 = vrot.slane %v4662, 4
    %v4664 = vrot.slane %v4521, 5
    %v4665 = vsel %vm2326, %v4663, %v4664
    %v4666 = vrot.slane %v4522, 5
    %v4667 = vrot.slane %v4666, 4
    %v4668 = vrot.slane %v4523, 5
    %v4669 = vsel %vm2326, %v4667, %v4668
    %v4670 = vrot.slane %v4524, 5
    %v4671 = vrot.slane %v4670, 4
    %v4672 = vrot.slane %v4525, 5
    %v4673 = vsel %vm2326, %v4671, %v4672
    %v4674 = vrot.slane %v4526, 5
    %v4675 = vrot.slane %v4674, 4
    %v4676 = vrot.slane %v4527, 5
    %v4677 = vsel %vm2326, %v4675, %v4676
    %v4678 = vrot.slane %v4528, 5
    %v4679 = vrot.slane %v4678, 4
    %v4680 = vrot.slane %v4529, 5
    %v4681 = vsel %vm2326, %v4679, %v4680
    %v4682 = vrot.slane %v4530, 5
    %v4683 = vrot.slane %v4682, 4
    %v4684 = vrot.slane %v4531, 5
    %v4685 = vsel %vm2326, %v4683, %v4684
    %v4686 = vrot.slane %v4532, 5
    %v4687 = vrot.slane %v4686, 4
    %v4688 = vrot.slane %v4533, 5
    %v4689 = vsel %vm2326, %v4687, %v4688
    %v4690 = vrot.slane %v4534, 5
    %v4691 = vrot.slane %v4690, 4
    %v4692 = vrot.slane %v4535, 5
    %v4693 = vsel %vm2326, %v4691, %v4692
    %v4694 = vrot.slane %v4536, 5
    %v4695 = vrot.slane %v4694, 4
    %v4696 = vrot.slane %v4537, 5
    %v4697 = vsel %vm2326, %v4695, %v4696
    %v4698 = vrot.slane %v4538, 5
    %v4699 = vrot.slane %v4698, 4
    %v4700 = vrot.slane %v4539, 5
    %v4701 = vsel %vm2326, %v4699, %v4700
    %v4702 = vrot.slane %v4540, 5
    %v4703 = vrot.slane %v4702, 4
    %v4704 = vrot.slane %v4541, 5
    %v4705 = vsel %vm2326, %v4703, %v4704
    %v4706 = vrot.slane %v4542, 5
    %v4707 = vrot.slane %v4706, 4
    %v4708 = vrot.slane %v4543, 5
    %v4709 = vsel %vm2326, %v4707, %v4708
    %v4710 = vrot.slane %v4544, 5
    %v4711 = vrot.slane %v4710, 4
    %v4712 = vrot.slane %v4545, 5
    %v4713 = vsel %vm2326, %v4711, %v4712
    %v4714 = vrot.slane %v4546, 5
    %v4715 = vrot.slane %v4714, 4
    %v4716 = vrot.slane %v4547, 5
    %v4717 = vsel %vm2326, %v4715, %v4716
    %v4718 = vrot.slane %v4548, 5
    %v4719 = vrot.slane %v4718, 4
    %v4720 = vrot.slane %v4549, 5
    %v4721 = vsel %vm2326, %v4719, %v4720
    %v4722 = vrot.slane %v4550, 5
    %v4723 = vrot.slane %v4722, 4
    %v4724 = vrot.slane %v4551, 5
    %v4725 = vsel %vm2326, %v4723, %v4724
    %v4726 = vrot.slane %v4552, 5
    %v4727 = vrot.slane %v4726, 4
    %v4728 = vrot.slane %v4553, 5
    %v4729 = vsel %vm2326, %v4727, %v4728
    %v4730 = vrot.slane %v4554, 5
    %v4731 = vrot.slane %v4730, 4
    %v4732 = vrot.slane %v4555, 5
    %v4733 = vsel %vm2326, %v4731, %v4732
    %v4734 = vrot.slane %v4556, 5
    %v4735 = vrot.slane %v4734, 4
    %v4736 = vrot.slane %v4557, 5
    %v4737 = vsel %vm2326, %v4735, %v4736
    %v4738 = vrot.slane %v4558, 5
    %v4739 = vrot.slane %v4738, 4
    %v4740 = vrot.slane %v4559, 5
    %v4741 = vsel %vm2326, %v4739, %v4740
    %v4742 = vrot.slane %v4560, 5
    %v4743 = vrot.slane %v4742, 4
    %v4744 = vrot.slane %v4561, 5
    %v4745 = vsel %vm2326, %v4743, %v4744
    %v4746 = vrot.slane %v4562, 5
    %v4747 = vrot.slane %v4746, 4
    %v4748 = vrot.slane %v4563, 5
    %v4749 = vsel %vm2326, %v4747, %v4748
    %v4750 = vrot.slane %v4564, 5
    %v4751 = vrot.slane %v4750, 4
    %v4752 = vrot.slane %v4565, 5
    %v4753 = vsel %vm2326, %v4751, %v4752
    %v4754 = vrot.slane %v4566, 5
    %v4755 = vrot.slane %v4754, 4
    %v4756 = vrot.slane %v4567, 5
    %v4757 = vsel %vm2326, %v4755, %v4756
    %v4758 = vrot.slane %v4568, 5
    %v4759 = vrot.slane %v4758, 4
    %v4760 = vrot.slane %v4569, 5
    %v4761 = vsel %vm2326, %v4759, %v4760
    %v4762 = vunpack.c.l.b16 %v4637
    %v4763 = vunpack.c.l.b16 %v4641
    %v4764 = vunpack.c.l.b16 %v4645
    %v4765 = vunpack.c.l.b16 %v4649
    %v4766 = vunpack.c.l.b16 %v4653
    %v4767 = vunpack.c.l.b16 %v4657
    %v4768 = vunpack.c.l.b16 %v4661
    %v4769 = vunpack.c.l.b16 %v4665
    %v4770 = vunpack.c.l.b16 %v4669
    %v4771 = vunpack.c.l.b16 %v4673
    %v4772 = vunpack.c.l.b16 %v4677
    %v4773 = vunpack.c.l.b16 %v4681
    %v4774 = vunpack.c.l.b16 %v4685
    %v4775 = vunpack.c.l.b16 %v4689
    %v4776 = vunpack.c.l.b16 %v4693
    %v4777 = vunpack.c.l.b16 %v4697
    %v4778 = vunpack.c.l.b16 %v4701
    %v4779 = vunpack.c.l.b16 %v4705
    %v4780 = vunpack.c.l.b16 %v4709
    %v4781 = vunpack.c.l.b16 %v4713
    %v4782 = vunpack.c.l.b16 %v4717
    %v4783 = vunpack.c.l.b16 %v4721
    %v4784 = vunpack.c.l.b16 %v4725
    %v4785 = vunpack.c.l.b16 %v4729
    %v4786 = vunpack.c.l.b16 %v4733
    %v4787 = vunpack.c.l.b16 %v4737
    %v4788 = vunpack.c.l.b16 %v4741
    %v4789 = vunpack.c.l.b16 %v4745
    %v4790 = vunpack.c.l.b16 %v4749
    %v4791 = vunpack.c.l.b16 %v4753
    %v4792 = vunpack.c.l.b16 %v4757
    %v4793 = vunpack.c.l.b16 %v4761
    %v4794 = vpack.c.b16 %v4763, %v4762
    %v4795 = vpack.c.b16 %v4765, %v4764
    %v4796 = vpack.c.b16 %v4767, %v4766
    %v4797 = vpack.c.b16 %v4769, %v4768
    %v4798 = vpack.c.b16 %v4771, %v4770
    %v4799 = vpack.c.b16 %v4773, %v4772
    %v4800 = vpack.c.b16 %v4775, %v4774
    %v4801 = vpack.c.b16 %v4777, %v4776
    %v4802 = vpack.c.b16 %v4779, %v4778
    %v4803 = vpack.c.b16 %v4781, %v4780
    %v4804 = vpack.c.b16 %v4783, %v4782
    %v4805 = vpack.c.b16 %v4785, %v4784
    %v4806 = vpack.c.b16 %v4787, %v4786
    %v4807 = vpack.c.b16 %v4789, %v4788
    %v4808 = vpack.c.b16 %v4791, %v4790
    %v4809 = vpack.c.b16 %v4793, %v4792
    %4826 = vst.msk [vmem:[#allocation3 + $0x10] sm:$0xff] %vm1551, %v4794
    %4827 = vst.msk [vmem:[#allocation3 + $0x28] sm:$0xff] %vm1551, %v4795
    %4828 = vst.msk [vmem:[#allocation3 + $0x40] sm:$0xff] %vm1551, %v4796
    %4829 = vst.msk [vmem:[#allocation3 + $0x58] sm:$0xff] %vm1551, %v4797
    %4830 = vst.msk [vmem:[#allocation3 + $0x70] sm:$0xff] %vm1551, %v4798
    %4831 = vst.msk [vmem:[#allocation3 + $0x88] sm:$0xff] %vm1551, %v4799
    %4832 = vst.msk [vmem:[#allocation3 + $0xa0] sm:$0xff] %vm1551, %v4800
    %4833 = vst.msk [vmem:[#allocation3 + $0xb8] sm:$0xff] %vm1551, %v4801
    %4834 = vst.msk [vmem:[#allocation3 + $0xd0] sm:$0xff] %vm1551, %v4802
    %4835 = vst.msk [vmem:[#allocation3 + $0xe8] sm:$0xff] %vm1551, %v4803
    %4836 = vst.msk [vmem:[#allocation3 + $0x100] sm:$0xff] %vm1551, %v4804
    %4837 = vst.msk [vmem:[#allocation3 + $0x118] sm:$0xff] %vm1551, %v4805
    %4838 = vst.msk [vmem:[#allocation3 + $0x130] sm:$0xff] %vm1551, %v4806
    %4839 = vst.msk [vmem:[#allocation3 + $0x148] sm:$0xff] %vm1551, %v4807
    %4840 = vst.msk [vmem:[#allocation3 + $0x160] sm:$0xff] %vm1551, %v4808
    %4841 = vst.msk [vmem:[#allocation3 + $0x178] sm:$0xff] %vm1551, %v4809
    %v4842 = vld [vmem:[#allocation3] sm:$0xff]
    %v4843 = vld [vmem:[#allocation3 + $0x8] sm:$0xff]
    %v4844 = vld [vmem:[#allocation3 + $0x10] sm:$0xff]
    %v4845 = vld [vmem:[#allocation3 + $0x18] sm:$0xff]
    %v4846 = vld [vmem:[#allocation3 + $0x20] sm:$0xff]
    %v4847 = vld [vmem:[#allocation3 + $0x28] sm:$0xff]
    %v4848 = vld [vmem:[#allocation3 + $0x30] sm:$0xff]
    %v4849 = vld [vmem:[#allocation3 + $0x38] sm:$0xff]
    %v4850 = vld [vmem:[#allocation3 + $0x40] sm:$0xff]
    %v4851 = vld [vmem:[#allocation3 + $0x48] sm:$0xff]
    %v4852 = vld [vmem:[#allocation3 + $0x50] sm:$0xff]
    %v4853 = vld [vmem:[#allocation3 + $0x58] sm:$0xff]
    %v4854 = vld [vmem:[#allocation3 + $0x60] sm:$0xff]
    %v4855 = vld [vmem:[#allocation3 + $0x68] sm:$0xff]
    %v4856 = vld [vmem:[#allocation3 + $0x70] sm:$0xff]
    %v4857 = vld [vmem:[#allocation3 + $0x78] sm:$0xff]
    %v4858 = vld [vmem:[#allocation3 + $0x80] sm:$0xff]
    %v4859 = vld [vmem:[#allocation3 + $0x88] sm:$0xff]
    %v4860 = vld [vmem:[#allocation3 + $0x90] sm:$0xff]
    %v4861 = vld [vmem:[#allocation3 + $0x98] sm:$0xff]
    %v4862 = vld [vmem:[#allocation3 + $0xa0] sm:$0xff]
    %v4863 = vld [vmem:[#allocation3 + $0xa8] sm:$0xff]
    %v4864 = vld [vmem:[#allocation3 + $0xb0] sm:$0xff]
    %v4865 = vld [vmem:[#allocation3 + $0xb8] sm:$0xff]
    %v4866 = vld [vmem:[#allocation3 + $0xc0] sm:$0xff]
    %v4867 = vld [vmem:[#allocation3 + $0xc8] sm:$0xff]
    %v4868 = vld [vmem:[#allocation3 + $0xd0] sm:$0xff]
    %v4869 = vld [vmem:[#allocation3 + $0xd8] sm:$0xff]
    %v4870 = vld [vmem:[#allocation3 + $0xe0] sm:$0xff]
    %v4871 = vld [vmem:[#allocation3 + $0xe8] sm:$0xff]
    %v4872 = vld [vmem:[#allocation3 + $0xf0] sm:$0xff]
    %v4873 = vld [vmem:[#allocation3 + $0xf8] sm:$0xff]
    %v4874 = vld [vmem:[#allocation3 + $0x100] sm:$0xff]
    %v4875 = vld [vmem:[#allocation3 + $0x108] sm:$0xff]
    %v4876 = vld [vmem:[#allocation3 + $0x110] sm:$0xff]
    %v4877 = vld [vmem:[#allocation3 + $0x118] sm:$0xff]
    %v4878 = vld [vmem:[#allocation3 + $0x120] sm:$0xff]
    %v4879 = vld [vmem:[#allocation3 + $0x128] sm:$0xff]
    %v4880 = vld [vmem:[#allocation3 + $0x130] sm:$0xff]
    %v4881 = vld [vmem:[#allocation3 + $0x138] sm:$0xff]
    %v4882 = vld [vmem:[#allocation3 + $0x140] sm:$0xff]
    %v4883 = vld [vmem:[#allocation3 + $0x148] sm:$0xff]
    %v4884 = vld [vmem:[#allocation3 + $0x150] sm:$0xff]
    %v4885 = vld [vmem:[#allocation3 + $0x158] sm:$0xff]
    %v4886 = vld [vmem:[#allocation3 + $0x160] sm:$0xff]
    %v4887 = vld [vmem:[#allocation3 + $0x168] sm:$0xff]
    %v4888 = vld [vmem:[#allocation3 + $0x170] sm:$0xff]
    %v4889 = vld [vmem:[#allocation3 + $0x178] sm:$0xff]
    %v4890 = vld [vmem:[%s6] sm:$0xf]
    %v4891 = vld [vmem:[%s6 + $0x4] sm:$0xf]
    %v4892 = vld [vmem:[%s6 + $0x8] sm:$0xf]
    %v4893 = vld [vmem:[%s6 + $0xc] sm:$0xf]
    %v4894 = vld [vmem:[%s6 + $0x10] sm:$0xf]
    %v4895 = vld [vmem:[%s6 + $0x14] sm:$0xf]
    %v4896 = vld [vmem:[%s6 + $0x18] sm:$0xf]
    %v4897 = vld [vmem:[%s6 + $0x1c] sm:$0xf]
    %v4898 = vld [vmem:[%s6 + $0x20] sm:$0xf]
    %v4899 = vld [vmem:[%s6 + $0x24] sm:$0xf]
    %v4900 = vld [vmem:[%s6 + $0x28] sm:$0xf]
    %v4901 = vld [vmem:[%s6 + $0x2c] sm:$0xf]
    %v4902 = vld [vmem:[%s6 + $0x30] sm:$0xf]
    %v4903 = vld [vmem:[%s6 + $0x34] sm:$0xf]
    %v4904 = vld [vmem:[%s6 + $0x38] sm:$0xf]
    %v4905 = vld [vmem:[%s6 + $0x3c] sm:$0xf]
    %v4906 = vld [vmem:[%s6 + $0x40] sm:$0xf]
    %v4907 = vld [vmem:[%s6 + $0x44] sm:$0xf]
    %v4908 = vld [vmem:[%s6 + $0x48] sm:$0xf]
    %v4909 = vld [vmem:[%s6 + $0x4c] sm:$0xf]
    %v4910 = vld [vmem:[%s6 + $0x50] sm:$0xf]
    %v4911 = vld [vmem:[%s6 + $0x54] sm:$0xf]
    %v4912 = vld [vmem:[%s6 + $0x58] sm:$0xf]
    %v4913 = vld [vmem:[%s6 + $0x5c] sm:$0xf]
    %v4914 = vld [vmem:[%s6 + $0x60] sm:$0xf]
    %v4915 = vld [vmem:[%s6 + $0x64] sm:$0xf]
    %v4916 = vld [vmem:[%s6 + $0x68] sm:$0xf]
    %v4917 = vld [vmem:[%s6 + $0x6c] sm:$0xf]
    %v4918 = vld [vmem:[%s6 + $0x70] sm:$0xf]
    %v4919 = vld [vmem:[%s6 + $0x74] sm:$0xf]
    %v4920 = vld [vmem:[%s6 + $0x78] sm:$0xf]
    %v4921 = vld [vmem:[%s6 + $0x7c] sm:$0xf]
    %v4922 = vld [vmem:[%s6 + $0x80] sm:$0xf]
    %v4923 = vld [vmem:[%s6 + $0x84] sm:$0xf]
    %v4924 = vld [vmem:[%s6 + $0x88] sm:$0xf]
    %v4925 = vld [vmem:[%s6 + $0x8c] sm:$0xf]
    %v4962 = vunpack.c.l.b16 %v4890
    %v4963 = vunpack.c.l.b16 %v4891
    %v4964 = vunpack.c.l.b16 %v4892
    %v4965 = vunpack.c.l.b16 %v4893
    %v4966 = vunpack.c.l.b16 %v4894
    %v4967 = vunpack.c.l.b16 %v4895
    %v4968 = vunpack.c.l.b16 %v4896
    %v4969 = vunpack.c.l.b16 %v4897
    %v4970 = vunpack.c.l.b16 %v4898
    %v4971 = vunpack.c.l.b16 %v4899
    %v4972 = vunpack.c.l.b16 %v4900
    %v4973 = vunpack.c.l.b16 %v4901
    %v4974 = vunpack.c.l.b16 %v4902
    %v4975 = vunpack.c.l.b16 %v4903
    %v4976 = vunpack.c.l.b16 %v4904
    %v4977 = vunpack.c.l.b16 %v4905
    %v4978 = vunpack.c.l.b16 %v4906
    %v4979 = vunpack.c.l.b16 %v4907
    %v4980 = vunpack.c.l.b16 %v4908
    %v4981 = vunpack.c.l.b16 %v4909
    %v4982 = vunpack.c.l.b16 %v4910
    %v4983 = vunpack.c.l.b16 %v4911
    %v4984 = vunpack.c.l.b16 %v4912
    %v4985 = vunpack.c.l.b16 %v4913
    %v4986 = vunpack.c.l.b16 %v4914
    %v4987 = vunpack.c.l.b16 %v4915
    %v4988 = vunpack.c.l.b16 %v4916
    %v4989 = vunpack.c.l.b16 %v4917
    %v4990 = vunpack.c.l.b16 %v4918
    %v4991 = vunpack.c.l.b16 %v4919
    %v4992 = vunpack.c.l.b16 %v4920
    %v4993 = vunpack.c.l.b16 %v4921
    %v4994 = vunpack.c.l.b16 %v4922
    %v4995 = vunpack.c.l.b16 %v4923
    %v4996 = vunpack.c.l.b16 %v4924
    %v4997 = vunpack.c.l.b16 %v4925
    %v4998 = vpack.c.b16 %v4963, %v4962
    %v4999 = vpack.c.b16 %v4965, %v4964
    %v5000 = vpack.c.b16 %v4967, %v4966
    %v5001 = vpack.c.b16 %v4969, %v4968
    %v5002 = vpack.c.b16 %v4971, %v4970
    %v5003 = vpack.c.b16 %v4973, %v4972
    %v5004 = vpack.c.b16 %v4975, %v4974
    %v5005 = vpack.c.b16 %v4977, %v4976
    %v5006 = vpack.c.b16 %v4979, %v4978
    %v5007 = vpack.c.b16 %v4981, %v4980
    %v5008 = vpack.c.b16 %v4983, %v4982
    %v5009 = vpack.c.b16 %v4985, %v4984
    %v5010 = vpack.c.b16 %v4987, %v4986
    %v5011 = vpack.c.b16 %v4989, %v4988
    %v5012 = vpack.c.b16 %v4991, %v4990
    %v5013 = vpack.c.b16 %v4993, %v4992
    %v5014 = vpack.c.b16 %v4995, %v4994
    %v5015 = vpack.c.b16 %v4997, %v4996
    %v5035 = vsel %vm1551, %v4844, 0
    %v5038 = vsel %vm1551, %v4847, 0
    %v5041 = vsel %vm1551, %v4850, 0
    %v5044 = vsel %vm1551, %v4853, 0
    %v5047 = vsel %vm1551, %v4856, 0
    %v5050 = vsel %vm1551, %v4859, 0
    %v5053 = vsel %vm1551, %v4862, 0
    %v5056 = vsel %vm1551, %v4865, 0
    %v5059 = vsel %vm1551, %v4868, 0
    %v5062 = vsel %vm1551, %v4871, 0
    %v5065 = vsel %vm1551, %v4874, 0
    %v5068 = vsel %vm1551, %v4877, 0
    %v5071 = vsel %vm1551, %v4880, 0
    %v5074 = vsel %vm1551, %v4883, 0
    %v5077 = vsel %vm1551, %v4886, 0
    %v5080 = vsel %vm1551, %v4889, 0
    %5082 = vmatprep.subr.bf16.mxu0 0
    %5083 = vmatpush1.bf16.msra.mxu0 %v4998
    %5084 = vmatprep.subr.bf16.mxu0 0
    %5085 = vmatpush1.bf16.msra.mxu0 %v4999
    %5086 = vmatprep.subr.bf16.mxu0 0
    %5087 = vmatpush1.bf16.msra.mxu0 %v5000
    %5088 = vmatprep.subr.bf16.mxu0 0
    %5089 = vmatpush1.bf16.msra.mxu0 %v5001
    %5090 = vmatprep.subr.bf16.mxu0 0
    %5091 = vmatpush1.bf16.msra.mxu0 %v5002
    %5092 = vmatprep.subr.bf16.mxu0 0
    %5093 = vmatpush1.bf16.msra.mxu0 %v5003
    %5094 = vmatprep.subr.bf16.mxu0 0
    %5095 = vmatpush1.bf16.msra.mxu0 %v5004
    %5096 = vmatprep.subr.bf16.mxu0 0
    %5097 = vmatpush1.bf16.msra.mxu0 %v5005
    %5098 = vmatprep.subr.bf16.mxu0 0
    %5099 = vmatpush1.bf16.msra.mxu0 %v5006
    %5100 = vmatprep.subr.bf16.mxu0 0
    %5101 = vmatpush1.bf16.msra.mxu0 %v5007
    %5102 = vmatprep.subr.bf16.mxu0 0
    %5103 = vmatpush1.bf16.msra.mxu0 %v5008
    %5104 = vmatprep.subr.bf16.mxu0 0
    %5105 = vmatpush1.bf16.msra.mxu0 %v5009
    %5106 = vmatprep.subr.bf16.mxu0 0
    %5107 = vmatpush1.bf16.msra.mxu0 %v5010
    %5108 = vmatprep.subr.bf16.mxu0 0
    %5109 = vmatpush1.bf16.msra.mxu0 %v5011
    %5110 = vmatprep.subr.bf16.mxu0 0
    %5111 = vmatpush1.bf16.msra.mxu0 %v5012
    %5112 = vmatprep.subr.bf16.mxu0 0
    %5113 = vmatpush1.bf16.msra.mxu0 %v5013
    %5114 = vmatprep.mubr.bf16.mxu0 %v4843
    %5115 = vmatmul.mubr.bf16.gmra.mrb[0].mxu0 %v4842
    %v5116 = vpop.f32.mrb[0].mxu0
    %v5117 = vadd.f32 0.0, %v5116
    %v5118 = vpop.f32.mrb[0].mxu0
    %v5119 = vpop.f32.mrb[0].mxu0
    %v5120 = vadd.f32 0.0, %v5119
    %v5121 = vpop.f32.mrb[0].mxu0
    %5122 = vmatprep.mubr.bf16.mxu0 %v4846
    %5123 = vmatmul.mubr.bf16.gmra.mrb[0].mxu0 %v4845
    %v5124 = vpop.f32.mrb[0].mxu0
    %v5125 = vadd.f32 0.0, %v5124
    %v5126 = vpop.f32.mrb[0].mxu0
    %v5127 = vpop.f32.mrb[0].mxu0
    %v5128 = vadd.f32 0.0, %v5127
    %v5129 = vpop.f32.mrb[0].mxu0
    %5130 = vmatprep.mubr.bf16.mxu0 %v4849
    %5131 = vmatmul.mubr.bf16.gmra.mrb[0].mxu0 %v4848
    %v5132 = vpop.f32.mrb[0].mxu0
    %v5133 = vadd.f32 0.0, %v5132
    %v5134 = vpop.f32.mrb[0].mxu0
    %v5135 = vpop.f32.mrb[0].mxu0
    %v5136 = vadd.f32 0.0, %v5135
    %v5137 = vpop.f32.mrb[0].mxu0
    %5138 = vmatprep.mubr.bf16.mxu0 %v4852
    %5139 = vmatmul.mubr.bf16.gmra.mrb[0].mxu0 %v4851
    %v5140 = vpop.f32.mrb[0].mxu0
    %v5141 = vadd.f32 0.0, %v5140
    %v5142 = vpop.f32.mrb[0].mxu0
    %v5143 = vpop.f32.mrb[0].mxu0
    %v5144 = vadd.f32 0.0, %v5143
    %v5145 = vpop.f32.mrb[0].mxu0
    %5146 = vmatprep.mubr.bf16.mxu0 %v4855
    %5147 = vmatmul.mubr.bf16.gmra.mrb[0].mxu0 %v4854
    %v5148 = vpop.f32.mrb[0].mxu0
    %v5149 = vadd.f32 0.0, %v5148
    %v5150 = vpop.f32.mrb[0].mxu0
    %v5151 = vpop.f32.mrb[0].mxu0
    %v5152 = vadd.f32 0.0, %v5151
    %v5153 = vpop.f32.mrb[0].mxu0
    %5154 = vmatprep.mubr.bf16.mxu0 %v4858
    %5155 = vmatmul.mubr.bf16.gmra.mrb[0].mxu0 %v4857
    %v5156 = vpop.f32.mrb[0].mxu0
    %v5157 = vadd.f32 0.0, %v5156
    %v5158 = vpop.f32.mrb[0].mxu0
    %v5159 = vpop.f32.mrb[0].mxu0
    %v5160 = vadd.f32 0.0, %v5159
    %v5161 = vpop.f32.mrb[0].mxu0
    %5162 = vmatprep.mubr.bf16.mxu0 %v4861
    %5163 = vmatmul.mubr.bf16.gmra.mrb[0].mxu0 %v4860
    %v5164 = vpop.f32.mrb[0].mxu0
    %v5165 = vadd.f32 0.0, %v5164
    %v5166 = vpop.f32.mrb[0].mxu0
    %v5167 = vpop.f32.mrb[0].mxu0
    %v5168 = vadd.f32 0.0, %v5167
    %v5169 = vpop.f32.mrb[0].mxu0
    %5170 = vmatprep.mubr.bf16.mxu0 %v4864
    %5171 = vmatmul.mubr.bf16.gmra.mrb[0].mxu0 %v4863
    %v5172 = vpop.f32.mrb[0].mxu0
    %v5173 = vadd.f32 0.0, %v5172
    %v5174 = vpop.f32.mrb[0].mxu0
    %v5175 = vpop.f32.mrb[0].mxu0
    %v5176 = vadd.f32 0.0, %v5175
    %v5177 = vpop.f32.mrb[0].mxu0
    %5178 = vmatprep.mubr.bf16.mxu0 %v4867
    %5179 = vmatmul.mubr.bf16.gmra.mrb[0].mxu0 %v4866
    %v5180 = vpop.f32.mrb[0].mxu0
    %v5181 = vadd.f32 0.0, %v5180
    %v5182 = vpop.f32.mrb[0].mxu0
    %v5183 = vpop.f32.mrb[0].mxu0
    %v5184 = vadd.f32 0.0, %v5183
    %v5185 = vpop.f32.mrb[0].mxu0
    %5186 = vmatprep.mubr.bf16.mxu0 %v4870
    %5187 = vmatmul.mubr.bf16.gmra.mrb[0].mxu0 %v4869
    %v5188 = vpop.f32.mrb[0].mxu0
    %v5189 = vadd.f32 0.0, %v5188
    %v5190 = vpop.f32.mrb[0].mxu0
    %v5191 = vpop.f32.mrb[0].mxu0
    %v5192 = vadd.f32 0.0, %v5191
    %v5193 = vpop.f32.mrb[0].mxu0
    %5194 = vmatprep.mubr.bf16.mxu0 %v4873
    %5195 = vmatmul.mubr.bf16.gmra.mrb[0].mxu0 %v4872
    %v5196 = vpop.f32.mrb[0].mxu0
    %v5197 = vadd.f32 0.0, %v5196
    %v5198 = vpop.f32.mrb[0].mxu0
    %v5199 = vpop.f32.mrb[0].mxu0
    %v5200 = vadd.f32 0.0, %v5199
    %v5201 = vpop.f32.mrb[0].mxu0
    %5202 = vmatprep.mubr.bf16.mxu0 %v4876
    %5203 = vmatmul.mubr.bf16.gmra.mrb[0].mxu0 %v4875
    %v5204 = vpop.f32.mrb[0].mxu0
    %v5205 = vadd.f32 0.0, %v5204
    %v5206 = vpop.f32.mrb[0].mxu0
    %v5207 = vpop.f32.mrb[0].mxu0
    %v5208 = vadd.f32 0.0, %v5207
    %v5209 = vpop.f32.mrb[0].mxu0
    %5210 = vmatprep.mubr.bf16.mxu0 %v4879
    %5211 = vmatmul.mubr.bf16.gmra.mrb[0].mxu0 %v4878
    %v5212 = vpop.f32.mrb[0].mxu0
    %v5213 = vadd.f32 0.0, %v5212
    %v5214 = vpop.f32.mrb[0].mxu0
    %v5215 = vpop.f32.mrb[0].mxu0
    %v5216 = vadd.f32 0.0, %v5215
    %v5217 = vpop.f32.mrb[0].mxu0
    %5218 = vmatprep.mubr.bf16.mxu0 %v4882
    %5219 = vmatmul.mubr.bf16.gmra.mrb[0].mxu0 %v4881
    %v5220 = vpop.f32.mrb[0].mxu0
    %v5221 = vadd.f32 0.0, %v5220
    %v5222 = vpop.f32.mrb[0].mxu0
    %v5223 = vpop.f32.mrb[0].mxu0
    %v5224 = vadd.f32 0.0, %v5223
    %v5225 = vpop.f32.mrb[0].mxu0
    %5226 = vmatprep.mubr.bf16.mxu0 %v4885
    %5227 = vmatmul.mubr.bf16.gmra.mrb[0].mxu0 %v4884
    %v5228 = vpop.f32.mrb[0].mxu0
    %v5229 = vadd.f32 0.0, %v5228
    %v5230 = vpop.f32.mrb[0].mxu0
    %v5231 = vpop.f32.mrb[0].mxu0
    %v5232 = vadd.f32 0.0, %v5231
    %v5233 = vpop.f32.mrb[0].mxu0
    %5234 = vmatprep.mubr.bf16.mxu0 %v4888
    %5235 = vmatmul.mubr.bf16.gmra.mrb[0].mxu0 %v4887
    %v5236 = vpop.f32.mrb[0].mxu0
    %v5237 = vadd.f32 0.0, %v5236
    %v5238 = vpop.f32.mrb[0].mxu0
    %v5239 = vpop.f32.mrb[0].mxu0
    %v5240 = vadd.f32 0.0, %v5239
    %v5241 = vpop.f32.mrb[0].mxu0
    %5242 = vdwg.mxu0
    %5243 = vmatprep.subr.bf16.mxu0 0
    %5244 = vmatpush1.bf16.msra.mxu0 %v5014
    %5245 = vmatprep.subr.bf16.mxu0 0
    %5246 = vmatpush1.bf16.msra.mxu0 %v5015
    %5247 = vmatprep.subr.bf16.mxu0 0
    %5248 = vmatpush1.bf16.msra.mxu0 0
    %5249 = vmatprep.subr.bf16.mxu0 0
    %5250 = vmatpush1.bf16.msra.mxu0 0
    %5251 = vmatprep.subr.bf16.mxu0 0
    %5252 = vmatpush1.bf16.msra.mxu0 0
    %5253 = vmatprep.subr.bf16.mxu0 0
    %5254 = vmatpush1.bf16.msra.mxu0 0
    %5255 = vmatprep.subr.bf16.mxu0 0
    %5256 = vmatpush1.bf16.msra.mxu0 0
    %5257 = vmatprep.subr.bf16.mxu0 0
    %5258 = vmatpush1.bf16.msra.mxu0 0
    %5259 = vmatprep.subr.bf16.mxu0 0
    %5260 = vmatpush1.bf16.msra.mxu0 0
    %5261 = vmatprep.subr.bf16.mxu0 0
    %5262 = vmatpush1.bf16.msra.mxu0 0
    %5263 = vmatprep.subr.bf16.mxu0 0
    %5264 = vmatpush1.bf16.msra.mxu0 0
    %5265 = vmatprep.subr.bf16.mxu0 0
    %5266 = vmatpush1.bf16.msra.mxu0 0
    %5267 = vmatprep.subr.bf16.mxu0 0
    %5268 = vmatpush1.bf16.msra.mxu0 0
    %5269 = vmatprep.subr.bf16.mxu0 0
    %5270 = vmatpush1.bf16.msra.mxu0 0
    %5271 = vmatprep.subr.bf16.mxu0 0
    %5272 = vmatpush1.bf16.msra.mxu0 0
    %5273 = vmatprep.subr.bf16.mxu0 0
    %5274 = vmatpush1.bf16.msra.mxu0 0
    %5275 = vmatprep.mubr.bf16.mxu0 0
    %5276 = vmatmul.mubr.bf16.gmra.mrb[0].mxu0 %v5035
    %v5277 = vpop.f32.mrb[0].mxu0
    %v5278 = vadd.f32 %v5117, %v5277
    %v5279 = vpop.f32.mrb[0].mxu0
    %v5280 = vpop.f32.mrb[0].mxu0
    %v5281 = vadd.f32 %v5120, %v5280
    %v5282 = vpop.f32.mrb[0].mxu0
    %5283 = vmatprep.mubr.bf16.mxu0 0
    %5284 = vmatmul.mubr.bf16.gmra.mrb[0].mxu0 %v5038
    %v5285 = vpop.f32.mrb[0].mxu0
    %v5286 = vadd.f32 %v5125, %v5285
    %v5287 = vpop.f32.mrb[0].mxu0
    %v5288 = vpop.f32.mrb[0].mxu0
    %v5289 = vadd.f32 %v5128, %v5288
    %v5290 = vpop.f32.mrb[0].mxu0
    %5291 = vmatprep.mubr.bf16.mxu0 0
    %5292 = vmatmul.mubr.bf16.gmra.mrb[0].mxu0 %v5041
    %v5293 = vpop.f32.mrb[0].mxu0
    %v5294 = vadd.f32 %v5133, %v5293
    %v5295 = vpop.f32.mrb[0].mxu0
    %v5296 = vpop.f32.mrb[0].mxu0
    %v5297 = vadd.f32 %v5136, %v5296
    %v5298 = vpop.f32.mrb[0].mxu0
    %5299 = vmatprep.mubr.bf16.mxu0 0
    %5300 = vmatmul.mubr.bf16.gmra.mrb[0].mxu0 %v5044
    %v5301 = vpop.f32.mrb[0].mxu0
    %v5302 = vadd.f32 %v5141, %v5301
    %v5303 = vpop.f32.mrb[0].mxu0
    %v5304 = vpop.f32.mrb[0].mxu0
    %v5305 = vadd.f32 %v5144, %v5304
    %v5306 = vpop.f32.mrb[0].mxu0
    %5307 = vmatprep.mubr.bf16.mxu0 0
    %5308 = vmatmul.mubr.bf16.gmra.mrb[0].mxu0 %v5047
    %v5309 = vpop.f32.mrb[0].mxu0
    %v5310 = vadd.f32 %v5149, %v5309
    %v5311 = vpop.f32.mrb[0].mxu0
    %v5312 = vpop.f32.mrb[0].mxu0
    %v5313 = vadd.f32 %v5152, %v5312
    %v5314 = vpop.f32.mrb[0].mxu0
    %5315 = vmatprep.mubr.bf16.mxu0 0
    %5316 = vmatmul.mubr.bf16.gmra.mrb[0].mxu0 %v5050
    %v5317 = vpop.f32.mrb[0].mxu0
    %v5318 = vadd.f32 %v5157, %v5317
    %v5319 = vpop.f32.mrb[0].mxu0
    %v5320 = vpop.f32.mrb[0].mxu0
    %v5321 = vadd.f32 %v5160, %v5320
    %v5322 = vpop.f32.mrb[0].mxu0
    %5323 = vmatprep.mubr.bf16.mxu0 0
    %5324 = vmatmul.mubr.bf16.gmra.mrb[0].mxu0 %v5053
    %v5325 = vpop.f32.mrb[0].mxu0
    %v5326 = vadd.f32 %v5165, %v5325
    %v5327 = vpop.f32.mrb[0].mxu0
    %v5328 = vpop.f32.mrb[0].mxu0
    %v5329 = vadd.f32 %v5168, %v5328
    %v5330 = vpop.f32.mrb[0].mxu0
    %5331 = vmatprep.mubr.bf16.mxu0 0
    %5332 = vmatmul.mubr.bf16.gmra.mrb[0].mxu0 %v5056
    %v5333 = vpop.f32.mrb[0].mxu0
    %v5334 = vadd.f32 %v5173, %v5333
    %v5335 = vpop.f32.mrb[0].mxu0
    %v5336 = vpop.f32.mrb[0].mxu0
    %v5337 = vadd.f32 %v5176, %v5336
    %v5338 = vpop.f32.mrb[0].mxu0
    %5339 = vmatprep.mubr.bf16.mxu0 0
    %5340 = vmatmul.mubr.bf16.gmra.mrb[0].mxu0 %v5059
    %v5341 = vpop.f32.mrb[0].mxu0
    %v5342 = vadd.f32 %v5181, %v5341
    %v5343 = vpop.f32.mrb[0].mxu0
    %v5344 = vpop.f32.mrb[0].mxu0
    %v5345 = vadd.f32 %v5184, %v5344
    %v5346 = vpop.f32.mrb[0].mxu0
    %5347 = vmatprep.mubr.bf16.mxu0 0
    %5348 = vmatmul.mubr.bf16.gmra.mrb[0].mxu0 %v5062
    %v5349 = vpop.f32.mrb[0].mxu0
    %v5350 = vadd.f32 %v5189, %v5349
    %v5351 = vpop.f32.mrb[0].mxu0
    %v5352 = vpop.f32.mrb[0].mxu0
    %v5353 = vadd.f32 %v5192, %v5352
    %v5354 = vpop.f32.mrb[0].mxu0
    %5355 = vmatprep.mubr.bf16.mxu0 0
    %5356 = vmatmul.mubr.bf16.gmra.mrb[0].mxu0 %v5065
    %v5357 = vpop.f32.mrb[0].mxu0
    %v5358 = vadd.f32 %v5197, %v5357
    %v5359 = vpop.f32.mrb[0].mxu0
    %v5360 = vpop.f32.mrb[0].mxu0
    %v5361 = vadd.f32 %v5200, %v5360
    %v5362 = vpop.f32.mrb[0].mxu0
    %5363 = vmatprep.mubr.bf16.mxu0 0
    %5364 = vmatmul.mubr.bf16.gmra.mrb[0].mxu0 %v5068
    %v5365 = vpop.f32.mrb[0].mxu0
    %v5366 = vadd.f32 %v5205, %v5365
    %v5367 = vpop.f32.mrb[0].mxu0
    %v5368 = vpop.f32.mrb[0].mxu0
    %v5369 = vadd.f32 %v5208, %v5368
    %v5370 = vpop.f32.mrb[0].mxu0
    %5371 = vmatprep.mubr.bf16.mxu0 0
    %5372 = vmatmul.mubr.bf16.gmra.mrb[0].mxu0 %v5071
    %v5373 = vpop.f32.mrb[0].mxu0
    %v5374 = vadd.f32 %v5213, %v5373
    %v5375 = vpop.f32.mrb[0].mxu0
    %v5376 = vpop.f32.mrb[0].mxu0
    %v5377 = vadd.f32 %v5216, %v5376
    %v5378 = vpop.f32.mrb[0].mxu0
    %5379 = vmatprep.mubr.bf16.mxu0 0
    %5380 = vmatmul.mubr.bf16.gmra.mrb[0].mxu0 %v5074
    %v5381 = vpop.f32.mrb[0].mxu0
    %v5382 = vadd.f32 %v5221, %v5381
    %v5383 = vpop.f32.mrb[0].mxu0
    %v5384 = vpop.f32.mrb[0].mxu0
    %v5385 = vadd.f32 %v5224, %v5384
    %v5386 = vpop.f32.mrb[0].mxu0
    %5387 = vmatprep.mubr.bf16.mxu0 0
    %5388 = vmatmul.mubr.bf16.gmra.mrb[0].mxu0 %v5077
    %v5389 = vpop.f32.mrb[0].mxu0
    %v5390 = vadd.f32 %v5229, %v5389
    %v5391 = vpop.f32.mrb[0].mxu0
    %v5392 = vpop.f32.mrb[0].mxu0
    %v5393 = vadd.f32 %v5232, %v5392
    %v5394 = vpop.f32.mrb[0].mxu0
    %5395 = vmatprep.mubr.bf16.mxu0 0
    %5396 = vmatmul.mubr.bf16.gmra.mrb[0].mxu0 %v5080
    %v5397 = vpop.f32.mrb[0].mxu0
    %v5398 = vadd.f32 %v5237, %v5397
    %v5399 = vpop.f32.mrb[0].mxu0
    %v5400 = vpop.f32.mrb[0].mxu0
    %v5401 = vadd.f32 %v5240, %v5400
    %v5402 = vpop.f32.mrb[0].mxu0
    %5403 = vdwg.mxu0
    %v5404 = vld [vmem:[%s7] sm:$0x1]
    %v5406 = vlaneseq
    %v5407 = vshrl.u32 %v5406, 7
    %v5408 = vsub.s32 0, %v5407
    %v5409 = vrot.slane %v5404, %v5408
    %v5411 = vmul.f32 %v5278, %v5409
    %v5412 = vmul.f32 %v5281, %v5409
    %v5413 = vmul.f32 %v5286, %v5409
    %v5414 = vmul.f32 %v5289, %v5409
    %v5415 = vmul.f32 %v5294, %v5409
    %v5416 = vmul.f32 %v5297, %v5409
    %v5417 = vmul.f32 %v5302, %v5409
    %v5418 = vmul.f32 %v5305, %v5409
    %v5419 = vmul.f32 %v5310, %v5409
    %v5420 = vmul.f32 %v5313, %v5409
    %v5421 = vmul.f32 %v5318, %v5409
    %v5422 = vmul.f32 %v5321, %v5409
    %v5423 = vmul.f32 %v5326, %v5409
    %v5424 = vmul.f32 %v5329, %v5409
    %v5425 = vmul.f32 %v5334, %v5409
    %v5426 = vmul.f32 %v5337, %v5409
    %v5427 = vmul.f32 %v5342, %v5409
    %v5428 = vmul.f32 %v5345, %v5409
    %v5429 = vmul.f32 %v5350, %v5409
    %v5430 = vmul.f32 %v5353, %v5409
    %v5431 = vmul.f32 %v5358, %v5409
    %v5432 = vmul.f32 %v5361, %v5409
    %v5433 = vmul.f32 %v5366, %v5409
    %v5434 = vmul.f32 %v5369, %v5409
    %v5435 = vmul.f32 %v5374, %v5409
    %v5436 = vmul.f32 %v5377, %v5409
    %v5437 = vmul.f32 %v5382, %v5409
    %v5438 = vmul.f32 %v5385, %v5409
    %v5439 = vmul.f32 %v5390, %v5409
    %v5440 = vmul.f32 %v5393, %v5409
    %v5441 = vmul.f32 %v5398, %v5409
    %v5442 = vmul.f32 %v5401, %v5409
    %v5443 = vld [vmem:[%s8] sm:$0x1]
    %v5445 = vlaneseq
    %v5446 = vshrl.u32 %v5445, 7
    %v5447 = vsub.s32 0, %v5446
    %v5448 = vrot.slane %v5443, %v5447
    %v5450 = vadd.f32 %v5411, %v5448
    %v5451 = vadd.f32 %v5412, %v5448
    %v5452 = vadd.f32 %v5413, %v5448
    %v5453 = vadd.f32 %v5414, %v5448
    %v5454 = vadd.f32 %v5415, %v5448
    %v5455 = vadd.f32 %v5416, %v5448
    %v5456 = vadd.f32 %v5417, %v5448
    %v5457 = vadd.f32 %v5418, %v5448
    %v5458 = vadd.f32 %v5419, %v5448
    %v5459 = vadd.f32 %v5420, %v5448
    %v5460 = vadd.f32 %v5421, %v5448
    %v5461 = vadd.f32 %v5422, %v5448
    %v5462 = vadd.f32 %v5423, %v5448
    %v5463 = vadd.f32 %v5424, %v5448
    %v5464 = vadd.f32 %v5425, %v5448
    %v5465 = vadd.f32 %v5426, %v5448
    %v5466 = vadd.f32 %v5427, %v5448
    %v5467 = vadd.f32 %v5428, %v5448
    %v5468 = vadd.f32 %v5429, %v5448
    %v5469 = vadd.f32 %v5430, %v5448
    %v5470 = vadd.f32 %v5431, %v5448
    %v5471 = vadd.f32 %v5432, %v5448
    %v5472 = vadd.f32 %v5433, %v5448
    %v5473 = vadd.f32 %v5434, %v5448
    %v5474 = vadd.f32 %v5435, %v5448
    %v5475 = vadd.f32 %v5436, %v5448
    %v5476 = vadd.f32 %v5437, %v5448
    %v5477 = vadd.f32 %v5438, %v5448
    %v5478 = vadd.f32 %v5439, %v5448
    %v5479 = vadd.f32 %v5440, %v5448
    %v5480 = vadd.f32 %v5441, %v5448
    %v5481 = vadd.f32 %v5442, %v5448
    %v5482 = vmax.f32 %v5450, 0.0
    %v5483 = vmax.f32 %v5451, 0.0
    %v5484 = vmax.f32 %v5452, 0.0
    %v5485 = vmax.f32 %v5453, 0.0
    %v5486 = vmax.f32 %v5454, 0.0
    %v5487 = vmax.f32 %v5455, 0.0
    %v5488 = vmax.f32 %v5456, 0.0
    %v5489 = vmax.f32 %v5457, 0.0
    %v5490 = vmax.f32 %v5458, 0.0
    %v5491 = vmax.f32 %v5459, 0.0
    %v5492 = vmax.f32 %v5460, 0.0
    %v5493 = vmax.f32 %v5461, 0.0
    %v5494 = vmax.f32 %v5462, 0.0
    %v5495 = vmax.f32 %v5463, 0.0
    %v5496 = vmax.f32 %v5464, 0.0
    %v5497 = vmax.f32 %v5465, 0.0
    %v5498 = vmax.f32 %v5466, 0.0
    %v5499 = vmax.f32 %v5467, 0.0
    %v5500 = vmax.f32 %v5468, 0.0
    %v5501 = vmax.f32 %v5469, 0.0
    %v5502 = vmax.f32 %v5470, 0.0
    %v5503 = vmax.f32 %v5471, 0.0
    %v5504 = vmax.f32 %v5472, 0.0
    %v5505 = vmax.f32 %v5473, 0.0
    %v5506 = vmax.f32 %v5474, 0.0
    %v5507 = vmax.f32 %v5475, 0.0
    %v5508 = vmax.f32 %v5476, 0.0
    %v5509 = vmax.f32 %v5477, 0.0
    %v5510 = vmax.f32 %v5478, 0.0
    %v5511 = vmax.f32 %v5479, 0.0
    %v5512 = vmax.f32 %v5480, 0.0
    %v5513 = vmax.f32 %v5481, 0.0
    %v5514 = vpack.c.bf16 %v5483, %v5482
    %v5515 = vpack.c.bf16 %v5485, %v5484
    %v5516 = vpack.c.bf16 %v5487, %v5486
    %v5517 = vpack.c.bf16 %v5489, %v5488
    %v5518 = vpack.c.bf16 %v5491, %v5490
    %v5519 = vpack.c.bf16 %v5493, %v5492
    %v5520 = vpack.c.bf16 %v5495, %v5494
    %v5521 = vpack.c.bf16 %v5497, %v5496
    %v5522 = vpack.c.bf16 %v5499, %v5498
    %v5523 = vpack.c.bf16 %v5501, %v5500
    %v5524 = vpack.c.bf16 %v5503, %v5502
    %v5525 = vpack.c.bf16 %v5505, %v5504
    %v5526 = vpack.c.bf16 %v5507, %v5506
    %v5527 = vpack.c.bf16 %v5509, %v5508
    %v5528 = vpack.c.bf16 %v5511, %v5510
    %v5529 = vpack.c.bf16 %v5513, %v5512
    %v5530 = vld [vmem:[%s9] sm:$0xf]
    %v5531 = vpack.c.bf16 %v55, %v54
    %v5532 = vpack.c.bf16 %v57, %v56
    %v5533 = vpack.c.bf16 %v59, %v58
    %v5534 = vpack.c.bf16 %v61, %v60
    %v5535 = vpack.c.bf16 %v63, %v62
    %v5536 = vpack.c.bf16 %v65, %v64
    %v5537 = vpack.c.bf16 %v67, %v66
    %v5538 = vpack.c.bf16 %v69, %v68
    %v5539 = vpack.c.bf16 %v71, %v70
    %v5540 = vpack.c.bf16 %v73, %v72
    %v5541 = vpack.c.bf16 %v75, %v74
    %v5542 = vpack.c.bf16 %v77, %v76
    %v5543 = vpack.c.bf16 %v79, %v78
    %v5544 = vpack.c.bf16 %v81, %v80
    %v5545 = vpack.c.bf16 %v83, %v82
    %v5546 = vpack.c.bf16 %v85, %v84
    %v5547 = vld [vmem:[%s10] sm:$0xf]
    %v5548 = vld [vmem:[%s10 + $0x4] sm:$0xf]
    %v5549 = vld [vmem:[%s10 + $0x8] sm:$0xf]
    %v5550 = vld [vmem:[%s10 + $0xc] sm:$0xf]
    %v5551 = vld [vmem:[%s10 + $0x10] sm:$0xf]
    %v5552 = vld [vmem:[%s10 + $0x14] sm:$0xf]
    %v5553 = vld [vmem:[%s10 + $0x18] sm:$0xf]
    %v5554 = vld [vmem:[%s10 + $0x1c] sm:$0xf]
    %v5563 = vunpack.c.l.b16 %v5547
    %v5564 = vunpack.c.l.b16 %v5548
    %v5565 = vunpack.c.l.b16 %v5549
    %v5566 = vunpack.c.l.b16 %v5550
    %v5567 = vunpack.c.l.b16 %v5551
    %v5568 = vunpack.c.l.b16 %v5552
    %v5569 = vunpack.c.l.b16 %v5553
    %v5570 = vunpack.c.l.b16 %v5554
    %v5571 = vpack.c.b16 %v5564, %v5563
    %v5572 = vpack.c.b16 %v5566, %v5565
    %v5573 = vpack.c.b16 %v5568, %v5567
    %v5574 = vpack.c.b16 %v5570, %v5569
    %v5580 = vsel %vm244, %v5531, 0
    %v5583 = vsel %vm244, %v5532, 0
    %v5586 = vsel %vm244, %v5533, 0
    %v5589 = vsel %vm244, %v5534, 0
    %v5592 = vsel %vm244, %v5535, 0
    %v5595 = vsel %vm244, %v5536, 0
    %v5598 = vsel %vm244, %v5537, 0
    %v5601 = vsel %vm244, %v5538, 0
    %v5604 = vsel %vm244, %v5539, 0
    %v5607 = vsel %vm244, %v5540, 0
    %v5610 = vsel %vm244, %v5541, 0
    %v5613 = vsel %vm244, %v5542, 0
    %v5616 = vsel %vm244, %v5543, 0
    %v5619 = vsel %vm244, %v5544, 0
    %v5622 = vsel %vm244, %v5545, 0
    %v5625 = vsel %vm244, %v5546, 0
    %5627 = vmatprep.subr.bf16.mxu0 0
    %5628 = vmatpush1.bf16.msra.mxu0 %v5571
    %5629 = vmatprep.subr.bf16.mxu0 0
    %5630 = vmatpush1.bf16.msra.mxu0 %v5572
    %5631 = vmatprep.subr.bf16.mxu0 0
    %5632 = vmatpush1.bf16.msra.mxu0 %v5573
    %5633 = vmatprep.subr.bf16.mxu0 0
    %5634 = vmatpush1.bf16.msra.mxu0 %v5574
    %5635 = vmatprep.subr.bf16.mxu0 0
    %5636 = vmatpush1.bf16.msra.mxu0 0
    %5637 = vmatprep.subr.bf16.mxu0 0
    %5638 = vmatpush1.bf16.msra.mxu0 0
    %5639 = vmatprep.subr.bf16.mxu0 0
    %5640 = vmatpush1.bf16.msra.mxu0 0
    %5641 = vmatprep.subr.bf16.mxu0 0
    %5642 = vmatpush1.bf16.msra.mxu0 0
    %5643 = vmatprep.subr.bf16.mxu0 0
    %5644 = vmatpush1.bf16.msra.mxu0 0
    %5645 = vmatprep.subr.bf16.mxu0 0
    %5646 = vmatpush1.bf16.msra.mxu0 0
    %5647 = vmatprep.subr.bf16.mxu0 0
    %5648 = vmatpush1.bf16.msra.mxu0 0
    %5649 = vmatprep.subr.bf16.mxu0 0
    %5650 = vmatpush1.bf16.msra.mxu0 0
    %5651 = vmatprep.subr.bf16.mxu0 0
    %5652 = vmatpush1.bf16.msra.mxu0 0
    %5653 = vmatprep.subr.bf16.mxu0 0
    %5654 = vmatpush1.bf16.msra.mxu0 0
    %5655 = vmatprep.subr.bf16.mxu0 0
    %5656 = vmatpush1.bf16.msra.mxu0 0
    %5657 = vmatprep.subr.bf16.mxu0 0
    %5658 = vmatpush1.bf16.msra.mxu0 0
    %5659 = vmatprep.mubr.bf16.mxu0 0
    %5660 = vmatmul.mubr.bf16.gmra.mrb[0].mxu0 %v5580
    %v5661 = vpop.f32.mrb[0].mxu0
    %v5662 = vadd.f32 0.0, %v5661
    %v5663 = vpop.f32.mrb[0].mxu0
    %v5664 = vpop.f32.mrb[0].mxu0
    %v5665 = vadd.f32 0.0, %v5664
    %v5666 = vpop.f32.mrb[0].mxu0
    %5667 = vmatprep.mubr.bf16.mxu0 0
    %5668 = vmatmul.mubr.bf16.gmra.mrb[0].mxu0 %v5583
    %v5669 = vpop.f32.mrb[0].mxu0
    %v5670 = vadd.f32 0.0, %v5669
    %v5671 = vpop.f32.mrb[0].mxu0
    %v5672 = vpop.f32.mrb[0].mxu0
    %v5673 = vadd.f32 0.0, %v5672
    %v5674 = vpop.f32.mrb[0].mxu0
    %5675 = vmatprep.mubr.bf16.mxu0 0
    %5676 = vmatmul.mubr.bf16.gmra.mrb[0].mxu0 %v5586
    %v5677 = vpop.f32.mrb[0].mxu0
    %v5678 = vadd.f32 0.0, %v5677
    %v5679 = vpop.f32.mrb[0].mxu0
    %v5680 = vpop.f32.mrb[0].mxu0
    %v5681 = vadd.f32 0.0, %v5680
    %v5682 = vpop.f32.mrb[0].mxu0
    %5683 = vmatprep.mubr.bf16.mxu0 0
    %5684 = vmatmul.mubr.bf16.gmra.mrb[0].mxu0 %v5589
    %v5685 = vpop.f32.mrb[0].mxu0
    %v5686 = vadd.f32 0.0, %v5685
    %v5687 = vpop.f32.mrb[0].mxu0
    %v5688 = vpop.f32.mrb[0].mxu0
    %v5689 = vadd.f32 0.0, %v5688
    %v5690 = vpop.f32.mrb[0].mxu0
    %5691 = vmatprep.mubr.bf16.mxu0 0
    %5692 = vmatmul.mubr.bf16.gmra.mrb[0].mxu0 %v5592
    %v5693 = vpop.f32.mrb[0].mxu0
    %v5694 = vadd.f32 0.0, %v5693
    %v5695 = vpop.f32.mrb[0].mxu0
    %v5696 = vpop.f32.mrb[0].mxu0
    %v5697 = vadd.f32 0.0, %v5696
    %v5698 = vpop.f32.mrb[0].mxu0
    %5699 = vmatprep.mubr.bf16.mxu0 0
    %5700 = vmatmul.mubr.bf16.gmra.mrb[0].mxu0 %v5595
    %v5701 = vpop.f32.mrb[0].mxu0
    %v5702 = vadd.f32 0.0, %v5701
    %v5703 = vpop.f32.mrb[0].mxu0
    %v5704 = vpop.f32.mrb[0].mxu0
    %v5705 = vadd.f32 0.0, %v5704
    %v5706 = vpop.f32.mrb[0].mxu0
    %5707 = vmatprep.mubr.bf16.mxu0 0
    %5708 = vmatmul.mubr.bf16.gmra.mrb[0].mxu0 %v5598
    %v5709 = vpop.f32.mrb[0].mxu0
    %v5710 = vadd.f32 0.0, %v5709
    %v5711 = vpop.f32.mrb[0].mxu0
    %v5712 = vpop.f32.mrb[0].mxu0
    %v5713 = vadd.f32 0.0, %v5712
    %v5714 = vpop.f32.mrb[0].mxu0
    %5715 = vmatprep.mubr.bf16.mxu0 0
    %5716 = vmatmul.mubr.bf16.gmra.mrb[0].mxu0 %v5601
    %v5717 = vpop.f32.mrb[0].mxu0
    %v5718 = vadd.f32 0.0, %v5717
    %v5719 = vpop.f32.mrb[0].mxu0
    %v5720 = vpop.f32.mrb[0].mxu0
    %v5721 = vadd.f32 0.0, %v5720
    %v5722 = vpop.f32.mrb[0].mxu0
    %5723 = vmatprep.mubr.bf16.mxu0 0
    %5724 = vmatmul.mubr.bf16.gmra.mrb[0].mxu0 %v5604
    %v5725 = vpop.f32.mrb[0].mxu0
    %v5726 = vadd.f32 0.0, %v5725
    %v5727 = vpop.f32.mrb[0].mxu0
    %v5728 = vpop.f32.mrb[0].mxu0
    %v5729 = vadd.f32 0.0, %v5728
    %v5730 = vpop.f32.mrb[0].mxu0
    %5731 = vmatprep.mubr.bf16.mxu0 0
    %5732 = vmatmul.mubr.bf16.gmra.mrb[0].mxu0 %v5607
    %v5733 = vpop.f32.mrb[0].mxu0
    %v5734 = vadd.f32 0.0, %v5733
    %v5735 = vpop.f32.mrb[0].mxu0
    %v5736 = vpop.f32.mrb[0].mxu0
    %v5737 = vadd.f32 0.0, %v5736
    %v5738 = vpop.f32.mrb[0].mxu0
    %5739 = vmatprep.mubr.bf16.mxu0 0
    %5740 = vmatmul.mubr.bf16.gmra.mrb[0].mxu0 %v5610
    %v5741 = vpop.f32.mrb[0].mxu0
    %v5742 = vadd.f32 0.0, %v5741
    %v5743 = vpop.f32.mrb[0].mxu0
    %v5744 = vpop.f32.mrb[0].mxu0
    %v5745 = vadd.f32 0.0, %v5744
    %v5746 = vpop.f32.mrb[0].mxu0
    %5747 = vmatprep.mubr.bf16.mxu0 0
    %5748 = vmatmul.mubr.bf16.gmra.mrb[0].mxu0 %v5613
    %v5749 = vpop.f32.mrb[0].mxu0
    %v5750 = vadd.f32 0.0, %v5749
    %v5751 = vpop.f32.mrb[0].mxu0
    %v5752 = vpop.f32.mrb[0].mxu0
    %v5753 = vadd.f32 0.0, %v5752
    %v5754 = vpop.f32.mrb[0].mxu0
    %5755 = vmatprep.mubr.bf16.mxu0 0
    %5756 = vmatmul.mubr.bf16.gmra.mrb[0].mxu0 %v5616
    %v5757 = vpop.f32.mrb[0].mxu0
    %v5758 = vadd.f32 0.0, %v5757
    %v5759 = vpop.f32.mrb[0].mxu0
    %v5760 = vpop.f32.mrb[0].mxu0
    %v5761 = vadd.f32 0.0, %v5760
    %v5762 = vpop.f32.mrb[0].mxu0
    %5763 = vmatprep.mubr.bf16.mxu0 0
    %5764 = vmatmul.mubr.bf16.gmra.mrb[0].mxu0 %v5619
    %v5765 = vpop.f32.mrb[0].mxu0
    %v5766 = vadd.f32 0.0, %v5765
    %v5767 = vpop.f32.mrb[0].mxu0
    %v5768 = vpop.f32.mrb[0].mxu0
    %v5769 = vadd.f32 0.0, %v5768
    %v5770 = vpop.f32.mrb[0].mxu0
    %5771 = vmatprep.mubr.bf16.mxu0 0
    %5772 = vmatmul.mubr.bf16.gmra.mrb[0].mxu0 %v5622
    %v5773 = vpop.f32.mrb[0].mxu0
    %v5774 = vadd.f32 0.0, %v5773
    %v5775 = vpop.f32.mrb[0].mxu0
    %v5776 = vpop.f32.mrb[0].mxu0
    %v5777 = vadd.f32 0.0, %v5776
    %v5778 = vpop.f32.mrb[0].mxu0
    %5779 = vmatprep.mubr.bf16.mxu0 0
    %5780 = vmatmul.mubr.bf16.gmra.mrb[0].mxu0 %v5625
    %v5781 = vpop.f32.mrb[0].mxu0
    %v5782 = vadd.f32 0.0, %v5781
    %v5783 = vpop.f32.mrb[0].mxu0
    %v5784 = vpop.f32.mrb[0].mxu0
    %v5785 = vadd.f32 0.0, %v5784
    %v5786 = vpop.f32.mrb[0].mxu0
    %5787 = vdwg.mxu0
    %vm5788 = vcmask 64512
    %v5790 = vsel %vm5788, %v5514, 0
    %v5793 = vsel %vm5788, %v5515, 0
    %v5796 = vsel %vm5788, %v5516, 0
    %v5799 = vsel %vm5788, %v5517, 0
    %v5802 = vsel %vm5788, %v5518, 0
    %v5805 = vsel %vm5788, %v5519, 0
    %v5808 = vsel %vm5788, %v5520, 0
    %v5811 = vsel %vm5788, %v5521, 0
    %v5814 = vsel %vm5788, %v5522, 0
    %v5817 = vsel %vm5788, %v5523, 0
    %v5820 = vsel %vm5788, %v5524, 0
    %v5823 = vsel %vm5788, %v5525, 0
    %v5826 = vsel %vm5788, %v5526, 0
    %v5829 = vsel %vm5788, %v5527, 0
    %v5832 = vsel %vm5788, %v5528, 0
    %v5835 = vsel %vm5788, %v5529, 0
    %vm5837 = vcmask 1043456
    %v5839 = vsel %vm5837, %v5530, 0
    %5841 = vmatprep.subr.bf16.mxu0 0
    %5842 = vmatpush1.bf16.msra.mxu0 %v5839
    %5843 = vmatprep.subr.bf16.mxu0 0
    %5844 = vmatpush1.bf16.msra.mxu0 0
    %5845 = vmatprep.subr.bf16.mxu0 0
    %5846 = vmatpush1.bf16.msra.mxu0 0
    %5847 = vmatprep.subr.bf16.mxu0 0
    %5848 = vmatpush1.bf16.msra.mxu0 0
    %5849 = vmatprep.subr.bf16.mxu0 0
    %5850 = vmatpush1.bf16.msra.mxu0 0
    %5851 = vmatprep.subr.bf16.mxu0 0
    %5852 = vmatpush1.bf16.msra.mxu0 0
    %5853 = vmatprep.subr.bf16.mxu0 0
    %5854 = vmatpush1.bf16.msra.mxu0 0
    %5855 = vmatprep.subr.bf16.mxu0 0
    %5856 = vmatpush1.bf16.msra.mxu0 0
    %5857 = vmatprep.subr.bf16.mxu0 0
    %5858 = vmatpush1.bf16.msra.mxu0 0
    %5859 = vmatprep.subr.bf16.mxu0 0
    %5860 = vmatpush1.bf16.msra.mxu0 0
    %5861 = vmatprep.subr.bf16.mxu0 0
    %5862 = vmatpush1.bf16.msra.mxu0 0
    %5863 = vmatprep.subr.bf16.mxu0 0
    %5864 = vmatpush1.bf16.msra.mxu0 0
    %5865 = vmatprep.subr.bf16.mxu0 0
    %5866 = vmatpush1.bf16.msra.mxu0 0
    %5867 = vmatprep.subr.bf16.mxu0 0
    %5868 = vmatpush1.bf16.msra.mxu0 0
    %5869 = vmatprep.subr.bf16.mxu0 0
    %5870 = vmatpush1.bf16.msra.mxu0 0
    %5871 = vmatprep.subr.bf16.mxu0 0
    %5872 = vmatpush1.bf16.msra.mxu0 0
    %5873 = vmatprep.mubr.bf16.mxu0 0
    %5874 = vmatmul.mubr.bf16.gmra.mrb[0].mxu0 %v5790
    %v5875 = vpop.f32.mrb[0].mxu0
    %v5876 = vadd.f32 %v5662, %v5875
    %v5877 = vpop.f32.mrb[0].mxu0
    %v5878 = vpop.f32.mrb[0].mxu0
    %v5879 = vadd.f32 %v5665, %v5878
    %v5880 = vpop.f32.mrb[0].mxu0
    %5881 = vmatprep.mubr.bf16.mxu0 0
    %5882 = vmatmul.mubr.bf16.gmra.mrb[0].mxu0 %v5793
    %v5883 = vpop.f32.mrb[0].mxu0
    %v5884 = vadd.f32 %v5670, %v5883
    %v5885 = vpop.f32.mrb[0].mxu0
    %v5886 = vpop.f32.mrb[0].mxu0
    %v5887 = vadd.f32 %v5673, %v5886
    %v5888 = vpop.f32.mrb[0].mxu0
    %5889 = vmatprep.mubr.bf16.mxu0 0
    %5890 = vmatmul.mubr.bf16.gmra.mrb[0].mxu0 %v5796
    %v5891 = vpop.f32.mrb[0].mxu0
    %v5892 = vadd.f32 %v5678, %v5891
    %v5893 = vpop.f32.mrb[0].mxu0
    %v5894 = vpop.f32.mrb[0].mxu0
    %v5895 = vadd.f32 %v5681, %v5894
    %v5896 = vpop.f32.mrb[0].mxu0
    %5897 = vmatprep.mubr.bf16.mxu0 0
    %5898 = vmatmul.mubr.bf16.gmra.mrb[0].mxu0 %v5799
    %v5899 = vpop.f32.mrb[0].mxu0
    %v5900 = vadd.f32 %v5686, %v5899
    %v5901 = vpop.f32.mrb[0].mxu0
    %v5902 = vpop.f32.mrb[0].mxu0
    %v5903 = vadd.f32 %v5689, %v5902
    %v5904 = vpop.f32.mrb[0].mxu0
    %5905 = vmatprep.mubr.bf16.mxu0 0
    %5906 = vmatmul.mubr.bf16.gmra.mrb[0].mxu0 %v5802
    %v5907 = vpop.f32.mrb[0].mxu0
    %v5908 = vadd.f32 %v5694, %v5907
    %v5909 = vpop.f32.mrb[0].mxu0
    %v5910 = vpop.f32.mrb[0].mxu0
    %v5911 = vadd.f32 %v5697, %v5910
    %v5912 = vpop.f32.mrb[0].mxu0
    %5913 = vmatprep.mubr.bf16.mxu0 0
    %5914 = vmatmul.mubr.bf16.gmra.mrb[0].mxu0 %v5805
    %v5915 = vpop.f32.mrb[0].mxu0
    %v5916 = vadd.f32 %v5702, %v5915
    %v5917 = vpop.f32.mrb[0].mxu0
    %v5918 = vpop.f32.mrb[0].mxu0
    %v5919 = vadd.f32 %v5705, %v5918
    %v5920 = vpop.f32.mrb[0].mxu0
    %5921 = vmatprep.mubr.bf16.mxu0 0
    %5922 = vmatmul.mubr.bf16.gmra.mrb[0].mxu0 %v5808
    %v5923 = vpop.f32.mrb[0].mxu0
    %v5924 = vadd.f32 %v5710, %v5923
    %v5925 = vpop.f32.mrb[0].mxu0
    %v5926 = vpop.f32.mrb[0].mxu0
    %v5927 = vadd.f32 %v5713, %v5926
    %v5928 = vpop.f32.mrb[0].mxu0
    %5929 = vmatprep.mubr.bf16.mxu0 0
    %5930 = vmatmul.mubr.bf16.gmra.mrb[0].mxu0 %v5811
    %v5931 = vpop.f32.mrb[0].mxu0
    %v5932 = vadd.f32 %v5718, %v5931
    %v5933 = vpop.f32.mrb[0].mxu0
    %v5934 = vpop.f32.mrb[0].mxu0
    %v5935 = vadd.f32 %v5721, %v5934
    %v5936 = vpop.f32.mrb[0].mxu0
    %5937 = vmatprep.mubr.bf16.mxu0 0
    %5938 = vmatmul.mubr.bf16.gmra.mrb[0].mxu0 %v5814
    %v5939 = vpop.f32.mrb[0].mxu0
    %v5940 = vadd.f32 %v5726, %v5939
    %v5941 = vpop.f32.mrb[0].mxu0
    %v5942 = vpop.f32.mrb[0].mxu0
    %v5943 = vadd.f32 %v5729, %v5942
    %v5944 = vpop.f32.mrb[0].mxu0
    %5945 = vmatprep.mubr.bf16.mxu0 0
    %5946 = vmatmul.mubr.bf16.gmra.mrb[0].mxu0 %v5817
    %v5947 = vpop.f32.mrb[0].mxu0
    %v5948 = vadd.f32 %v5734, %v5947
    %v5949 = vpop.f32.mrb[0].mxu0
    %v5950 = vpop.f32.mrb[0].mxu0
    %v5951 = vadd.f32 %v5737, %v5950
    %v5952 = vpop.f32.mrb[0].mxu0
    %5953 = vmatprep.mubr.bf16.mxu0 0
    %5954 = vmatmul.mubr.bf16.gmra.mrb[0].mxu0 %v5820
    %v5955 = vpop.f32.mrb[0].mxu0
    %v5956 = vadd.f32 %v5742, %v5955
    %v5957 = vpop.f32.mrb[0].mxu0
    %v5958 = vpop.f32.mrb[0].mxu0
    %v5959 = vadd.f32 %v5745, %v5958
    %v5960 = vpop.f32.mrb[0].mxu0
    %5961 = vmatprep.mubr.bf16.mxu0 0
    %5962 = vmatmul.mubr.bf16.gmra.mrb[0].mxu0 %v5823
    %v5963 = vpop.f32.mrb[0].mxu0
    %v5964 = vadd.f32 %v5750, %v5963
    %v5965 = vpop.f32.mrb[0].mxu0
    %v5966 = vpop.f32.mrb[0].mxu0
    %v5967 = vadd.f32 %v5753, %v5966
    %v5968 = vpop.f32.mrb[0].mxu0
    %5969 = vmatprep.mubr.bf16.mxu0 0
    %5970 = vmatmul.mubr.bf16.gmra.mrb[0].mxu0 %v5826
    %v5971 = vpop.f32.mrb[0].mxu0
    %v5972 = vadd.f32 %v5758, %v5971
    %v5973 = vpop.f32.mrb[0].mxu0
    %v5974 = vpop.f32.mrb[0].mxu0
    %v5975 = vadd.f32 %v5761, %v5974
    %v5976 = vpop.f32.mrb[0].mxu0
    %5977 = vmatprep.mubr.bf16.mxu0 0
    %5978 = vmatmul.mubr.bf16.gmra.mrb[0].mxu0 %v5829
    %v5979 = vpop.f32.mrb[0].mxu0
    %v5980 = vadd.f32 %v5766, %v5979
    %v5981 = vpop.f32.mrb[0].mxu0
    %v5982 = vpop.f32.mrb[0].mxu0
    %v5983 = vadd.f32 %v5769, %v5982
    %v5984 = vpop.f32.mrb[0].mxu0
    %5985 = vmatprep.mubr.bf16.mxu0 0
    %5986 = vmatmul.mubr.bf16.gmra.mrb[0].mxu0 %v5832
    %v5987 = vpop.f32.mrb[0].mxu0
    %v5988 = vadd.f32 %v5774, %v5987
    %v5989 = vpop.f32.mrb[0].mxu0
    %v5990 = vpop.f32.mrb[0].mxu0
    %v5991 = vadd.f32 %v5777, %v5990
    %v5992 = vpop.f32.mrb[0].mxu0
    %5993 = vmatprep.mubr.bf16.mxu0 0
    %5994 = vmatmul.mubr.bf16.gmra.mrb[0].mxu0 %v5835
    %v5995 = vpop.f32.mrb[0].mxu0
    %v5996 = vadd.f32 %v5782, %v5995
    %v5997 = vpop.f32.mrb[0].mxu0
    %v5998 = vpop.f32.mrb[0].mxu0
    %v5999 = vadd.f32 %v5785, %v5998
    %v6000 = vpop.f32.mrb[0].mxu0
    %6001 = vdwg.mxu0
    %v6034 = vrot.slane %v5879, 7
    %vm6035 = vcmask 1041409
    %v6036 = vsel %vm6035, %v6034, %v5876
    %v6037 = vrot.slane %v5884, 6
    %vm6038 = vcmask 1042434
    %v6039 = vsel %vm6038, %v6037, %v6036
    %v6040 = vrot.slane %v5887, 5
    %vm6041 = vcmask 1043459
    %v6042 = vsel %vm6041, %v6040, %v6039
    %v6043 = vrot.slane %v5892, 4
    %vm6044 = vcmask 1044484
    %v6045 = vsel %vm6044, %v6043, %v6042
    %v6046 = vrot.slane %v5895, 3
    %vm6047 = vcmask 1045509
    %v6048 = vsel %vm6047, %v6046, %v6045
    %v6049 = vrot.slane %v5900, 2
    %vm6050 = vcmask 1046534
    %v6051 = vsel %vm6050, %v6049, %v6048
    %v6052 = vrot.slane %v5903, 1
    %vm6053 = vcmask 1047559
    %v6054 = vsel %vm6053, %v6052, %v6051
    %v6055 = vrot.slane %v5911, 7
    %v6056 = vsel %vm6035, %v6055, %v5908
    %v6057 = vrot.slane %v5916, 6
    %v6058 = vsel %vm6038, %v6057, %v6056
    %v6059 = vrot.slane %v5919, 5
    %v6060 = vsel %vm6041, %v6059, %v6058
    %v6061 = vrot.slane %v5924, 4
    %v6062 = vsel %vm6044, %v6061, %v6060
    %v6063 = vrot.slane %v5927, 3
    %v6064 = vsel %vm6047, %v6063, %v6062
    %v6065 = vrot.slane %v5932, 2
    %v6066 = vsel %vm6050, %v6065, %v6064
    %v6067 = vrot.slane %v5935, 1
    %v6068 = vsel %vm6053, %v6067, %v6066
    %v6069 = vrot.slane %v5943, 7
    %v6070 = vsel %vm6035, %v6069, %v5940
    %v6071 = vrot.slane %v5948, 6
    %v6072 = vsel %vm6038, %v6071, %v6070
    %v6073 = vrot.slane %v5951, 5
    %v6074 = vsel %vm6041, %v6073, %v6072
    %v6075 = vrot.slane %v5956, 4
    %v6076 = vsel %vm6044, %v6075, %v6074
    %v6077 = vrot.slane %v5959, 3
    %v6078 = vsel %vm6047, %v6077, %v6076
    %v6079 = vrot.slane %v5964, 2
    %v6080 = vsel %vm6050, %v6079, %v6078
    %v6081 = vrot.slane %v5967, 1
    %v6082 = vsel %vm6053, %v6081, %v6080
    %v6083 = vrot.slane %v5975, 7
    %v6084 = vsel %vm6035, %v6083, %v5972
    %v6085 = vrot.slane %v5980, 6
    %v6086 = vsel %vm6038, %v6085, %v6084
    %v6087 = vrot.slane %v5983, 5
    %v6088 = vsel %vm6041, %v6087, %v6086
    %v6089 = vrot.slane %v5988, 4
    %v6090 = vsel %vm6044, %v6089, %v6088
    %v6091 = vrot.slane %v5991, 3
    %v6092 = vsel %vm6047, %v6091, %v6090
    %v6093 = vrot.slane %v5996, 2
    %v6094 = vsel %vm6050, %v6093, %v6092
    %v6095 = vrot.slane %v5999, 1
    %v6096 = vsel %vm6053, %v6095, %v6094
    %6101 = vst.msk [vmem:[#allocation7] sm:$0xff] %vm1551, %v6054
    %6102 = vst.msk [vmem:[#allocation7 + $0x10] sm:$0xff] %vm1551, %v6068
    %6103 = vst.msk [vmem:[#allocation7 + $0x20] sm:$0xff] %vm1551, %v6082
    %6104 = vst.msk [vmem:[#allocation7 + $0x30] sm:$0xff] %vm1551, %v6096
    %v6105 = vrot.slane %v5876, 1
    %v6106 = vsel %vm6035, %v5879, %v6105
    %v6107 = vrot.slane %v5884, 7
    %v6108 = vsel %vm6038, %v6107, %v6106
    %v6109 = vrot.slane %v5887, 6
    %v6110 = vsel %vm6041, %v6109, %v6108
    %v6111 = vrot.slane %v5892, 5
    %v6112 = vsel %vm6044, %v6111, %v6110
    %v6113 = vrot.slane %v5895, 4
    %v6114 = vsel %vm6047, %v6113, %v6112
    %v6115 = vrot.slane %v5900, 3
    %v6116 = vsel %vm6050, %v6115, %v6114
    %v6117 = vrot.slane %v5903, 2
    %v6118 = vsel %vm6053, %v6117, %v6116
    %v6119 = vrot.slane %v5908, 1
    %v6120 = vsel %vm6035, %v5911, %v6119
    %v6121 = vrot.slane %v5916, 7
    %v6122 = vsel %vm6038, %v6121, %v6120
    %v6123 = vrot.slane %v5919, 6
    %v6124 = vsel %vm6041, %v6123, %v6122
    %v6125 = vrot.slane %v5924, 5
    %v6126 = vsel %vm6044, %v6125, %v6124
    %v6127 = vrot.slane %v5927, 4
    %v6128 = vsel %vm6047, %v6127, %v6126
    %v6129 = vrot.slane %v5932, 3
    %v6130 = vsel %vm6050, %v6129, %v6128
    %v6131 = vrot.slane %v5935, 2
    %v6132 = vsel %vm6053, %v6131, %v6130
    %v6133 = vrot.slane %v5940, 1
    %v6134 = vsel %vm6035, %v5943, %v6133
    %v6135 = vrot.slane %v5948, 7
    %v6136 = vsel %vm6038, %v6135, %v6134
    %v6137 = vrot.slane %v5951, 6
    %v6138 = vsel %vm6041, %v6137, %v6136
    %v6139 = vrot.slane %v5956, 5
    %v6140 = vsel %vm6044, %v6139, %v6138
    %v6141 = vrot.slane %v5959, 4
    %v6142 = vsel %vm6047, %v6141, %v6140
    %v6143 = vrot.slane %v5964, 3
    %v6144 = vsel %vm6050, %v6143, %v6142
    %v6145 = vrot.slane %v5967, 2
    %v6146 = vsel %vm6053, %v6145, %v6144
    %v6147 = vrot.slane %v5972, 1
    %v6148 = vsel %vm6035, %v5975, %v6147
    %v6149 = vrot.slane %v5980, 7
    %v6150 = vsel %vm6038, %v6149, %v6148
    %v6151 = vrot.slane %v5983, 6
    %v6152 = vsel %vm6041, %v6151, %v6150
    %v6153 = vrot.slane %v5988, 5
    %v6154 = vsel %vm6044, %v6153, %v6152
    %v6155 = vrot.slane %v5991, 4
    %v6156 = vsel %vm6047, %v6155, %v6154
    %v6157 = vrot.slane %v5996, 3
    %v6158 = vsel %vm6050, %v6157, %v6156
    %v6159 = vrot.slane %v5999, 2
    %v6160 = vsel %vm6053, %v6159, %v6158
    %6161 = vrot.lane.b32.xlu0 %v6118, 32
    %v6162 = vpop.permute.xlu0 %6161
    %6163 = vrot.lane.b32.xlu0 %v6132, 32
    %v6164 = vpop.permute.xlu0 %6163
    %6165 = vrot.lane.b32.xlu0 %v6146, 32
    %v6166 = vpop.permute.xlu0 %6165
    %6167 = vrot.lane.b32.xlu0 %v6160, 32
    %v6168 = vpop.permute.xlu0 %6167
    %6173 = vst.msk [vmem:[#allocation7] sm:$0xff] %vm2179, %v6162
    %6174 = vst.msk [vmem:[#allocation7 + $0x10] sm:$0xff] %vm2179, %v6164
    %6175 = vst.msk [vmem:[#allocation7 + $0x20] sm:$0xff] %vm2179, %v6166
    %6176 = vst.msk [vmem:[#allocation7 + $0x30] sm:$0xff] %vm2179, %v6168
    %v6177 = vrot.slane %v5876, 2
    %v6178 = vrot.slane %v5879, 1
    %v6179 = vsel %vm6035, %v6178, %v6177
    %v6180 = vsel %vm6038, %v5884, %v6179
    %v6181 = vrot.slane %v5887, 7
    %v6182 = vsel %vm6041, %v6181, %v6180
    %v6183 = vrot.slane %v5892, 6
    %v6184 = vsel %vm6044, %v6183, %v6182
    %v6185 = vrot.slane %v5895, 5
    %v6186 = vsel %vm6047, %v6185, %v6184
    %v6187 = vrot.slane %v5900, 4
    %v6188 = vsel %vm6050, %v6187, %v6186
    %v6189 = vrot.slane %v5903, 3
    %v6190 = vsel %vm6053, %v6189, %v6188
    %v6191 = vrot.slane %v5908, 2
    %v6192 = vrot.slane %v5911, 1
    %v6193 = vsel %vm6035, %v6192, %v6191
    %v6194 = vsel %vm6038, %v5916, %v6193
    %v6195 = vrot.slane %v5919, 7
    %v6196 = vsel %vm6041, %v6195, %v6194
    %v6197 = vrot.slane %v5924, 6
    %v6198 = vsel %vm6044, %v6197, %v6196
    %v6199 = vrot.slane %v5927, 5
    %v6200 = vsel %vm6047, %v6199, %v6198
    %v6201 = vrot.slane %v5932, 4
    %v6202 = vsel %vm6050, %v6201, %v6200
    %v6203 = vrot.slane %v5935, 3
    %v6204 = vsel %vm6053, %v6203, %v6202
    %v6205 = vrot.slane %v5940, 2
    %v6206 = vrot.slane %v5943, 1
    %v6207 = vsel %vm6035, %v6206, %v6205
    %v6208 = vsel %vm6038, %v5948, %v6207
    %v6209 = vrot.slane %v5951, 7
    %v6210 = vsel %vm6041, %v6209, %v6208
    %v6211 = vrot.slane %v5956, 6
    %v6212 = vsel %vm6044, %v6211, %v6210
    %v6213 = vrot.slane %v5959, 5
    %v6214 = vsel %vm6047, %v6213, %v6212
    %v6215 = vrot.slane %v5964, 4
    %v6216 = vsel %vm6050, %v6215, %v6214
    %v6217 = vrot.slane %v5967, 3
    %v6218 = vsel %vm6053, %v6217, %v6216
    %v6219 = vrot.slane %v5972, 2
    %v6220 = vrot.slane %v5975, 1
    %v6221 = vsel %vm6035, %v6220, %v6219
    %v6222 = vsel %vm6038, %v5980, %v6221
    %v6223 = vrot.slane %v5983, 7
    %v6224 = vsel %vm6041, %v6223, %v6222
    %v6225 = vrot.slane %v5988, 6
    %v6226 = vsel %vm6044, %v6225, %v6224
    %v6227 = vrot.slane %v5991, 5
    %v6228 = vsel %vm6047, %v6227, %v6226
    %v6229 = vrot.slane %v5996, 4
    %v6230 = vsel %vm6050, %v6229, %v6228
    %v6231 = vrot.slane %v5999, 3
    %v6232 = vsel %vm6053, %v6231, %v6230
    %6233 = vrot.lane.b32.xlu0 %v6190, 64
    %v6234 = vpop.permute.xlu0 %6233
    %6235 = vrot.lane.b32.xlu0 %v6204, 64
    %v6236 = vpop.permute.xlu0 %6235
    %6237 = vrot.lane.b32.xlu0 %v6218, 64
    %v6238 = vpop.permute.xlu0 %6237
    %6239 = vrot.lane.b32.xlu0 %v6232, 64
    %v6240 = vpop.permute.xlu0 %6239
    %6245 = vst.msk [vmem:[#allocation7] sm:$0xff] %vm2551, %v6234
    %6246 = vst.msk [vmem:[#allocation7 + $0x10] sm:$0xff] %vm2551, %v6236
    %6247 = vst.msk [vmem:[#allocation7 + $0x20] sm:$0xff] %vm2551, %v6238
    %6248 = vst.msk [vmem:[#allocation7 + $0x30] sm:$0xff] %vm2551, %v6240
    %v6249 = vrot.slane %v5876, 3
    %v6250 = vrot.slane %v5879, 2
    %v6251 = vsel %vm6035, %v6250, %v6249
    %v6252 = vrot.slane %v5884, 1
    %v6253 = vsel %vm6038, %v6252, %v6251
    %v6254 = vsel %vm6041, %v5887, %v6253
    %v6255 = vrot.slane %v5892, 7
    %v6256 = vsel %vm6044, %v6255, %v6254
    %v6257 = vrot.slane %v5895, 6
    %v6258 = vsel %vm6047, %v6257, %v6256
    %v6259 = vrot.slane %v5900, 5
    %v6260 = vsel %vm6050, %v6259, %v6258
    %v6261 = vrot.slane %v5903, 4
    %v6262 = vsel %vm6053, %v6261, %v6260
    %v6263 = vrot.slane %v5908, 3
    %v6264 = vrot.slane %v5911, 2
    %v6265 = vsel %vm6035, %v6264, %v6263
    %v6266 = vrot.slane %v5916, 1
    %v6267 = vsel %vm6038, %v6266, %v6265
    %v6268 = vsel %vm6041, %v5919, %v6267
    %v6269 = vrot.slane %v5924, 7
    %v6270 = vsel %vm6044, %v6269, %v6268
    %v6271 = vrot.slane %v5927, 6
    %v6272 = vsel %vm6047, %v6271, %v6270
    %v6273 = vrot.slane %v5932, 5
    %v6274 = vsel %vm6050, %v6273, %v6272
    %v6275 = vrot.slane %v5935, 4
    %v6276 = vsel %vm6053, %v6275, %v6274
    %v6277 = vrot.slane %v5940, 3
    %v6278 = vrot.slane %v5943, 2
    %v6279 = vsel %vm6035, %v6278, %v6277
    %v6280 = vrot.slane %v5948, 1
    %v6281 = vsel %vm6038, %v6280, %v6279
    %v6282 = vsel %vm6041, %v5951, %v6281
    %v6283 = vrot.slane %v5956, 7
    %v6284 = vsel %vm6044, %v6283, %v6282
    %v6285 = vrot.slane %v5959, 6
    %v6286 = vsel %vm6047, %v6285, %v6284
    %v6287 = vrot.slane %v5964, 5
    %v6288 = vsel %vm6050, %v6287, %v6286
    %v6289 = vrot.slane %v5967, 4
    %v6290 = vsel %vm6053, %v6289, %v6288
    %v6291 = vrot.slane %v5972, 3
    %v6292 = vrot.slane %v5975, 2
    %v6293 = vsel %vm6035, %v6292, %v6291
    %v6294 = vrot.slane %v5980, 1
    %v6295 = vsel %vm6038, %v6294, %v6293
    %v6296 = vsel %vm6041, %v5983, %v6295
    %v6297 = vrot.slane %v5988, 7
    %v6298 = vsel %vm6044, %v6297, %v6296
    %v6299 = vrot.slane %v5991, 6
    %v6300 = vsel %vm6047, %v6299, %v6298
    %v6301 = vrot.slane %v5996, 5
    %v6302 = vsel %vm6050, %v6301, %v6300
    %v6303 = vrot.slane %v5999, 4
    %v6304 = vsel %vm6053, %v6303, %v6302
    %6305 = vrot.lane.b32.xlu0 %v6262, 96
    %v6306 = vpop.permute.xlu0 %6305
    %6307 = vrot.lane.b32.xlu0 %v6276, 96
    %v6308 = vpop.permute.xlu0 %6307
    %6309 = vrot.lane.b32.xlu0 %v6290, 96
    %v6310 = vpop.permute.xlu0 %6309
    %6311 = vrot.lane.b32.xlu0 %v6304, 96
    %v6312 = vpop.permute.xlu0 %6311
    %6317 = vst.msk [vmem:[#allocation7] sm:$0xff] %vm2728, %v6306
    %6318 = vst.msk [vmem:[#allocation7 + $0x10] sm:$0xff] %vm2728, %v6308
    %6319 = vst.msk [vmem:[#allocation7 + $0x20] sm:$0xff] %vm2728, %v6310
    %6320 = vst.msk [vmem:[#allocation7 + $0x30] sm:$0xff] %vm2728, %v6312
    %v6321 = vrot.slane %v5876, 4
    %v6322 = vrot.slane %v5879, 3
    %v6323 = vsel %vm6035, %v6322, %v6321
    %v6324 = vrot.slane %v5884, 2
    %v6325 = vsel %vm6038, %v6324, %v6323
    %v6326 = vrot.slane %v5887, 1
    %v6327 = vsel %vm6041, %v6326, %v6325
    %v6328 = vsel %vm6044, %v5892, %v6327
    %v6329 = vrot.slane %v5895, 7
    %v6330 = vsel %vm6047, %v6329, %v6328
    %v6331 = vrot.slane %v5900, 6
    %v6332 = vsel %vm6050, %v6331, %v6330
    %v6333 = vrot.slane %v5903, 5
    %v6334 = vsel %vm6053, %v6333, %v6332
    %v6335 = vrot.slane %v5908, 4
    %v6336 = vrot.slane %v5911, 3
    %v6337 = vsel %vm6035, %v6336, %v6335
    %v6338 = vrot.slane %v5916, 2
    %v6339 = vsel %vm6038, %v6338, %v6337
    %v6340 = vrot.slane %v5919, 1
    %v6341 = vsel %vm6041, %v6340, %v6339
    %v6342 = vsel %vm6044, %v5924, %v6341
    %v6343 = vrot.slane %v5927, 7
    %v6344 = vsel %vm6047, %v6343, %v6342
    %v6345 = vrot.slane %v5932, 6
    %v6346 = vsel %vm6050, %v6345, %v6344
    %v6347 = vrot.slane %v5935, 5
    %v6348 = vsel %vm6053, %v6347, %v6346
    %v6349 = vrot.slane %v5940, 4
    %v6350 = vrot.slane %v5943, 3
    %v6351 = vsel %vm6035, %v6350, %v6349
    %v6352 = vrot.slane %v5948, 2
    %v6353 = vsel %vm6038, %v6352, %v6351
    %v6354 = vrot.slane %v5951, 1
    %v6355 = vsel %vm6041, %v6354, %v6353
    %v6356 = vsel %vm6044, %v5956, %v6355
    %v6357 = vrot.slane %v5959, 7
    %v6358 = vsel %vm6047, %v6357, %v6356
    %v6359 = vrot.slane %v5964, 6
    %v6360 = vsel %vm6050, %v6359, %v6358
    %v6361 = vrot.slane %v5967, 5
    %v6362 = vsel %vm6053, %v6361, %v6360
    %v6363 = vrot.slane %v5972, 4
    %v6364 = vrot.slane %v5975, 3
    %v6365 = vsel %vm6035, %v6364, %v6363
    %v6366 = vrot.slane %v5980, 2
    %v6367 = vsel %vm6038, %v6366, %v6365
    %v6368 = vrot.slane %v5983, 1
    %v6369 = vsel %vm6041, %v6368, %v6367
    %v6370 = vsel %vm6044, %v5988, %v6369
    %v6371 = vrot.slane %v5991, 7
    %v6372 = vsel %vm6047, %v6371, %v6370
    %v6373 = vrot.slane %v5996, 6
    %v6374 = vsel %vm6050, %v6373, %v6372
    %v6375 = vrot.slane %v5999, 5
    %v6376 = vsel %vm6053, %v6375, %v6374
    %6381 = vst.msk [vmem:[#allocation7 + $0x8] sm:$0xff] %vm1551, %v6334
    %6382 = vst.msk [vmem:[#allocation7 + $0x18] sm:$0xff] %vm1551, %v6348
    %6383 = vst.msk [vmem:[#allocation7 + $0x28] sm:$0xff] %vm1551, %v6362
    %6384 = vst.msk [vmem:[#allocation7 + $0x38] sm:$0xff] %vm1551, %v6376
    %v6385 = vrot.slane %v5876, 5
    %v6386 = vrot.slane %v5879, 4
    %v6387 = vsel %vm6035, %v6386, %v6385
    %v6388 = vrot.slane %v5884, 3
    %v6389 = vsel %vm6038, %v6388, %v6387
    %v6390 = vrot.slane %v5887, 2
    %v6391 = vsel %vm6041, %v6390, %v6389
    %v6392 = vrot.slane %v5892, 1
    %v6393 = vsel %vm6044, %v6392, %v6391
    %v6394 = vsel %vm6047, %v5895, %v6393
    %v6395 = vrot.slane %v5900, 7
    %v6396 = vsel %vm6050, %v6395, %v6394
    %v6397 = vrot.slane %v5903, 6
    %v6398 = vsel %vm6053, %v6397, %v6396
    %v6399 = vrot.slane %v5908, 5
    %v6400 = vrot.slane %v5911, 4
    %v6401 = vsel %vm6035, %v6400, %v6399
    %v6402 = vrot.slane %v5916, 3
    %v6403 = vsel %vm6038, %v6402, %v6401
    %v6404 = vrot.slane %v5919, 2
    %v6405 = vsel %vm6041, %v6404, %v6403
    %v6406 = vrot.slane %v5924, 1
    %v6407 = vsel %vm6044, %v6406, %v6405
    %v6408 = vsel %vm6047, %v5927, %v6407
    %v6409 = vrot.slane %v5932, 7
    %v6410 = vsel %vm6050, %v6409, %v6408
    %v6411 = vrot.slane %v5935, 6
    %v6412 = vsel %vm6053, %v6411, %v6410
    %v6413 = vrot.slane %v5940, 5
    %v6414 = vrot.slane %v5943, 4
    %v6415 = vsel %vm6035, %v6414, %v6413
    %v6416 = vrot.slane %v5948, 3
    %v6417 = vsel %vm6038, %v6416, %v6415
    %v6418 = vrot.slane %v5951, 2
    %v6419 = vsel %vm6041, %v6418, %v6417
    %v6420 = vrot.slane %v5956, 1
    %v6421 = vsel %vm6044, %v6420, %v6419
    %v6422 = vsel %vm6047, %v5959, %v6421
    %v6423 = vrot.slane %v5964, 7
    %v6424 = vsel %vm6050, %v6423, %v6422
    %v6425 = vrot.slane %v5967, 6
    %v6426 = vsel %vm6053, %v6425, %v6424
    %v6427 = vrot.slane %v5972, 5
    %v6428 = vrot.slane %v5975, 4
    %v6429 = vsel %vm6035, %v6428, %v6427
    %v6430 = vrot.slane %v5980, 3
    %v6431 = vsel %vm6038, %v6430, %v6429
    %v6432 = vrot.slane %v5983, 2
    %v6433 = vsel %vm6041, %v6432, %v6431
    %v6434 = vrot.slane %v5988, 1
    %v6435 = vsel %vm6044, %v6434, %v6433
    %v6436 = vsel %vm6047, %v5991, %v6435
    %v6437 = vrot.slane %v5996, 7
    %v6438 = vsel %vm6050, %v6437, %v6436
    %v6439 = vrot.slane %v5999, 6
    %v6440 = vsel %vm6053, %v6439, %v6438
    %6441 = vrot.lane.b32.xlu0 %v6398, 32
    %v6442 = vpop.permute.xlu0 %6441
    %6443 = vrot.lane.b32.xlu0 %v6412, 32
    %v6444 = vpop.permute.xlu0 %6443
    %6445 = vrot.lane.b32.xlu0 %v6426, 32
    %v6446 = vpop.permute.xlu0 %6445
    %6447 = vrot.lane.b32.xlu0 %v6440, 32
    %v6448 = vpop.permute.xlu0 %6447
    %6453 = vst.msk [vmem:[#allocation7 + $0x8] sm:$0xff] %vm2179, %v6442
    %6454 = vst.msk [vmem:[#allocation7 + $0x18] sm:$0xff] %vm2179, %v6444
    %6455 = vst.msk [vmem:[#allocation7 + $0x28] sm:$0xff] %vm2179, %v6446
    %6456 = vst.msk [vmem:[#allocation7 + $0x38] sm:$0xff] %vm2179, %v6448
    %v6457 = vrot.slane %v5876, 6
    %v6458 = vrot.slane %v5879, 5
    %v6459 = vsel %vm6035, %v6458, %v6457
    %v6460 = vrot.slane %v5884, 4
    %v6461 = vsel %vm6038, %v6460, %v6459
    %v6462 = vrot.slane %v5887, 3
    %v6463 = vsel %vm6041, %v6462, %v6461
    %v6464 = vrot.slane %v5892, 2
    %v6465 = vsel %vm6044, %v6464, %v6463
    %v6466 = vrot.slane %v5895, 1
    %v6467 = vsel %vm6047, %v6466, %v6465
    %v6468 = vsel %vm6050, %v5900, %v6467
    %v6469 = vrot.slane %v5903, 7
    %v6470 = vsel %vm6053, %v6469, %v6468
    %v6471 = vrot.slane %v5908, 6
    %v6472 = vrot.slane %v5911, 5
    %v6473 = vsel %vm6035, %v6472, %v6471
    %v6474 = vrot.slane %v5916, 4
    %v6475 = vsel %vm6038, %v6474, %v6473
    %v6476 = vrot.slane %v5919, 3
    %v6477 = vsel %vm6041, %v6476, %v6475
    %v6478 = vrot.slane %v5924, 2
    %v6479 = vsel %vm6044, %v6478, %v6477
    %v6480 = vrot.slane %v5927, 1
    %v6481 = vsel %vm6047, %v6480, %v6479
    %v6482 = vsel %vm6050, %v5932, %v6481
    %v6483 = vrot.slane %v5935, 7
    %v6484 = vsel %vm6053, %v6483, %v6482
    %v6485 = vrot.slane %v5940, 6
    %v6486 = vrot.slane %v5943, 5
    %v6487 = vsel %vm6035, %v6486, %v6485
    %v6488 = vrot.slane %v5948, 4
    %v6489 = vsel %vm6038, %v6488, %v6487
    %v6490 = vrot.slane %v5951, 3
    %v6491 = vsel %vm6041, %v6490, %v6489
    %v6492 = vrot.slane %v5956, 2
    %v6493 = vsel %vm6044, %v6492, %v6491
    %v6494 = vrot.slane %v5959, 1
    %v6495 = vsel %vm6047, %v6494, %v6493
    %v6496 = vsel %vm6050, %v5964, %v6495
    %v6497 = vrot.slane %v5967, 7
    %v6498 = vsel %vm6053, %v6497, %v6496
    %v6499 = vrot.slane %v5972, 6
    %v6500 = vrot.slane %v5975, 5
    %v6501 = vsel %vm6035, %v6500, %v6499
    %v6502 = vrot.slane %v5980, 4
    %v6503 = vsel %vm6038, %v6502, %v6501
    %v6504 = vrot.slane %v5983, 3
    %v6505 = vsel %vm6041, %v6504, %v6503
    %v6506 = vrot.slane %v5988, 2
    %v6507 = vsel %vm6044, %v6506, %v6505
    %v6508 = vrot.slane %v5991, 1
    %v6509 = vsel %vm6047, %v6508, %v6507
    %v6510 = vsel %vm6050, %v5996, %v6509
    %v6511 = vrot.slane %v5999, 7
    %v6512 = vsel %vm6053, %v6511, %v6510
    %6513 = vrot.lane.b32.xlu0 %v6470, 64
    %v6514 = vpop.permute.xlu0 %6513
    %6515 = vrot.lane.b32.xlu0 %v6484, 64
    %v6516 = vpop.permute.xlu0 %6515
    %6517 = vrot.lane.b32.xlu0 %v6498, 64
    %v6518 = vpop.permute.xlu0 %6517
    %6519 = vrot.lane.b32.xlu0 %v6512, 64
    %v6520 = vpop.permute.xlu0 %6519
    %6525 = vst.msk [vmem:[#allocation7 + $0x8] sm:$0xff] %vm2551, %v6514
    %6526 = vst.msk [vmem:[#allocation7 + $0x18] sm:$0xff] %vm2551, %v6516
    %6527 = vst.msk [vmem:[#allocation7 + $0x28] sm:$0xff] %vm2551, %v6518
    %6528 = vst.msk [vmem:[#allocation7 + $0x38] sm:$0xff] %vm2551, %v6520
    %v6529 = vrot.slane %v5876, 7
    %v6530 = vrot.slane %v5879, 6
    %v6531 = vsel %vm6035, %v6530, %v6529
    %v6532 = vrot.slane %v5884, 5
    %v6533 = vsel %vm6038, %v6532, %v6531
    %v6534 = vrot.slane %v5887, 4
    %v6535 = vsel %vm6041, %v6534, %v6533
    %v6536 = vrot.slane %v5892, 3
    %v6537 = vsel %vm6044, %v6536, %v6535
    %v6538 = vrot.slane %v5895, 2
    %v6539 = vsel %vm6047, %v6538, %v6537
    %v6540 = vrot.slane %v5900, 1
    %v6541 = vsel %vm6050, %v6540, %v6539
    %v6542 = vsel %vm6053, %v5903, %v6541
    %v6543 = vrot.slane %v5908, 7
    %v6544 = vrot.slane %v5911, 6
    %v6545 = vsel %vm6035, %v6544, %v6543
    %v6546 = vrot.slane %v5916, 5
    %v6547 = vsel %vm6038, %v6546, %v6545
    %v6548 = vrot.slane %v5919, 4
    %v6549 = vsel %vm6041, %v6548, %v6547
    %v6550 = vrot.slane %v5924, 3
    %v6551 = vsel %vm6044, %v6550, %v6549
    %v6552 = vrot.slane %v5927, 2
    %v6553 = vsel %vm6047, %v6552, %v6551
    %v6554 = vrot.slane %v5932, 1
    %v6555 = vsel %vm6050, %v6554, %v6553
    %v6556 = vsel %vm6053, %v5935, %v6555
    %v6557 = vrot.slane %v5940, 7
    %v6558 = vrot.slane %v5943, 6
    %v6559 = vsel %vm6035, %v6558, %v6557
    %v6560 = vrot.slane %v5948, 5
    %v6561 = vsel %vm6038, %v6560, %v6559
    %v6562 = vrot.slane %v5951, 4
    %v6563 = vsel %vm6041, %v6562, %v6561
    %v6564 = vrot.slane %v5956, 3
    %v6565 = vsel %vm6044, %v6564, %v6563
    %v6566 = vrot.slane %v5959, 2
    %v6567 = vsel %vm6047, %v6566, %v6565
    %v6568 = vrot.slane %v5964, 1
    %v6569 = vsel %vm6050, %v6568, %v6567
    %v6570 = vsel %vm6053, %v5967, %v6569
    %v6571 = vrot.slane %v5972, 7
    %v6572 = vrot.slane %v5975, 6
    %v6573 = vsel %vm6035, %v6572, %v6571
    %v6574 = vrot.slane %v5980, 5
    %v6575 = vsel %vm6038, %v6574, %v6573
    %v6576 = vrot.slane %v5983, 4
    %v6577 = vsel %vm6041, %v6576, %v6575
    %v6578 = vrot.slane %v5988, 3
    %v6579 = vsel %vm6044, %v6578, %v6577
    %v6580 = vrot.slane %v5991, 2
    %v6581 = vsel %vm6047, %v6580, %v6579
    %v6582 = vrot.slane %v5996, 1
    %v6583 = vsel %vm6050, %v6582, %v6581
    %v6584 = vsel %vm6053, %v5999, %v6583
    %6585 = vrot.lane.b32.xlu0 %v6542, 96
    %v6586 = vpop.permute.xlu0 %6585
    %6587 = vrot.lane.b32.xlu0 %v6556, 96
    %v6588 = vpop.permute.xlu0 %6587
    %6589 = vrot.lane.b32.xlu0 %v6570, 96
    %v6590 = vpop.permute.xlu0 %6589
    %6591 = vrot.lane.b32.xlu0 %v6584, 96
    %v6592 = vpop.permute.xlu0 %6591
    %6597 = vst.msk [vmem:[#allocation7 + $0x8] sm:$0xff] %vm2728, %v6586
    %6598 = vst.msk [vmem:[#allocation7 + $0x18] sm:$0xff] %vm2728, %v6588
    %6599 = vst.msk [vmem:[#allocation7 + $0x28] sm:$0xff] %vm2728, %v6590
    %6600 = vst.msk [vmem:[#allocation7 + $0x38] sm:$0xff] %vm2728, %v6592
    // Predicated region
    $region50: #{tpu_custom_call.1} parent=1 // pred_check
      _
    $region51: #{tpu_custom_call.1} parent=1 // pred_check_branch
      %6602 = sbr.rel (0) target = $region53
    $region52: #{tpu_custom_call.1} parent=1 // pred_region
      %s6604 = ssub.s32 1024, 1024
      %6605 = vsyncadd [#allocation6], %s6604
      %s6606 = sshll.u32 [#allocation7], 4
      %s6607 = int_to_ptr.vmem [resolvable:$true] %s6606
      %6612 = dma.vmem_to_hbm [thread:$0]  %s6607, 1024, %s11, [#allocation6], 256, 256, 16
    $region53: #{tpu_custom_call.1} parent=1 // pred_fallthru
      _
    // Predicated region
    $region54: #{tpu_custom_call.1} parent=1 // pred_check
      _
    $region55: #{tpu_custom_call.1} parent=1 // pred_check_branch
      %6614 = sbr.rel (0) target = $region57
    $region56: #{tpu_custom_call.1} parent=1 // pred_region
      %6615 = dma.done [#allocation6], 1024
    $region57: #{tpu_custom_call.1} parent=1 // pred_fallthru
      _
    %6616 = vsyncpa [#allocation5], 1
    %6617 = vsyncpa [#allocation6], 1

</llo_original>
